<compile_context>
chip_gen: v6e
topology: v6e:2x2x1
jax: 0.10.0
libtpu: 0.0.40
codegen_flags: <defaults>
</compile_context>

<pallas_src>
import math
import functools

import jax
import jax.numpy as jnp
from jax import lax
from jax.experimental import pallas as pl
from jax.experimental.pallas import tpu as pltpu


LANE = 128                     # lane width / padded feature dim
SEG = 128                      # rows per weight segment in w_pack
# w_pack row-segment indices (each segment is SEG=128 rows)
EMB_S, WIH_S, WHH_S, WQ_S, WKV_S, W1C_S, W1D_S, W2_S = range(8)
BIAS_ROW = 8 * SEG             # first bias row
# bias row offsets inside the 8-row bias block
B_IH, B_HH, B_Q, B_KV, B_FC1, B_FC2 = range(6)


# ----------------------------------------------------------------------------
# Fused Decoder kernel (no grid: one invocation, everything VMEM/vreg resident)
# ----------------------------------------------------------------------------
def decoder_kernel(act_ref, wp_ref, logits_ref, hlast_ref, *, B, B_pad, T, S):
    f32 = jnp.float32
    N = T * B_pad                       # one-hot rows (time-major, padded batch)
    ENC_OFF = N                         # encoder rows start (B*S rows)
    H0_OFF = N + B * S                  # initial hidden rows start (B_pad rows)

    def wseg(s, c0=0, cols=3 * LANE):   # tile-aligned weight-segment view
        return wp_ref[s * SEG:(s + 1) * SEG, c0:c0 + cols]

    def brow(r, c0=0, cols=3 * LANE):   # single bias row [1, cols]
        return wp_ref[BIAS_ROW + r:BIAS_ROW + r + 1, c0:c0 + cols]

    # ---- embedding lookup (one-hot matmul) + hoisted GRU input projection --
    onehot = act_ref[0:N, :]                                        # [N, 128]
    emb_flat = jnp.dot(onehot, wseg(EMB_S, 0, LANE),
                       preferred_element_type=f32)                  # [N, 128]
    gi_all = jnp.dot(emb_flat, wseg(WIH_S),
                     preferred_element_type=f32) + brow(B_IH)       # [N, 384]

    # ---- GRU recurrence: states live in vregs, gates are 128-lane slabs ----
    w_hh = wseg(WHH_S)                                              # [128, 384]
    b_hh = brow(B_HH)                                               # [1, 384]
    h = act_ref[H0_OFF:H0_OFF + B_pad, :]                           # [8, 128]
    hs = []
    for t in range(T):     # small T: full unroll (use fori_loop at large T)
        gi = gi_all[t * B_pad:(t + 1) * B_pad, :]                   # aligned [8, 384]
        gh = jnp.dot(h, w_hh, preferred_element_type=f32) + b_hh    # [8, 384]
        r = jax.nn.sigmoid(gi[:, 0:LANE] + gh[:, 0:LANE])
        z = jax.nn.sigmoid(gi[:, LANE:2 * LANE] + gh[:, LANE:2 * LANE])
        n = jnp.tanh(gi[:, 2 * LANE:] + r * gh[:, 2 * LANE:])
        h = (1.0 - z) * n + z * h
        hs.append(h)                                                # stays in vregs
    hlast_ref[...] = h                                              # [8, 128]

    # ---- per-batch attention + output head (no cross-batch score matrix) ---
    w_q = wseg(WQ_S, 0, LANE)            # 1/sqrt(H) pre-folded
    w_k = wseg(WKV_S, 0, LANE)
    w_v = wseg(WKV_S, LANE, LANE)
    w1c = wseg(W1C_S, 0, LANE)           # fc1 half hitting c_t
    w1d = wseg(W1D_S, 0, LANE)           # fc1 half hitting dec
    w2 = wseg(W2_S, 0, LANE)
    b_q = brow(B_Q, 0, LANE)
    b_k = brow(B_KV, 0, LANE)
    b_v = brow(B_KV, LANE, LANE)
    b_1 = brow(B_FC1, 0, LANE)
    b_2 = brow(B_FC2, 0, LANE)

    for b in range(B):                   # static loop over real batches only
        # gather this batch's time-major states into one [T, 128] block
        dec_b = jnp.concatenate([hs[t][b:b + 1, :] for t in range(T)], axis=0)
        enc_b = act_ref[ENC_OFF + b * S:ENC_OFF + (b + 1) * S, :]   # [S, 128]

        q = jnp.dot(dec_b, w_q, preferred_element_type=f32) + b_q   # [T, 128]
        k = jnp.dot(enc_b, w_k, preferred_element_type=f32) + b_k   # [S, 128]
        v = jnp.dot(enc_b, w_v, preferred_element_type=f32) + b_v   # [S, 128]

        # Q @ K^T via dot_general contracting last dims (padding lanes are 0)
        s = lax.dot_general(q, k, (((1,), (1,)), ((), ())),
                            preferred_element_type=f32)             # [T, S]
        m = jnp.max(s, axis=-1, keepdims=True)
        e = jnp.exp(s - m)
        w = e * (1.0 / jnp.sum(e, axis=-1, keepdims=True))          # exact recip (tolerance)
        ctx = jnp.dot(w, v, preferred_element_type=f32)             # [T, 128]

        # concat(c_t, dec) folded into two matmuls
        hid = jnp.tanh(jnp.dot(ctx, w1c, preferred_element_type=f32)
                       + jnp.dot(dec_b, w1d, preferred_element_type=f32)
                       + b_1)
        logits_ref[b * T:(b + 1) * T, :] = (
            jnp.dot(hid, w2, preferred_element_type=f32) + b_2)     # lane-dense store


# ----------------------------------------------------------------------------
# Weight packing: every parameter into one [8*SEG + 8, 3*LANE] f32 buffer
# ----------------------------------------------------------------------------
def _pack_weights(params, H, V, E, scale):
    rows = 8 * SEG + 8
    wp = jnp.zeros((rows, 3 * LANE), jnp.float32)
    wp = wp.at[EMB_S * SEG:EMB_S * SEG + V, 0:E].set(params["emb"])
    for g in range(3):                    # gate-per-slab layout (r, z, n)
        wp = wp.at[WIH_S * SEG:WIH_S * SEG + E,
                   g * LANE:g * LANE + H].set(params["w_ih"][:, g * H:(g + 1) * H])
        wp = wp.at[WHH_S * SEG:WHH_S * SEG + H,
                   g * LANE:g * LANE + H].set(params["w_hh"][:, g * H:(g + 1) * H])
        wp = wp.at[BIAS_ROW + B_IH,
                   g * LANE:g * LANE + H].set(params["b_ih"][0, g * H:(g + 1) * H])
        wp = wp.at[BIAS_ROW + B_HH,
                   g * LANE:g * LANE + H].set(params["b_hh"][0, g * H:(g + 1) * H])
    wp = wp.at[WQ_S * SEG:WQ_S * SEG + H, 0:H].set(params["w_q"] * scale)
    wp = wp.at[WKV_S * SEG:WKV_S * SEG + H, 0:H].set(params["w_k"])
    wp = wp.at[WKV_S * SEG:WKV_S * SEG + H, LANE:LANE + H].set(params["w_v"])
    wp = wp.at[W1C_S * SEG:W1C_S * SEG + H, 0:H].set(params["w_fc1"][:H])
    wp = wp.at[W1D_S * SEG:W1D_S * SEG + H, 0:H].set(params["w_fc1"][H:])
    wp = wp.at[W2_S * SEG:W2_S * SEG + H, 0:V].set(params["w_fc2"])
    wp = wp.at[BIAS_ROW + B_Q, 0:H].set(params["b_q"][0] * scale)
    wp = wp.at[BIAS_ROW + B_KV, 0:H].set(params["b_k"][0])
    wp = wp.at[BIAS_ROW + B_KV, LANE:LANE + H].set(params["b_v"][0])
    wp = wp.at[BIAS_ROW + B_FC1, 0:H].set(params["b_fc1"][0])
    wp = wp.at[BIAS_ROW + B_FC2, 0:V].set(params["b_fc2"][0])
    return wp


# ----------------------------------------------------------------------------
# Full Decoder forward (one pallas_call, two input DMAs)
# ----------------------------------------------------------------------------
@jax.jit
def decoder_forward(params, x, x_decode, init_hidden):
    B, T = x_decode.shape
    _, S, H = x.shape
    V, E = params["emb"].shape
    assert H <= LANE and E <= LANE and V <= LANE
    B_pad = max(8, -(-B // 8) * 8)        # one sublane group minimum
    scale = 1.0 / math.sqrt(H)

    # --- pack the two kernel inputs (layout plumbing only, fused in the jit) -
    ids_tm = jnp.zeros((T, B_pad), jnp.int32).at[:, :B].set(
        jnp.transpose(x_decode).astype(jnp.int32))
    onehot = (ids_tm.reshape(T * B_pad, 1)
              == jnp.arange(LANE, dtype=jnp.int32)[None, :]).astype(jnp.float32)
    enc_p = jnp.zeros((B * S, LANE), jnp.float32).at[:, :H].set(x.reshape(B * S, H))
    h0_p = jnp.zeros((B_pad, LANE), jnp.float32).at[:B, :H].set(init_hidden[0])
    act = jnp.concatenate([onehot, enc_p, h0_p], axis=0)          # [N+B*S+B_pad, 128]
    wp = _pack_weights(params, H, V, E, scale)                    # [1032, 384]

    vmem = pl.BlockSpec(memory_space=pltpu.MemorySpace.VMEM)
    logits_flat, h_last = pl.pallas_call(
        functools.partial(decoder_kernel, B=B, B_pad=B_pad, T=T, S=S),
        out_shape=(jax.ShapeDtypeStruct((B * T, LANE), jnp.float32),
                   jax.ShapeDtypeStruct((B_pad, LANE), jnp.float32)),
        in_specs=[vmem, vmem],
        out_specs=(vmem, vmem),
    )(act, wp)

    logits = logits_flat.reshape(B, T, LANE)[:, :, :V]            # strip lane padding
    return logits, h_last[:B, :H][None]


# ----------------------------------------------------------------------------
# Deterministic parameter init + pure-JAX reference
# ----------------------------------------------------------------------------
def init_params(key, input_dim, emb_dim, hidden_dim):
    H2 = 2 * hidden_dim
    ks = jax.random.split(key, 15)

    def u(k, shape, s=0.1):
        return jax.random.uniform(k, shape, jnp.float32, -s, s)

    return dict(
        emb=u(ks[0], (input_dim, emb_dim)),
        w_ih=u(ks[1], (emb_dim, 3 * H2)),
        w_hh=u(ks[2], (H2, 3 * H2)),
        b_ih=u(ks[3], (1, 3 * H2)),
        b_hh=u(ks[4], (1, 3 * H2)),
        w_q=u(ks[5], (H2, H2)), b_q=u(ks[6], (1, H2)),
        w_k=u(ks[7], (H2, H2)), b_k=u(ks[8], (1, H2)),
        w_v=u(ks[9], (H2, H2)), b_v=u(ks[10], (1, H2)),
        w_fc1=u(ks[11], (2 * H2, H2)), b_fc1=u(ks[12], (1, H2)),
        w_fc2=u(ks[13], (H2, input_dim)), b_fc2=u(ks[14], (1, input_dim)),
    )


def reference(params, x, x_decode, init_hidden):
    emb = params["emb"][x_decode]
    H = init_hidden.shape[-1]

    def step(h, xt):
        gi = xt @ params["w_ih"] + params["b_ih"]
        gh = h @ params["w_hh"] + params["b_hh"]
        r = jax.nn.sigmoid(gi[:, :H] + gh[:, :H])
        z = jax.nn.sigmoid(gi[:, H:2 * H] + gh[:, H:2 * H])
        n = jnp.tanh(gi[:, 2 * H:] + r * gh[:, 2 * H:])
        h_new = (1.0 - z) * n + z * h
        return h_new, h_new

    h_last, hseq_tm = lax.scan(step, init_hidden[0], jnp.transpose(emb, (1, 0, 2)))
    dec = jnp.transpose(hseq_tm, (1, 0, 2))

    q = dec @ params["w_q"] + params["b_q"]
    k = x @ params["w_k"] + params["b_k"]
    v = x @ params["w_v"] + params["b_v"]
    s = jnp.einsum("btd,bsd->bts", q, k) / math.sqrt(H)
    w = jax.nn.softmax(s, axis=-1)
    c = jnp.einsum("bts,bsd->btd", w, v)

    cat = jnp.concatenate([c, dec], axis=-1)
    out = jnp.tanh(cat @ params["w_fc1"] + params["b_fc1"])
    logits = out @ params["w_fc2"] + params["b_fc2"]
    return logits, h_last[None]


if __name__ == "__main__":
    # Decoder(input_dim=16, emb_dim=8, hidden_dim=16)  ->  2*hidden = 32
    input_dim, emb_dim, hidden_dim = 16, 8, 16
    H2 = 2 * hidden_dim
    B, T_enc, T_dec = 2, 8, 8

    key = jax.random.PRNGKey(0)
    kp, kx, kd, kh = jax.random.split(key, 4)

    params = init_params(kp, input_dim, emb_dim, hidden_dim)
    x = jax.random.normal(kx, (B, T_enc, H2), jnp.float32)          # encoder output
    x_decode = jax.random.randint(kd, (B, T_dec), 0, input_dim, jnp.int32)
    init_hidden = jax.random.normal(kh, (1, B, H2), jnp.float32)

    logits, hidden = jax.block_until_ready(
        decoder_forward(params, x, x_decode, init_hidden))

    ref_logits, ref_hidden = reference(params, x, x_decode, init_hidden)
    assert logits.shape == (B, T_dec, input_dim)
    assert hidden.shape == (1, B, H2)
    assert jnp.allclose(logits, ref_logits, atol=1e-5, rtol=1e-5)
    assert jnp.allclose(hidden, ref_hidden, atol=1e-5, rtol=1e-5)

    print("KERNEL_OK")
</pallas_src>

<mosaic_0001>
module attributes {stable_mosaic.version = 11 : i64} {
  func.func @decoder_kernel(%arg0: memref<88x128xf32, #tpu.memory_space<vmem>>, %arg1: memref<1032x384xf32, #tpu.memory_space<vmem>>, %arg2: memref<16x128xf32, #tpu.memory_space<vmem>>, %arg3: memref<8x128xf32, #tpu.memory_space<vmem>>) attributes {dimension_semantics = [], scalar_prefetch = 0 : i64, scratch_operands = 0 : i64, tpu.core_type = #tpu.core_type<tc>} {
    %c0 = arith.constant 0 : index
    %c0_0 = arith.constant 0 : index
    %0 = vector.load %arg0[%c0, %c0_0] : memref<88x128xf32, #tpu.memory_space<vmem>>, vector<64x128xf32>
    %c0_1 = arith.constant 0 : index
    %c0_2 = arith.constant 0 : index
    %1 = vector.load %arg1[%c0_1, %c0_2] : memref<1032x384xf32, #tpu.memory_space<vmem>>, vector<128x128xf32>
    %cst = arith.constant dense<0.000000e+00> : vector<64x128xf32>
    %2 = tpu.matmul %0, %1, %cst {dimension_numbers = #tpu.dot_dimension_numbers<[1], [0], [0], [1], [0, 0, 1, 1], [], []>} : vector<64x128xf32>, vector<128x128xf32>, vector<64x128xf32> -> vector<64x128xf32>
    %c128 = arith.constant 128 : index
    %c0_3 = arith.constant 0 : index
    %3 = vector.load %arg1[%c128, %c0_3] : memref<1032x384xf32, #tpu.memory_space<vmem>>, vector<128x384xf32>
    %cst_4 = arith.constant dense<0.000000e+00> : vector<64x384xf32>
    %4 = tpu.matmul %2, %3, %cst_4 {dimension_numbers = #tpu.dot_dimension_numbers<[1], [0], [0], [1], [0, 0, 1, 1], [], []>} : vector<64x128xf32>, vector<128x384xf32>, vector<64x384xf32> -> vector<64x384xf32>
    %c1024 = arith.constant 1024 : index
    %c0_5 = arith.constant 0 : index
    %5 = vector.load %arg1[%c1024, %c0_5] : memref<1032x384xf32, #tpu.memory_space<vmem>>, vector<1x384xf32>
    %6 = vector.broadcast %5 : vector<1x384xf32> to vector<64x384xf32>
    %7 = arith.addf %4, %6 : vector<64x384xf32>
    %c256 = arith.constant 256 : index
    %c0_6 = arith.constant 0 : index
    %8 = vector.load %arg1[%c256, %c0_6] : memref<1032x384xf32, #tpu.memory_space<vmem>>, vector<128x384xf32>
    %c1025 = arith.constant 1025 : index
    %c0_7 = arith.constant 0 : index
    %9 = vector.load %arg1[%c1025, %c0_7] : memref<1032x384xf32, #tpu.memory_space<vmem>>, vector<1x384xf32>
    %c80 = arith.constant 80 : index
    %c0_8 = arith.constant 0 : index
    %10 = vector.load %arg0[%c80, %c0_8] : memref<88x128xf32, #tpu.memory_space<vmem>>, vector<8x128xf32>
    %11 = vector.extract_strided_slice %7 {offsets = [0, 0], sizes = [8, 384], strides = [1, 1]} : vector<64x384xf32> to vector<8x384xf32>
    %cst_9 = arith.constant dense<0.000000e+00> : vector<8x384xf32>
    %12 = tpu.matmul %10, %8, %cst_9 {dimension_numbers = #tpu.dot_dimension_numbers<[1], [0], [0], [1], [0, 0, 1, 1], [], []>} : vector<8x128xf32>, vector<128x384xf32>, vector<8x384xf32> -> vector<8x384xf32>
    %13 = vector.broadcast %9 : vector<1x384xf32> to vector<8x384xf32>
    %14 = arith.addf %12, %13 : vector<8x384xf32>
    %15 = vector.extract_strided_slice %11 {offsets = [0, 0], sizes = [8, 128], strides = [1, 1]} : vector<8x384xf32> to vector<8x128xf32>
    %16 = vector.extract_strided_slice %14 {offsets = [0, 0], sizes = [8, 128], strides = [1, 1]} : vector<8x384xf32> to vector<8x128xf32>
    %17 = arith.addf %15, %16 : vector<8x128xf32>
    %18 = arith.negf %17 : vector<8x128xf32>
    %19 = math.exp %18 : vector<8x128xf32>
    %cst_10 = arith.constant 1.000000e+00 : f32
    %20 = vector.broadcast %cst_10 : f32 to vector<8x128xf32>
    %21 = arith.addf %20, %19 : vector<8x128xf32>
    %22 = arith.divf %20, %21 : vector<8x128xf32>
    %23 = vector.extract_strided_slice %11 {offsets = [0, 128], sizes = [8, 128], strides = [1, 1]} : vector<8x384xf32> to vector<8x128xf32>
    %24 = vector.extract_strided_slice %14 {offsets = [0, 128], sizes = [8, 128], strides = [1, 1]} : vector<8x384xf32> to vector<8x128xf32>
    %25 = arith.addf %23, %24 : vector<8x128xf32>
    %26 = arith.negf %25 : vector<8x128xf32>
    %27 = math.exp %26 : vector<8x128xf32>
    %cst_11 = arith.constant 1.000000e+00 : f32
    %28 = vector.broadcast %cst_11 : f32 to vector<8x128xf32>
    %29 = arith.addf %28, %27 : vector<8x128xf32>
    %30 = arith.divf %28, %29 : vector<8x128xf32>
    %31 = vector.extract_strided_slice %11 {offsets = [0, 256], sizes = [8, 128], strides = [1, 1]} : vector<8x384xf32> to vector<8x128xf32>
    %32 = vector.extract_strided_slice %14 {offsets = [0, 256], sizes = [8, 128], strides = [1, 1]} : vector<8x384xf32> to vector<8x128xf32>
    %33 = arith.mulf %22, %32 : vector<8x128xf32>
    %34 = arith.addf %31, %33 : vector<8x128xf32>
    %35 = math.tanh %34 : vector<8x128xf32>
    %cst_12 = arith.constant 1.000000e+00 : f32
    %36 = vector.broadcast %cst_12 : f32 to vector<8x128xf32>
    %37 = arith.subf %36, %30 : vector<8x128xf32>
    %38 = arith.mulf %37, %35 : vector<8x128xf32>
    %39 = arith.mulf %30, %10 : vector<8x128xf32>
    %40 = arith.addf %38, %39 : vector<8x128xf32>
    %41 = vector.extract_strided_slice %7 {offsets = [8, 0], sizes = [8, 384], strides = [1, 1]} : vector<64x384xf32> to vector<8x384xf32>
    %cst_13 = arith.constant dense<0.000000e+00> : vector<8x384xf32>
    %42 = tpu.matmul %40, %8, %cst_13 {dimension_numbers = #tpu.dot_dimension_numbers<[1], [0], [0], [1], [0, 0, 1, 1], [], []>} : vector<8x128xf32>, vector<128x384xf32>, vector<8x384xf32> -> vector<8x384xf32>
    %43 = vector.broadcast %9 : vector<1x384xf32> to vector<8x384xf32>
    %44 = arith.addf %42, %43 : vector<8x384xf32>
    %45 = vector.extract_strided_slice %41 {offsets = [0, 0], sizes = [8, 128], strides = [1, 1]} : vector<8x384xf32> to vector<8x128xf32>
    %46 = vector.extract_strided_slice %44 {offsets = [0, 0], sizes = [8, 128], strides = [1, 1]} : vector<8x384xf32> to vector<8x128xf32>
    %47 = arith.addf %45, %46 : vector<8x128xf32>
    %48 = arith.negf %47 : vector<8x128xf32>
    %49 = math.exp %48 : vector<8x128xf32>
    %cst_14 = arith.constant 1.000000e+00 : f32
    %50 = vector.broadcast %cst_14 : f32 to vector<8x128xf32>
    %51 = arith.addf %50, %49 : vector<8x128xf32>
    %52 = arith.divf %50, %51 : vector<8x128xf32>
    %53 = vector.extract_strided_slice %41 {offsets = [0, 128], sizes = [8, 128], strides = [1, 1]} : vector<8x384xf32> to vector<8x128xf32>
    %54 = vector.extract_strided_slice %44 {offsets = [0, 128], sizes = [8, 128], strides = [1, 1]} : vector<8x384xf32> to vector<8x128xf32>
    %55 = arith.addf %53, %54 : vector<8x128xf32>
    %56 = arith.negf %55 : vector<8x128xf32>
    %57 = math.exp %56 : vector<8x128xf32>
    %cst_15 = arith.constant 1.000000e+00 : f32
    %58 = vector.broadcast %cst_15 : f32 to vector<8x128xf32>
    %59 = arith.addf %58, %57 : vector<8x128xf32>
    %60 = arith.divf %58, %59 : vector<8x128xf32>
    %61 = vector.extract_strided_slice %41 {offsets = [0, 256], sizes = [8, 128], strides = [1, 1]} : vector<8x384xf32> to vector<8x128xf32>
    %62 = vector.extract_strided_slice %44 {offsets = [0, 256], sizes = [8, 128], strides = [1, 1]} : vector<8x384xf32> to vector<8x128xf32>
    %63 = arith.mulf %52, %62 : vector<8x128xf32>
    %64 = arith.addf %61, %63 : vector<8x128xf32>
    %65 = math.tanh %64 : vector<8x128xf32>
    %cst_16 = arith.constant 1.000000e+00 : f32
    %66 = vector.broadcast %cst_16 : f32 to vector<8x128xf32>
    %67 = arith.subf %66, %60 : vector<8x128xf32>
    %68 = arith.mulf %67, %65 : vector<8x128xf32>
    %69 = arith.mulf %60, %40 : vector<8x128xf32>
    %70 = arith.addf %68, %69 : vector<8x128xf32>
    %71 = vector.extract_strided_slice %7 {offsets = [16, 0], sizes = [8, 384], strides = [1, 1]} : vector<64x384xf32> to vector<8x384xf32>
    %cst_17 = arith.constant dense<0.000000e+00> : vector<8x384xf32>
    %72 = tpu.matmul %70, %8, %cst_17 {dimension_numbers = #tpu.dot_dimension_numbers<[1], [0], [0], [1], [0, 0, 1, 1], [], []>} : vector<8x128xf32>, vector<128x384xf32>, vector<8x384xf32> -> vector<8x384xf32>
    %73 = vector.broadcast %9 : vector<1x384xf32> to vector<8x384xf32>
    %74 = arith.addf %72, %73 : vector<8x384xf32>
    %75 = vector.extract_strided_slice %71 {offsets = [0, 0], sizes = [8, 128], strides = [1, 1]} : vector<8x384xf32> to vector<8x128xf32>
    %76 = vector.extract_strided_slice %74 {offsets = [0, 0], sizes = [8, 128], strides = [1, 1]} : vector<8x384xf32> to vector<8x128xf32>
    %77 = arith.addf %75, %76 : vector<8x128xf32>
    %78 = arith.negf %77 : vector<8x128xf32>
    %79 = math.exp %78 : vector<8x128xf32>
    %cst_18 = arith.constant 1.000000e+00 : f32
    %80 = vector.broadcast %cst_18 : f32 to vector<8x128xf32>
    %81 = arith.addf %80, %79 : vector<8x128xf32>
    %82 = arith.divf %80, %81 : vector<8x128xf32>
    %83 = vector.extract_strided_slice %71 {offsets = [0, 128], sizes = [8, 128], strides = [1, 1]} : vector<8x384xf32> to vector<8x128xf32>
    %84 = vector.extract_strided_slice %74 {offsets = [0, 128], sizes = [8, 128], strides = [1, 1]} : vector<8x384xf32> to vector<8x128xf32>
    %85 = arith.addf %83, %84 : vector<8x128xf32>
    %86 = arith.negf %85 : vector<8x128xf32>
    %87 = math.exp %86 : vector<8x128xf32>
    %cst_19 = arith.constant 1.000000e+00 : f32
    %88 = vector.broadcast %cst_19 : f32 to vector<8x128xf32>
    %89 = arith.addf %88, %87 : vector<8x128xf32>
    %90 = arith.divf %88, %89 : vector<8x128xf32>
    %91 = vector.extract_strided_slice %71 {offsets = [0, 256], sizes = [8, 128], strides = [1, 1]} : vector<8x384xf32> to vector<8x128xf32>
    %92 = vector.extract_strided_slice %74 {offsets = [0, 256], sizes = [8, 128], strides = [1, 1]} : vector<8x384xf32> to vector<8x128xf32>
    %93 = arith.mulf %82, %92 : vector<8x128xf32>
    %94 = arith.addf %91, %93 : vector<8x128xf32>
    %95 = math.tanh %94 : vector<8x128xf32>
    %cst_20 = arith.constant 1.000000e+00 : f32
    %96 = vector.broadcast %cst_20 : f32 to vector<8x128xf32>
    %97 = arith.subf %96, %90 : vector<8x128xf32>
    %98 = arith.mulf %97, %95 : vector<8x128xf32>
    %99 = arith.mulf %90, %70 : vector<8x128xf32>
    %100 = arith.addf %98, %99 : vector<8x128xf32>
    %101 = vector.extract_strided_slice %7 {offsets = [24, 0], sizes = [8, 384], strides = [1, 1]} : vector<64x384xf32> to vector<8x384xf32>
    %cst_21 = arith.constant dense<0.000000e+00> : vector<8x384xf32>
    %102 = tpu.matmul %100, %8, %cst_21 {dimension_numbers = #tpu.dot_dimension_numbers<[1], [0], [0], [1], [0, 0, 1, 1], [], []>} : vector<8x128xf32>, vector<128x384xf32>, vector<8x384xf32> -> vector<8x384xf32>
    %103 = vector.broadcast %9 : vector<1x384xf32> to vector<8x384xf32>
    %104 = arith.addf %102, %103 : vector<8x384xf32>
    %105 = vector.extract_strided_slice %101 {offsets = [0, 0], sizes = [8, 128], strides = [1, 1]} : vector<8x384xf32> to vector<8x128xf32>
    %106 = vector.extract_strided_slice %104 {offsets = [0, 0], sizes = [8, 128], strides = [1, 1]} : vector<8x384xf32> to vector<8x128xf32>
    %107 = arith.addf %105, %106 : vector<8x128xf32>
    %108 = arith.negf %107 : vector<8x128xf32>
    %109 = math.exp %108 : vector<8x128xf32>
    %cst_22 = arith.constant 1.000000e+00 : f32
    %110 = vector.broadcast %cst_22 : f32 to vector<8x128xf32>
    %111 = arith.addf %110, %109 : vector<8x128xf32>
    %112 = arith.divf %110, %111 : vector<8x128xf32>
    %113 = vector.extract_strided_slice %101 {offsets = [0, 128], sizes = [8, 128], strides = [1, 1]} : vector<8x384xf32> to vector<8x128xf32>
    %114 = vector.extract_strided_slice %104 {offsets = [0, 128], sizes = [8, 128], strides = [1, 1]} : vector<8x384xf32> to vector<8x128xf32>
    %115 = arith.addf %113, %114 : vector<8x128xf32>
    %116 = arith.negf %115 : vector<8x128xf32>
    %117 = math.exp %116 : vector<8x128xf32>
    %cst_23 = arith.constant 1.000000e+00 : f32
    %118 = vector.broadcast %cst_23 : f32 to vector<8x128xf32>
    %119 = arith.addf %118, %117 : vector<8x128xf32>
    %120 = arith.divf %118, %119 : vector<8x128xf32>
    %121 = vector.extract_strided_slice %101 {offsets = [0, 256], sizes = [8, 128], strides = [1, 1]} : vector<8x384xf32> to vector<8x128xf32>
    %122 = vector.extract_strided_slice %104 {offsets = [0, 256], sizes = [8, 128], strides = [1, 1]} : vector<8x384xf32> to vector<8x128xf32>
    %123 = arith.mulf %112, %122 : vector<8x128xf32>
    %124 = arith.addf %121, %123 : vector<8x128xf32>
    %125 = math.tanh %124 : vector<8x128xf32>
    %cst_24 = arith.constant 1.000000e+00 : f32
    %126 = vector.broadcast %cst_24 : f32 to vector<8x128xf32>
    %127 = arith.subf %126, %120 : vector<8x128xf32>
    %128 = arith.mulf %127, %125 : vector<8x128xf32>
    %129 = arith.mulf %120, %100 : vector<8x128xf32>
    %130 = arith.addf %128, %129 : vector<8x128xf32>
    %131 = vector.extract_strided_slice %7 {offsets = [32, 0], sizes = [8, 384], strides = [1, 1]} : vector<64x384xf32> to vector<8x384xf32>
    %cst_25 = arith.constant dense<0.000000e+00> : vector<8x384xf32>
    %132 = tpu.matmul %130, %8, %cst_25 {dimension_numbers = #tpu.dot_dimension_numbers<[1], [0], [0], [1], [0, 0, 1, 1], [], []>} : vector<8x128xf32>, vector<128x384xf32>, vector<8x384xf32> -> vector<8x384xf32>
    %133 = vector.broadcast %9 : vector<1x384xf32> to vector<8x384xf32>
    %134 = arith.addf %132, %133 : vector<8x384xf32>
    %135 = vector.extract_strided_slice %131 {offsets = [0, 0], sizes = [8, 128], strides = [1, 1]} : vector<8x384xf32> to vector<8x128xf32>
    %136 = vector.extract_strided_slice %134 {offsets = [0, 0], sizes = [8, 128], strides = [1, 1]} : vector<8x384xf32> to vector<8x128xf32>
    %137 = arith.addf %135, %136 : vector<8x128xf32>
    %138 = arith.negf %137 : vector<8x128xf32>
    %139 = math.exp %138 : vector<8x128xf32>
    %cst_26 = arith.constant 1.000000e+00 : f32
    %140 = vector.broadcast %cst_26 : f32 to vector<8x128xf32>
    %141 = arith.addf %140, %139 : vector<8x128xf32>
    %142 = arith.divf %140, %141 : vector<8x128xf32>
    %143 = vector.extract_strided_slice %131 {offsets = [0, 128], sizes = [8, 128], strides = [1, 1]} : vector<8x384xf32> to vector<8x128xf32>
    %144 = vector.extract_strided_slice %134 {offsets = [0, 128], sizes = [8, 128], strides = [1, 1]} : vector<8x384xf32> to vector<8x128xf32>
    %145 = arith.addf %143, %144 : vector<8x128xf32>
    %146 = arith.negf %145 : vector<8x128xf32>
    %147 = math.exp %146 : vector<8x128xf32>
    %cst_27 = arith.constant 1.000000e+00 : f32
    %148 = vector.broadcast %cst_27 : f32 to vector<8x128xf32>
    %149 = arith.addf %148, %147 : vector<8x128xf32>
    %150 = arith.divf %148, %149 : vector<8x128xf32>
    %151 = vector.extract_strided_slice %131 {offsets = [0, 256], sizes = [8, 128], strides = [1, 1]} : vector<8x384xf32> to vector<8x128xf32>
    %152 = vector.extract_strided_slice %134 {offsets = [0, 256], sizes = [8, 128], strides = [1, 1]} : vector<8x384xf32> to vector<8x128xf32>
    %153 = arith.mulf %142, %152 : vector<8x128xf32>
    %154 = arith.addf %151, %153 : vector<8x128xf32>
    %155 = math.tanh %154 : vector<8x128xf32>
    %cst_28 = arith.constant 1.000000e+00 : f32
    %156 = vector.broadcast %cst_28 : f32 to vector<8x128xf32>
    %157 = arith.subf %156, %150 : vector<8x128xf32>
    %158 = arith.mulf %157, %155 : vector<8x128xf32>
    %159 = arith.mulf %150, %130 : vector<8x128xf32>
    %160 = arith.addf %158, %159 : vector<8x128xf32>
    %161 = vector.extract_strided_slice %7 {offsets = [40, 0], sizes = [8, 384], strides = [1, 1]} : vector<64x384xf32> to vector<8x384xf32>
    %cst_29 = arith.constant dense<0.000000e+00> : vector<8x384xf32>
    %162 = tpu.matmul %160, %8, %cst_29 {dimension_numbers = #tpu.dot_dimension_numbers<[1], [0], [0], [1], [0, 0, 1, 1], [], []>} : vector<8x128xf32>, vector<128x384xf32>, vector<8x384xf32> -> vector<8x384xf32>
    %163 = vector.broadcast %9 : vector<1x384xf32> to vector<8x384xf32>
    %164 = arith.addf %162, %163 : vector<8x384xf32>
    %165 = vector.extract_strided_slice %161 {offsets = [0, 0], sizes = [8, 128], strides = [1, 1]} : vector<8x384xf32> to vector<8x128xf32>
    %166 = vector.extract_strided_slice %164 {offsets = [0, 0], sizes = [8, 128], strides = [1, 1]} : vector<8x384xf32> to vector<8x128xf32>
    %167 = arith.addf %165, %166 : vector<8x128xf32>
    %168 = arith.negf %167 : vector<8x128xf32>
    %169 = math.exp %168 : vector<8x128xf32>
    %cst_30 = arith.constant 1.000000e+00 : f32
    %170 = vector.broadcast %cst_30 : f32 to vector<8x128xf32>
    %171 = arith.addf %170, %169 : vector<8x128xf32>
    %172 = arith.divf %170, %171 : vector<8x128xf32>
    %173 = vector.extract_strided_slice %161 {offsets = [0, 128], sizes = [8, 128], strides = [1, 1]} : vector<8x384xf32> to vector<8x128xf32>
    %174 = vector.extract_strided_slice %164 {offsets = [0, 128], sizes = [8, 128], strides = [1, 1]} : vector<8x384xf32> to vector<8x128xf32>
    %175 = arith.addf %173, %174 : vector<8x128xf32>
    %176 = arith.negf %175 : vector<8x128xf32>
    %177 = math.exp %176 : vector<8x128xf32>
    %cst_31 = arith.constant 1.000000e+00 : f32
    %178 = vector.broadcast %cst_31 : f32 to vector<8x128xf32>
    %179 = arith.addf %178, %177 : vector<8x128xf32>
    %180 = arith.divf %178, %179 : vector<8x128xf32>
    %181 = vector.extract_strided_slice %161 {offsets = [0, 256], sizes = [8, 128], strides = [1, 1]} : vector<8x384xf32> to vector<8x128xf32>
    %182 = vector.extract_strided_slice %164 {offsets = [0, 256], sizes = [8, 128], strides = [1, 1]} : vector<8x384xf32> to vector<8x128xf32>
    %183 = arith.mulf %172, %182 : vector<8x128xf32>
    %184 = arith.addf %181, %183 : vector<8x128xf32>
    %185 = math.tanh %184 : vector<8x128xf32>
    %cst_32 = arith.constant 1.000000e+00 : f32
    %186 = vector.broadcast %cst_32 : f32 to vector<8x128xf32>
    %187 = arith.subf %186, %180 : vector<8x128xf32>
    %188 = arith.mulf %187, %185 : vector<8x128xf32>
    %189 = arith.mulf %180, %160 : vector<8x128xf32>
    %190 = arith.addf %188, %189 : vector<8x128xf32>
    %191 = vector.extract_strided_slice %7 {offsets = [48, 0], sizes = [8, 384], strides = [1, 1]} : vector<64x384xf32> to vector<8x384xf32>
    %cst_33 = arith.constant dense<0.000000e+00> : vector<8x384xf32>
    %192 = tpu.matmul %190, %8, %cst_33 {dimension_numbers = #tpu.dot_dimension_numbers<[1], [0], [0], [1], [0, 0, 1, 1], [], []>} : vector<8x128xf32>, vector<128x384xf32>, vector<8x384xf32> -> vector<8x384xf32>
    %193 = vector.broadcast %9 : vector<1x384xf32> to vector<8x384xf32>
    %194 = arith.addf %192, %193 : vector<8x384xf32>
    %195 = vector.extract_strided_slice %191 {offsets = [0, 0], sizes = [8, 128], strides = [1, 1]} : vector<8x384xf32> to vector<8x128xf32>
    %196 = vector.extract_strided_slice %194 {offsets = [0, 0], sizes = [8, 128], strides = [1, 1]} : vector<8x384xf32> to vector<8x128xf32>
    %197 = arith.addf %195, %196 : vector<8x128xf32>
    %198 = arith.negf %197 : vector<8x128xf32>
    %199 = math.exp %198 : vector<8x128xf32>
    %cst_34 = arith.constant 1.000000e+00 : f32
    %200 = vector.broadcast %cst_34 : f32 to vector<8x128xf32>
    %201 = arith.addf %200, %199 : vector<8x128xf32>
    %202 = arith.divf %200, %201 : vector<8x128xf32>
    %203 = vector.extract_strided_slice %191 {offsets = [0, 128], sizes = [8, 128], strides = [1, 1]} : vector<8x384xf32> to vector<8x128xf32>
    %204 = vector.extract_strided_slice %194 {offsets = [0, 128], sizes = [8, 128], strides = [1, 1]} : vector<8x384xf32> to vector<8x128xf32>
    %205 = arith.addf %203, %204 : vector<8x128xf32>
    %206 = arith.negf %205 : vector<8x128xf32>
    %207 = math.exp %206 : vector<8x128xf32>
    %cst_35 = arith.constant 1.000000e+00 : f32
    %208 = vector.broadcast %cst_35 : f32 to vector<8x128xf32>
    %209 = arith.addf %208, %207 : vector<8x128xf32>
    %210 = arith.divf %208, %209 : vector<8x128xf32>
    %211 = vector.extract_strided_slice %191 {offsets = [0, 256], sizes = [8, 128], strides = [1, 1]} : vector<8x384xf32> to vector<8x128xf32>
    %212 = vector.extract_strided_slice %194 {offsets = [0, 256], sizes = [8, 128], strides = [1, 1]} : vector<8x384xf32> to vector<8x128xf32>
    %213 = arith.mulf %202, %212 : vector<8x128xf32>
    %214 = arith.addf %211, %213 : vector<8x128xf32>
    %215 = math.tanh %214 : vector<8x128xf32>
    %cst_36 = arith.constant 1.000000e+00 : f32
    %216 = vector.broadcast %cst_36 : f32 to vector<8x128xf32>
    %217 = arith.subf %216, %210 : vector<8x128xf32>
    %218 = arith.mulf %217, %215 : vector<8x128xf32>
    %219 = arith.mulf %210, %190 : vector<8x128xf32>
    %220 = arith.addf %218, %219 : vector<8x128xf32>
    %221 = vector.extract_strided_slice %7 {offsets = [56, 0], sizes = [8, 384], strides = [1, 1]} : vector<64x384xf32> to vector<8x384xf32>
    %cst_37 = arith.constant dense<0.000000e+00> : vector<8x384xf32>
    %222 = tpu.matmul %220, %8, %cst_37 {dimension_numbers = #tpu.dot_dimension_numbers<[1], [0], [0], [1], [0, 0, 1, 1], [], []>} : vector<8x128xf32>, vector<128x384xf32>, vector<8x384xf32> -> vector<8x384xf32>
    %223 = vector.broadcast %9 : vector<1x384xf32> to vector<8x384xf32>
    %224 = arith.addf %222, %223 : vector<8x384xf32>
    %225 = vector.extract_strided_slice %221 {offsets = [0, 0], sizes = [8, 128], strides = [1, 1]} : vector<8x384xf32> to vector<8x128xf32>
    %226 = vector.extract_strided_slice %224 {offsets = [0, 0], sizes = [8, 128], strides = [1, 1]} : vector<8x384xf32> to vector<8x128xf32>
    %227 = arith.addf %225, %226 : vector<8x128xf32>
    %228 = arith.negf %227 : vector<8x128xf32>
    %229 = math.exp %228 : vector<8x128xf32>
    %cst_38 = arith.constant 1.000000e+00 : f32
    %230 = vector.broadcast %cst_38 : f32 to vector<8x128xf32>
    %231 = arith.addf %230, %229 : vector<8x128xf32>
    %232 = arith.divf %230, %231 : vector<8x128xf32>
    %233 = vector.extract_strided_slice %221 {offsets = [0, 128], sizes = [8, 128], strides = [1, 1]} : vector<8x384xf32> to vector<8x128xf32>
    %234 = vector.extract_strided_slice %224 {offsets = [0, 128], sizes = [8, 128], strides = [1, 1]} : vector<8x384xf32> to vector<8x128xf32>
    %235 = arith.addf %233, %234 : vector<8x128xf32>
    %236 = arith.negf %235 : vector<8x128xf32>
    %237 = math.exp %236 : vector<8x128xf32>
    %cst_39 = arith.constant 1.000000e+00 : f32
    %238 = vector.broadcast %cst_39 : f32 to vector<8x128xf32>
    %239 = arith.addf %238, %237 : vector<8x128xf32>
    %240 = arith.divf %238, %239 : vector<8x128xf32>
    %241 = vector.extract_strided_slice %221 {offsets = [0, 256], sizes = [8, 128], strides = [1, 1]} : vector<8x384xf32> to vector<8x128xf32>
    %242 = vector.extract_strided_slice %224 {offsets = [0, 256], sizes = [8, 128], strides = [1, 1]} : vector<8x384xf32> to vector<8x128xf32>
    %243 = arith.mulf %232, %242 : vector<8x128xf32>
    %244 = arith.addf %241, %243 : vector<8x128xf32>
    %245 = math.tanh %244 : vector<8x128xf32>
    %cst_40 = arith.constant 1.000000e+00 : f32
    %246 = vector.broadcast %cst_40 : f32 to vector<8x128xf32>
    %247 = arith.subf %246, %240 : vector<8x128xf32>
    %248 = arith.mulf %247, %245 : vector<8x128xf32>
    %249 = arith.mulf %240, %220 : vector<8x128xf32>
    %250 = arith.addf %248, %249 : vector<8x128xf32>
    %c0_41 = arith.constant 0 : index
    %c0_42 = arith.constant 0 : index
    %251 = vector.load %arg3[%c0_41, %c0_42] : memref<8x128xf32, #tpu.memory_space<vmem>>, vector<8x128xf32>
    tpu.vector_store %arg3[%c0_41, %c0_42], %250 {strides = array<i32>} : memref<8x128xf32, #tpu.memory_space<vmem>>, vector<8x128xf32>,
    %c384 = arith.constant 384 : index
    %c0_43 = arith.constant 0 : index
    %252 = vector.load %arg1[%c384, %c0_43] : memref<1032x384xf32, #tpu.memory_space<vmem>>, vector<128x128xf32>
    %c512 = arith.constant 512 : index
    %c0_44 = arith.constant 0 : index
    %253 = vector.load %arg1[%c512, %c0_44] : memref<1032x384xf32, #tpu.memory_space<vmem>>, vector<128x128xf32>
    %c512_45 = arith.constant 512 : index
    %c128_46 = arith.constant 128 : index
    %254 = vector.load %arg1[%c512_45, %c128_46] : memref<1032x384xf32, #tpu.memory_space<vmem>>, vector<128x128xf32>
    %c640 = arith.constant 640 : index
    %c0_47 = arith.constant 0 : index
    %255 = vector.load %arg1[%c640, %c0_47] : memref<1032x384xf32, #tpu.memory_space<vmem>>, vector<128x128xf32>
    %c768 = arith.constant 768 : index
    %c0_48 = arith.constant 0 : index
    %256 = vector.load %arg1[%c768, %c0_48] : memref<1032x384xf32, #tpu.memory_space<vmem>>, vector<128x128xf32>
    %c896 = arith.constant 896 : index
    %c0_49 = arith.constant 0 : index
    %257 = vector.load %arg1[%c896, %c0_49] : memref<1032x384xf32, #tpu.memory_space<vmem>>, vector<128x128xf32>
    %c1026 = arith.constant 1026 : index
    %c0_50 = arith.constant 0 : index
    %258 = vector.load %arg1[%c1026, %c0_50] : memref<1032x384xf32, #tpu.memory_space<vmem>>, vector<1x128xf32>
    %c1027 = arith.constant 1027 : index
    %c0_51 = arith.constant 0 : index
    %259 = vector.load %arg1[%c1027, %c0_51] : memref<1032x384xf32, #tpu.memory_space<vmem>>, vector<1x128xf32>
    %c1027_52 = arith.constant 1027 : index
    %c128_53 = arith.constant 128 : index
    %260 = vector.load %arg1[%c1027_52, %c128_53] : memref<1032x384xf32, #tpu.memory_space<vmem>>, vector<1x128xf32>
    %c1028 = arith.constant 1028 : index
    %c0_54 = arith.constant 0 : index
    %261 = vector.load %arg1[%c1028, %c0_54] : memref<1032x384xf32, #tpu.memory_space<vmem>>, vector<1x128xf32>
    %c1029 = arith.constant 1029 : index
    %c0_55 = arith.constant 0 : index
    %262 = vector.load %arg1[%c1029, %c0_55] : memref<1032x384xf32, #tpu.memory_space<vmem>>, vector<1x128xf32>
    %263 = vector.extract_strided_slice %40 {offsets = [0, 0], sizes = [1, 128], strides = [1, 1]} : vector<8x128xf32> to vector<1x128xf32>
    %264 = vector.extract_strided_slice %70 {offsets = [0, 0], sizes = [1, 128], strides = [1, 1]} : vector<8x128xf32> to vector<1x128xf32>
    %265 = vector.extract_strided_slice %100 {offsets = [0, 0], sizes = [1, 128], strides = [1, 1]} : vector<8x128xf32> to vector<1x128xf32>
    %266 = vector.extract_strided_slice %130 {offsets = [0, 0], sizes = [1, 128], strides = [1, 1]} : vector<8x128xf32> to vector<1x128xf32>
    %267 = vector.extract_strided_slice %160 {offsets = [0, 0], sizes = [1, 128], strides = [1, 1]} : vector<8x128xf32> to vector<1x128xf32>
    %268 = vector.extract_strided_slice %190 {offsets = [0, 0], sizes = [1, 128], strides = [1, 1]} : vector<8x128xf32> to vector<1x128xf32>
    %269 = vector.extract_strided_slice %220 {offsets = [0, 0], sizes = [1, 128], strides = [1, 1]} : vector<8x128xf32> to vector<1x128xf32>
    %270 = vector.extract_strided_slice %250 {offsets = [0, 0], sizes = [1, 128], strides = [1, 1]} : vector<8x128xf32> to vector<1x128xf32>
    %271 = tpu.concatenate %263, %264, %265, %266, %267, %268, %269, %270 in 0 : vector<1x128xf32>, vector<1x128xf32>, vector<1x128xf32>, vector<1x128xf32>, vector<1x128xf32>, vector<1x128xf32>, vector<1x128xf32>, vector<1x128xf32> -> vector<8x128xf32>
    %c64 = arith.constant 64 : index
    %c0_56 = arith.constant 0 : index
    %272 = vector.load %arg0[%c64, %c0_56] : memref<88x128xf32, #tpu.memory_space<vmem>>, vector<8x128xf32>
    %cst_57 = arith.constant dense<0.000000e+00> : vector<8x128xf32>
    %273 = tpu.matmul %271, %252, %cst_57 {dimension_numbers = #tpu.dot_dimension_numbers<[1], [0], [0], [1], [0, 0, 1, 1], [], []>} : vector<8x128xf32>, vector<128x128xf32>, vector<8x128xf32> -> vector<8x128xf32>
    %274 = vector.broadcast %258 : vector<1x128xf32> to vector<8x128xf32>
    %275 = arith.addf %273, %274 : vector<8x128xf32>
    %cst_58 = arith.constant dense<0.000000e+00> : vector<8x128xf32>
    %276 = tpu.matmul %272, %253, %cst_58 {dimension_numbers = #tpu.dot_dimension_numbers<[1], [0], [0], [1], [0, 0, 1, 1], [], []>} : vector<8x128xf32>, vector<128x128xf32>, vector<8x128xf32> -> vector<8x128xf32>
    %277 = vector.broadcast %259 : vector<1x128xf32> to vector<8x128xf32>
    %278 = arith.addf %276, %277 : vector<8x128xf32>
    %cst_59 = arith.constant dense<0.000000e+00> : vector<8x128xf32>
    %279 = tpu.matmul %272, %254, %cst_59 {dimension_numbers = #tpu.dot_dimension_numbers<[1], [0], [0], [1], [0, 0, 1, 1], [], []>} : vector<8x128xf32>, vector<128x128xf32>, vector<8x128xf32> -> vector<8x128xf32>
    %280 = vector.broadcast %260 : vector<1x128xf32> to vector<8x128xf32>
    %281 = arith.addf %279, %280 : vector<8x128xf32>
    %cst_60 = arith.constant dense<0.000000e+00> : vector<8x8xf32>
    %282 = tpu.matmul %275, %278, %cst_60 {dimension_numbers = #tpu.dot_dimension_numbers<[1], [1], [0], [0], [0, 0, 1, 0], [], []>} : vector<8x128xf32>, vector<8x128xf32>, vector<8x8xf32> -> vector<8x8xf32>
    %cst_61 = arith.constant dense<0xFF800000> : vector<8xf32>
    %283 = vector.multi_reduction <maximumf>, %282, %cst_61 [1] : vector<8x8xf32> to vector<8xf32>
    %284 = vector.shape_cast %283 : vector<8xf32> to vector<8x1xf32>
    %285 = vector.broadcast %284 : vector<8x1xf32> to vector<8x8xf32>
    %286 = arith.subf %282, %285 : vector<8x8xf32>
    %287 = math.exp %286 : vector<8x8xf32>
    %cst_62 = arith.constant dense<0.000000e+00> : vector<8xf32>
    %288 = vector.multi_reduction <add>, %287, %cst_62 [1] : vector<8x8xf32> to vector<8xf32>
    %289 = vector.shape_cast %288 : vector<8xf32> to vector<8x1xf32>
    %cst_63 = arith.constant 1.000000e+00 : f32
    %290 = vector.broadcast %cst_63 : f32 to vector<8x1xf32>
    %291 = arith.divf %290, %289 : vector<8x1xf32>
    %292 = vector.broadcast %291 : vector<8x1xf32> to vector<8x8xf32>
    %293 = arith.mulf %287, %292 : vector<8x8xf32>
    %cst_64 = arith.constant dense<0.000000e+00> : vector<8x128xf32>
    %294 = tpu.matmul %293, %281, %cst_64 {dimension_numbers = #tpu.dot_dimension_numbers<[1], [0], [0], [1], [0, 0, 1, 1], [], []>} : vector<8x8xf32>, vector<8x128xf32>, vector<8x128xf32> -> vector<8x128xf32>
    %cst_65 = arith.constant dense<0.000000e+00> : vector<8x128xf32>
    %295 = tpu.matmul %294, %255, %cst_65 {dimension_numbers = #tpu.dot_dimension_numbers<[1], [0], [0], [1], [0, 0, 1, 1], [], []>} : vector<8x128xf32>, vector<128x128xf32>, vector<8x128xf32> -> vector<8x128xf32>
    %cst_66 = arith.constant dense<0.000000e+00> : vector<8x128xf32>
    %296 = tpu.matmul %271, %256, %cst_66 {dimension_numbers = #tpu.dot_dimension_numbers<[1], [0], [0], [1], [0, 0, 1, 1], [], []>} : vector<8x128xf32>, vector<128x128xf32>, vector<8x128xf32> -> vector<8x128xf32>
    %297 = arith.addf %295, %296 : vector<8x128xf32>
    %298 = vector.broadcast %261 : vector<1x128xf32> to vector<8x128xf32>
    %299 = arith.addf %297, %298 : vector<8x128xf32>
    %300 = math.tanh %299 : vector<8x128xf32>
    %cst_67 = arith.constant dense<0.000000e+00> : vector<8x128xf32>
    %301 = tpu.matmul %300, %257, %cst_67 {dimension_numbers = #tpu.dot_dimension_numbers<[1], [0], [0], [1], [0, 0, 1, 1], [], []>} : vector<8x128xf32>, vector<128x128xf32>, vector<8x128xf32> -> vector<8x128xf32>
    %302 = vector.broadcast %262 : vector<1x128xf32> to vector<8x128xf32>
    %303 = arith.addf %301, %302 : vector<8x128xf32>
    %c0_68 = arith.constant 0 : index
    %c0_69 = arith.constant 0 : index
    %304 = vector.load %arg2[%c0_68, %c0_69] : memref<16x128xf32, #tpu.memory_space<vmem>>, vector<8x128xf32>
    tpu.vector_store %arg2[%c0_68, %c0_69], %303 {strides = array<i32>} : memref<16x128xf32, #tpu.memory_space<vmem>>, vector<8x128xf32>,
    %305 = vector.extract_strided_slice %40 {offsets = [1, 0], sizes = [1, 128], strides = [1, 1]} : vector<8x128xf32> to vector<1x128xf32>
    %306 = vector.extract_strided_slice %70 {offsets = [1, 0], sizes = [1, 128], strides = [1, 1]} : vector<8x128xf32> to vector<1x128xf32>
    %307 = vector.extract_strided_slice %100 {offsets = [1, 0], sizes = [1, 128], strides = [1, 1]} : vector<8x128xf32> to vector<1x128xf32>
    %308 = vector.extract_strided_slice %130 {offsets = [1, 0], sizes = [1, 128], strides = [1, 1]} : vector<8x128xf32> to vector<1x128xf32>
    %309 = vector.extract_strided_slice %160 {offsets = [1, 0], sizes = [1, 128], strides = [1, 1]} : vector<8x128xf32> to vector<1x128xf32>
    %310 = vector.extract_strided_slice %190 {offsets = [1, 0], sizes = [1, 128], strides = [1, 1]} : vector<8x128xf32> to vector<1x128xf32>
    %311 = vector.extract_strided_slice %220 {offsets = [1, 0], sizes = [1, 128], strides = [1, 1]} : vector<8x128xf32> to vector<1x128xf32>
    %312 = vector.extract_strided_slice %250 {offsets = [1, 0], sizes = [1, 128], strides = [1, 1]} : vector<8x128xf32> to vector<1x128xf32>
    %313 = tpu.concatenate %305, %306, %307, %308, %309, %310, %311, %312 in 0 : vector<1x128xf32>, vector<1x128xf32>, vector<1x128xf32>, vector<1x128xf32>, vector<1x128xf32>, vector<1x128xf32>, vector<1x128xf32>, vector<1x128xf32> -> vector<8x128xf32>
    %c72 = arith.constant 72 : index
    %c0_70 = arith.constant 0 : index
    %314 = vector.load %arg0[%c72, %c0_70] : memref<88x128xf32, #tpu.memory_space<vmem>>, vector<8x128xf32>
    %cst_71 = arith.constant dense<0.000000e+00> : vector<8x128xf32>
    %315 = tpu.matmul %313, %252, %cst_71 {dimension_numbers = #tpu.dot_dimension_numbers<[1], [0], [0], [1], [0, 0, 1, 1], [], []>} : vector<8x128xf32>, vector<128x128xf32>, vector<8x128xf32> -> vector<8x128xf32>
    %316 = vector.broadcast %258 : vector<1x128xf32> to vector<8x128xf32>
    %317 = arith.addf %315, %316 : vector<8x128xf32>
    %cst_72 = arith.constant dense<0.000000e+00> : vector<8x128xf32>
    %318 = tpu.matmul %314, %253, %cst_72 {dimension_numbers = #tpu.dot_dimension_numbers<[1], [0], [0], [1], [0, 0, 1, 1], [], []>} : vector<8x128xf32>, vector<128x128xf32>, vector<8x128xf32> -> vector<8x128xf32>
    %319 = vector.broadcast %259 : vector<1x128xf32> to vector<8x128xf32>
    %320 = arith.addf %318, %319 : vector<8x128xf32>
    %cst_73 = arith.constant dense<0.000000e+00> : vector<8x128xf32>
    %321 = tpu.matmul %314, %254, %cst_73 {dimension_numbers = #tpu.dot_dimension_numbers<[1], [0], [0], [1], [0, 0, 1, 1], [], []>} : vector<8x128xf32>, vector<128x128xf32>, vector<8x128xf32> -> vector<8x128xf32>
    %322 = vector.broadcast %260 : vector<1x128xf32> to vector<8x128xf32>
    %323 = arith.addf %321, %322 : vector<8x128xf32>
    %cst_74 = arith.constant dense<0.000000e+00> : vector<8x8xf32>
    %324 = tpu.matmul %317, %320, %cst_74 {dimension_numbers = #tpu.dot_dimension_numbers<[1], [1], [0], [0], [0, 0, 1, 0], [], []>} : vector<8x128xf32>, vector<8x128xf32>, vector<8x8xf32> -> vector<8x8xf32>
    %cst_75 = arith.constant dense<0xFF800000> : vector<8xf32>
    %325 = vector.multi_reduction <maximumf>, %324, %cst_75 [1] : vector<8x8xf32> to vector<8xf32>
    %326 = vector.shape_cast %325 : vector<8xf32> to vector<8x1xf32>
    %327 = vector.broadcast %326 : vector<8x1xf32> to vector<8x8xf32>
    %328 = arith.subf %324, %327 : vector<8x8xf32>
    %329 = math.exp %328 : vector<8x8xf32>
    %cst_76 = arith.constant dense<0.000000e+00> : vector<8xf32>
    %330 = vector.multi_reduction <add>, %329, %cst_76 [1] : vector<8x8xf32> to vector<8xf32>
    %331 = vector.shape_cast %330 : vector<8xf32> to vector<8x1xf32>
    %cst_77 = arith.constant 1.000000e+00 : f32
    %332 = vector.broadcast %cst_77 : f32 to vector<8x1xf32>
    %333 = arith.divf %332, %331 : vector<8x1xf32>
    %334 = vector.broadcast %333 : vector<8x1xf32> to vector<8x8xf32>
    %335 = arith.mulf %329, %334 : vector<8x8xf32>
    %cst_78 = arith.constant dense<0.000000e+00> : vector<8x128xf32>
    %336 = tpu.matmul %335, %323, %cst_78 {dimension_numbers = #tpu.dot_dimension_numbers<[1], [0], [0], [1], [0, 0, 1, 1], [], []>} : vector<8x8xf32>, vector<8x128xf32>, vector<8x128xf32> -> vector<8x128xf32>
    %cst_79 = arith.constant dense<0.000000e+00> : vector<8x128xf32>
    %337 = tpu.matmul %336, %255, %cst_79 {dimension_numbers = #tpu.dot_dimension_numbers<[1], [0], [0], [1], [0, 0, 1, 1], [], []>} : vector<8x128xf32>, vector<128x128xf32>, vector<8x128xf32> -> vector<8x128xf32>
    %cst_80 = arith.constant dense<0.000000e+00> : vector<8x128xf32>
    %338 = tpu.matmul %313, %256, %cst_80 {dimension_numbers = #tpu.dot_dimension_numbers<[1], [0], [0], [1], [0, 0, 1, 1], [], []>} : vector<8x128xf32>, vector<128x128xf32>, vector<8x128xf32> -> vector<8x128xf32>
    %339 = arith.addf %337, %338 : vector<8x128xf32>
    %340 = vector.broadcast %261 : vector<1x128xf32> to vector<8x128xf32>
    %341 = arith.addf %339, %340 : vector<8x128xf32>
    %342 = math.tanh %341 : vector<8x128xf32>
    %cst_81 = arith.constant dense<0.000000e+00> : vector<8x128xf32>
    %343 = tpu.matmul %342, %257, %cst_81 {dimension_numbers = #tpu.dot_dimension_numbers<[1], [0], [0], [1], [0, 0, 1, 1], [], []>} : vector<8x128xf32>, vector<128x128xf32>, vector<8x128xf32> -> vector<8x128xf32>
    %344 = vector.broadcast %262 : vector<1x128xf32> to vector<8x128xf32>
    %345 = arith.addf %343, %344 : vector<8x128xf32>
    %c8 = arith.constant 8 : index
    %c0_82 = arith.constant 0 : index
    %346 = vector.load %arg2[%c8, %c0_82] : memref<16x128xf32, #tpu.memory_space<vmem>>, vector<8x128xf32>
    tpu.vector_store %arg2[%c8, %c0_82], %345 {strides = array<i32>} : memref<16x128xf32, #tpu.memory_space<vmem>>, vector<8x128xf32>,
    return
  }
}

</mosaic_0001>

<llo_original>
// kernel: eq.8
$region0: #{eq.8}
  %s0 = inlined_call_operand.vmem [shape: s32[8,8], index: 0, kind: input, shape index: {}]
  %s1 = inlined_call_operand.vmem [shape: s32[64], index: 1, kind: output, shape index: {}]
  $region1: #{eq.8} parent=0
    #allocation0 [shape = 'u8[4096]{0}', space=vmem, size = 0x1000, scoped, tag = 'scoped mem for output reshape']
    %v2 = vld [vmem:[%s0] sm:$0x1]
    %vm3 = vcmask 64512
    %4 = vst.msk [vmem:[#allocation0] sm:$0x1] %vm3, %v2
    %s5 = scalar_lea.vmem %s0, 7
    %v6 = vld [vmem:[%s5] sm:$0x1]
    %7 = vrot.lane.b32.xlu0 %v6, 56
    %v8 = vpop.permute.xlu0 %7
    %vm9 = vcmask 523712
    %10 = vst.msk [vmem:[#allocation0] sm:$0x1] %vm9, %v8
    %s11 = scalar_lea.vmem %s0, 6
    %v12 = vld [vmem:[%s11] sm:$0x1]
    %13 = vrot.lane.b32.xlu0 %v12, 48
    %v14 = vpop.permute.xlu0 %13
    %vm15 = vcmask 458112
    %16 = vst.msk [vmem:[#allocation0] sm:$0x1] %vm15, %v14
    %s17 = scalar_lea.vmem %s0, 5
    %v18 = vld [vmem:[%s17] sm:$0x1]
    %19 = vrot.lane.b32.xlu0 %v18, 40
    %v20 = vpop.permute.xlu0 %19
    %vm21 = vcmask 392512
    %22 = vst.msk [vmem:[#allocation0] sm:$0x1] %vm21, %v20
    %s23 = scalar_lea.vmem %s0, 4
    %v24 = vld [vmem:[%s23] sm:$0x1]
    %25 = vrot.lane.b32.xlu0 %v24, 32
    %v26 = vpop.permute.xlu0 %25
    %vm27 = vcmask 326912
    %28 = vst.msk [vmem:[#allocation0] sm:$0x1] %vm27, %v26
    %s29 = scalar_lea.vmem %s0, 3
    %v30 = vld [vmem:[%s29] sm:$0x1]
    %31 = vrot.lane.b32.xlu0 %v30, 24
    %v32 = vpop.permute.xlu0 %31
    %vm33 = vcmask 261312
    %34 = vst.msk [vmem:[#allocation0] sm:$0x1] %vm33, %v32
    %s35 = scalar_lea.vmem %s0, 2
    %v36 = vld [vmem:[%s35] sm:$0x1]
    %37 = vrot.lane.b32.xlu0 %v36, 16
    %v38 = vpop.permute.xlu0 %37
    %vm39 = vcmask 195712
    %40 = vst.msk [vmem:[#allocation0] sm:$0x1] %vm39, %v38
    %s41 = scalar_lea.vmem %s0, 1
    %v42 = vld [vmem:[%s41] sm:$0x1]
    %43 = vrot.lane.b32.xlu0 %v42, 8
    %v44 = vpop.permute.xlu0 %43
    %vm45 = vcmask 130112
    %46 = vst.msk [vmem:[#allocation0] sm:$0x1] %vm45, %v44
    %s48 = sshll.u32 1, 1
    %s49 = ssub.s32 %s48, 1
    %v51 = vld [vmem:[#allocation0] sm:%s49]
    %s52 = sshll.u32 1, 1
    %s53 = ssub.s32 %s52, 1
    %54 = vst [vmem:[%s1] sm:%s53] %v51

// kernel: decoder_forward.1
$region0: #{decoder_forward.1}
  #allocation0 [shape = 'u32[]', space=smem, size = 0x4, offset = 0x4, fixed_abs, tag = 'smem constant byte address 0x4 - core index']
  #allocation1 [shape = 'u32[144,128]{1,0:T(1,128)}', space=vmem, size = 0x12000, scoped, tag = 'internal scratch']
  %s0 = inlined_call_operand.vmem [shape: f32[88,128], index: 0, kind: input, shape index: {}]
  %s1 = inlined_call_operand.vmem [shape: f32[1032,384], index: 1, kind: input, shape index: {}]
  %s2 = inlined_call_operand.hbm [shape: f32[16,128], index: 2, kind: output, shape index: {0}]
  %s3 = inlined_call_operand.vmem [shape: f32[8,128], index: 3, kind: output, shape index: {1}]
  %4 = xla_tuple %s2, %s3
  %s5 = sld [smem:[#allocation0]]
  $region26: #{decoder_forward.1} parent=0
    _
  %s7 = ssub.s32 1, %s5
  %s8 = scalar_select 0, %s7, %s5
  $region1: #{decoder_forward.1} parent=0
    #allocation2 [shape = 'u8[8192]{0}', space=vmem, size = 0x2000, scoped, tag = 'output window, operand 0, single buffered']
    #allocation3 [shape = 's32[1]{0}', space=sflag, size = 0x4, scoped, tag = 'scoped memory for decoder_forward.1']
    %9 = vsyncpa [#allocation3], 0
    // Predicated region
    $region2: #{decoder_forward.1} parent=1 // pred_check
      _
    $region3: #{decoder_forward.1} parent=1 // pred_check_branch
      %11 = sbr.rel (0) target = $region5
    $region4: #{decoder_forward.1} parent=1 // pred_region
      _
    $region5: #{decoder_forward.1} parent=1 // pred_fallthru
      _
    // Predicated region
    $region6: #{decoder_forward.1} parent=1 // pred_check
      _
    $region7: #{decoder_forward.1} parent=1 // pred_check_branch
      %13 = sbr.rel (0) target = $region9
    $region8: #{decoder_forward.1} parent=1 // pred_region
      _
    $region9: #{decoder_forward.1} parent=1 // pred_fallthru
      _
    %v14 = vld [vmem:[%s0] sm:$0xff]
    %v15 = vld [vmem:[%s0 + $0x8] sm:$0xff]
    %v16 = vld [vmem:[%s0 + $0x10] sm:$0xff]
    %v17 = vld [vmem:[%s0 + $0x18] sm:$0xff]
    %v18 = vld [vmem:[%s0 + $0x20] sm:$0xff]
    %v19 = vld [vmem:[%s0 + $0x28] sm:$0xff]
    %v20 = vld [vmem:[%s0 + $0x30] sm:$0xff]
    %v21 = vld [vmem:[%s0 + $0x38] sm:$0xff]
    %v22 = vld [vmem:[%s1] sm:$0xff]
    %v23 = vld [vmem:[%s1 + $0x18] sm:$0xff]
    %v24 = vld [vmem:[%s1 + $0x30] sm:$0xff]
    %v25 = vld [vmem:[%s1 + $0x48] sm:$0xff]
    %v26 = vld [vmem:[%s1 + $0x60] sm:$0xff]
    %v27 = vld [vmem:[%s1 + $0x78] sm:$0xff]
    %v28 = vld [vmem:[%s1 + $0x90] sm:$0xff]
    %v29 = vld [vmem:[%s1 + $0xa8] sm:$0xff]
    %v30 = vld [vmem:[%s1 + $0xc0] sm:$0xff]
    %v31 = vld [vmem:[%s1 + $0xd8] sm:$0xff]
    %v32 = vld [vmem:[%s1 + $0xf0] sm:$0xff]
    %v33 = vld [vmem:[%s1 + $0x108] sm:$0xff]
    %v34 = vld [vmem:[%s1 + $0x120] sm:$0xff]
    %v35 = vld [vmem:[%s1 + $0x138] sm:$0xff]
    %v36 = vld [vmem:[%s1 + $0x150] sm:$0xff]
    %v37 = vld [vmem:[%s1 + $0x168] sm:$0xff]
    %38 = vmatprep.subr.mxu0 0.0
    %39 = vmatpush1.msra.mxu0 %v37
    %40 = vmatprep.subr.mxu0 0.0
    %41 = vmatpush1.msra.mxu0 %v36
    %42 = vmatprep.subr.mxu0 0.0
    %43 = vmatpush1.msra.mxu0 %v35
    %44 = vmatprep.subr.mxu0 0.0
    %45 = vmatpush1.msra.mxu0 %v34
    %46 = vmatprep.subr.mxu0 0.0
    %47 = vmatpush1.msra.mxu0 %v33
    %48 = vmatprep.subr.mxu0 0.0
    %49 = vmatpush1.msra.mxu0 %v32
    %50 = vmatprep.subr.mxu0 0.0
    %51 = vmatpush1.msra.mxu0 %v31
    %52 = vmatprep.subr.mxu0 0.0
    %53 = vmatpush1.msra.mxu0 %v30
    %54 = vmatprep.subr.mxu0 0.0
    %55 = vmatpush1.msra.mxu0 %v29
    %56 = vmatprep.subr.mxu0 0.0
    %57 = vmatpush1.msra.mxu0 %v28
    %58 = vmatprep.subr.mxu0 0.0
    %59 = vmatpush1.msra.mxu0 %v27
    %60 = vmatprep.subr.mxu0 0.0
    %61 = vmatpush1.msra.mxu0 %v26
    %62 = vmatprep.subr.mxu0 0.0
    %63 = vmatpush1.msra.mxu0 %v25
    %64 = vmatprep.subr.mxu0 0.0
    %65 = vmatpush1.msra.mxu0 %v24
    %66 = vmatprep.subr.mxu0 0.0
    %67 = vmatpush1.msra.mxu0 %v23
    %68 = vmatprep.subr.mxu0 0.0
    %69 = vmatpush1.msra.mxu0 %v22
    %70 = vmatprep.subr.mxu0 0.0
    %71 = vmatpush2.msra.mxu0 0.0
    %72 = vmatprep.subr.mxu0 0.0
    %73 = vmatpush2.msra.mxu0 0.0
    %74 = vmatprep.subr.mxu0 0.0
    %75 = vmatpush2.msra.mxu0 0.0
    %76 = vmatprep.subr.mxu0 0.0
    %77 = vmatpush2.msra.mxu0 0.0
    %78 = vmatprep.subr.mxu0 0.0
    %79 = vmatpush2.msra.mxu0 0.0
    %80 = vmatprep.subr.mxu0 0.0
    %81 = vmatpush2.msra.mxu0 0.0
    %82 = vmatprep.subr.mxu0 0.0
    %83 = vmatpush2.msra.mxu0 0.0
    %84 = vmatprep.subr.mxu0 0.0
    %85 = vmatpush2.msra.mxu0 0.0
    %86 = vmatprep.subr.mxu0 0.0
    %87 = vmatpush2.msra.mxu0 0.0
    %88 = vmatprep.subr.mxu0 0.0
    %89 = vmatpush2.msra.mxu0 0.0
    %90 = vmatprep.subr.mxu0 0.0
    %91 = vmatpush2.msra.mxu0 0.0
    %92 = vmatprep.subr.mxu0 0.0
    %93 = vmatpush2.msra.mxu0 0.0
    %94 = vmatprep.subr.mxu0 0.0
    %95 = vmatpush2.msra.mxu0 0.0
    %96 = vmatprep.subr.mxu0 0.0
    %97 = vmatpush2.msra.mxu0 0.0
    %98 = vmatprep.subr.mxu0 0.0
    %99 = vmatpush2.msra.mxu0 0.0
    %100 = vmatprep.subr.mxu0 0.0
    %101 = vmatpush2.msra.mxu0 0.0
    %102 = vmatprep.mubr.f32.mxu0 0.0
    %103 = vmatmul.mubr.f32.gmra.mxu0 %v14
    %v104 = vpop.f32.mrf.mxu0
    %v105 = vadd.f32 0.0, %v104
    %v106 = vpop.f32.mrf.mxu0
    %107 = vmatprep.mubr.f32.mxu0 0.0
    %108 = vmatmul.mubr.f32.gmra.mxu0 %v15
    %v109 = vpop.f32.mrf.mxu0
    %v110 = vadd.f32 0.0, %v109
    %v111 = vpop.f32.mrf.mxu0
    %112 = vmatprep.mubr.f32.mxu0 0.0
    %113 = vmatmul.mubr.f32.gmra.mxu0 %v16
    %v114 = vpop.f32.mrf.mxu0
    %v115 = vadd.f32 0.0, %v114
    %v116 = vpop.f32.mrf.mxu0
    %117 = vmatprep.mubr.f32.mxu0 0.0
    %118 = vmatmul.mubr.f32.gmra.mxu0 %v17
    %v119 = vpop.f32.mrf.mxu0
    %v120 = vadd.f32 0.0, %v119
    %v121 = vpop.f32.mrf.mxu0
    %122 = vmatprep.mubr.f32.mxu0 0.0
    %123 = vmatmul.mubr.f32.gmra.mxu0 %v18
    %v124 = vpop.f32.mrf.mxu0
    %v125 = vadd.f32 0.0, %v124
    %v126 = vpop.f32.mrf.mxu0
    %127 = vmatprep.mubr.f32.mxu0 0.0
    %128 = vmatmul.mubr.f32.gmra.mxu0 %v19
    %v129 = vpop.f32.mrf.mxu0
    %v130 = vadd.f32 0.0, %v129
    %v131 = vpop.f32.mrf.mxu0
    %132 = vmatprep.mubr.f32.mxu0 0.0
    %133 = vmatmul.mubr.f32.gmra.mxu0 %v20
    %v134 = vpop.f32.mrf.mxu0
    %v135 = vadd.f32 0.0, %v134
    %v136 = vpop.f32.mrf.mxu0
    %137 = vmatprep.mubr.f32.mxu0 0.0
    %138 = vmatmul.mubr.f32.gmra.mxu0 %v21
    %v139 = vpop.f32.mrf.mxu0
    %v140 = vadd.f32 0.0, %v139
    %v141 = vpop.f32.mrf.mxu0
    %142 = vdwg.mxu0
    %v143 = vld [vmem:[%s1 + $0x180] sm:$0xff]
    %v144 = vld [vmem:[%s1 + $0x188] sm:$0xff]
    %v145 = vld [vmem:[%s1 + $0x190] sm:$0xff]
    %v146 = vld [vmem:[%s1 + $0x198] sm:$0xff]
    %v147 = vld [vmem:[%s1 + $0x1a0] sm:$0xff]
    %v148 = vld [vmem:[%s1 + $0x1a8] sm:$0xff]
    %v149 = vld [vmem:[%s1 + $0x1b0] sm:$0xff]
    %v150 = vld [vmem:[%s1 + $0x1b8] sm:$0xff]
    %v151 = vld [vmem:[%s1 + $0x1c0] sm:$0xff]
    %v152 = vld [vmem:[%s1 + $0x1c8] sm:$0xff]
    %v153 = vld [vmem:[%s1 + $0x1d0] sm:$0xff]
    %v154 = vld [vmem:[%s1 + $0x1d8] sm:$0xff]
    %v155 = vld [vmem:[%s1 + $0x1e0] sm:$0xff]
    %v156 = vld [vmem:[%s1 + $0x1e8] sm:$0xff]
    %v157 = vld [vmem:[%s1 + $0x1f0] sm:$0xff]
    %v158 = vld [vmem:[%s1 + $0x1f8] sm:$0xff]
    %v159 = vld [vmem:[%s1 + $0x200] sm:$0xff]
    %v160 = vld [vmem:[%s1 + $0x208] sm:$0xff]
    %v161 = vld [vmem:[%s1 + $0x210] sm:$0xff]
    %v162 = vld [vmem:[%s1 + $0x218] sm:$0xff]
    %v163 = vld [vmem:[%s1 + $0x220] sm:$0xff]
    %v164 = vld [vmem:[%s1 + $0x228] sm:$0xff]
    %v165 = vld [vmem:[%s1 + $0x230] sm:$0xff]
    %v166 = vld [vmem:[%s1 + $0x238] sm:$0xff]
    %v167 = vld [vmem:[%s1 + $0x240] sm:$0xff]
    %v168 = vld [vmem:[%s1 + $0x248] sm:$0xff]
    %v169 = vld [vmem:[%s1 + $0x250] sm:$0xff]
    %v170 = vld [vmem:[%s1 + $0x258] sm:$0xff]
    %v171 = vld [vmem:[%s1 + $0x260] sm:$0xff]
    %v172 = vld [vmem:[%s1 + $0x268] sm:$0xff]
    %v173 = vld [vmem:[%s1 + $0x270] sm:$0xff]
    %v174 = vld [vmem:[%s1 + $0x278] sm:$0xff]
    %v175 = vld [vmem:[%s1 + $0x280] sm:$0xff]
    %v176 = vld [vmem:[%s1 + $0x288] sm:$0xff]
    %v177 = vld [vmem:[%s1 + $0x290] sm:$0xff]
    %v178 = vld [vmem:[%s1 + $0x298] sm:$0xff]
    %v179 = vld [vmem:[%s1 + $0x2a0] sm:$0xff]
    %v180 = vld [vmem:[%s1 + $0x2a8] sm:$0xff]
    %v181 = vld [vmem:[%s1 + $0x2b0] sm:$0xff]
    %v182 = vld [vmem:[%s1 + $0x2b8] sm:$0xff]
    %v183 = vld [vmem:[%s1 + $0x2c0] sm:$0xff]
    %v184 = vld [vmem:[%s1 + $0x2c8] sm:$0xff]
    %v185 = vld [vmem:[%s1 + $0x2d0] sm:$0xff]
    %v186 = vld [vmem:[%s1 + $0x2d8] sm:$0xff]
    %v187 = vld [vmem:[%s1 + $0x2e0] sm:$0xff]
    %v188 = vld [vmem:[%s1 + $0x2e8] sm:$0xff]
    %v189 = vld [vmem:[%s1 + $0x2f0] sm:$0xff]
    %v190 = vld [vmem:[%s1 + $0x2f8] sm:$0xff]
    %s191 = scalar_lea.vmem %s1, 3072
    %v192 = vld [vmem:[%s191] ss:$8 sm:$0x7]
    %v194 = vlaneseq
    %v195 = vshrl.u32 %v194, 7
    %v196 = vsub.s32 0, %v195
    %v197 = vrot.slane %v192, %v196
    %v198 = vlaneseq
    %v199 = vshrl.u32 %v198, 7
    %v200 = vsub.s32 1, %v199
    %v201 = vrot.slane %v192, %v200
    %v202 = vlaneseq
    %v203 = vshrl.u32 %v202, 7
    %v204 = vsub.s32 2, %v203
    %v205 = vrot.slane %v192, %v204
    %209 = vmatprep.subr.mxu0 %v189
    %210 = vmatpush1.msra.mxu0 %v188
    %211 = vmatprep.subr.mxu0 %v186
    %212 = vmatpush1.msra.mxu0 %v185
    %213 = vmatprep.subr.mxu0 %v183
    %214 = vmatpush1.msra.mxu0 %v182
    %215 = vmatprep.subr.mxu0 %v180
    %216 = vmatpush1.msra.mxu0 %v179
    %217 = vmatprep.subr.mxu0 %v177
    %218 = vmatpush1.msra.mxu0 %v176
    %219 = vmatprep.subr.mxu0 %v174
    %220 = vmatpush1.msra.mxu0 %v173
    %221 = vmatprep.subr.mxu0 %v171
    %222 = vmatpush1.msra.mxu0 %v170
    %223 = vmatprep.subr.mxu0 %v168
    %224 = vmatpush1.msra.mxu0 %v167
    %225 = vmatprep.subr.mxu0 %v165
    %226 = vmatpush1.msra.mxu0 %v164
    %227 = vmatprep.subr.mxu0 %v162
    %228 = vmatpush1.msra.mxu0 %v161
    %229 = vmatprep.subr.mxu0 %v159
    %230 = vmatpush1.msra.mxu0 %v158
    %231 = vmatprep.subr.mxu0 %v156
    %232 = vmatpush1.msra.mxu0 %v155
    %233 = vmatprep.subr.mxu0 %v153
    %234 = vmatpush1.msra.mxu0 %v152
    %235 = vmatprep.subr.mxu0 %v150
    %236 = vmatpush1.msra.mxu0 %v149
    %237 = vmatprep.subr.mxu0 %v147
    %238 = vmatpush1.msra.mxu0 %v146
    %239 = vmatprep.subr.mxu0 %v144
    %240 = vmatpush1.msra.mxu0 %v143
    %241 = vmatprep.subr.mxu0 0.0
    %242 = vmatpush2.msra.mxu0 0.0
    %243 = vmatprep.subr.mxu0 0.0
    %244 = vmatpush2.msra.mxu0 0.0
    %245 = vmatprep.subr.mxu0 0.0
    %246 = vmatpush2.msra.mxu0 0.0
    %247 = vmatprep.subr.mxu0 0.0
    %248 = vmatpush2.msra.mxu0 0.0
    %249 = vmatprep.subr.mxu0 0.0
    %250 = vmatpush2.msra.mxu0 0.0
    %251 = vmatprep.subr.mxu0 0.0
    %252 = vmatpush2.msra.mxu0 0.0
    %253 = vmatprep.subr.mxu0 0.0
    %254 = vmatpush2.msra.mxu0 0.0
    %255 = vmatprep.subr.mxu0 0.0
    %256 = vmatpush2.msra.mxu0 0.0
    %257 = vmatprep.subr.mxu0 0.0
    %258 = vmatpush2.msra.mxu0 0.0
    %259 = vmatprep.subr.mxu0 0.0
    %260 = vmatpush2.msra.mxu0 0.0
    %261 = vmatprep.subr.mxu0 0.0
    %262 = vmatpush2.msra.mxu0 0.0
    %263 = vmatprep.subr.mxu0 0.0
    %264 = vmatpush2.msra.mxu0 0.0
    %265 = vmatprep.subr.mxu0 0.0
    %266 = vmatpush2.msra.mxu0 0.0
    %267 = vmatprep.subr.mxu0 0.0
    %268 = vmatpush2.msra.mxu0 0.0
    %269 = vmatprep.subr.mxu0 0.0
    %270 = vmatpush2.msra.mxu0 0.0
    %271 = vmatprep.subr.mxu0 0.0
    %272 = vmatpush2.msra.mxu0 0.0
    %273 = vmatprep.mubr.f32.mxu0 0.0
    %274 = vmatmul.mubr.f32.gmra.mxu0 %v105
    %v275 = vpop.f32.mrf.mxu0
    %v276 = vadd.f32 %v197, %v275
    %v277 = vpop.f32.mrf.mxu0
    %v278 = vadd.f32 %v201, %v277
    %279 = vmatprep.mubr.f32.mxu0 0.0
    %280 = vmatmul.mubr.f32.gmra.mxu0 %v110
    %v281 = vpop.f32.mrf.mxu0
    %v282 = vadd.f32 %v197, %v281
    %v283 = vpop.f32.mrf.mxu0
    %v284 = vadd.f32 %v201, %v283
    %285 = vmatprep.mubr.f32.mxu0 0.0
    %286 = vmatmul.mubr.f32.gmra.mxu0 %v115
    %v287 = vpop.f32.mrf.mxu0
    %v288 = vadd.f32 %v197, %v287
    %v289 = vpop.f32.mrf.mxu0
    %v290 = vadd.f32 %v201, %v289
    %291 = vmatprep.mubr.f32.mxu0 0.0
    %292 = vmatmul.mubr.f32.gmra.mxu0 %v120
    %v293 = vpop.f32.mrf.mxu0
    %v294 = vadd.f32 %v197, %v293
    %v295 = vpop.f32.mrf.mxu0
    %v296 = vadd.f32 %v201, %v295
    %297 = vmatprep.mubr.f32.mxu0 0.0
    %298 = vmatmul.mubr.f32.gmra.mxu0 %v125
    %v299 = vpop.f32.mrf.mxu0
    %v300 = vadd.f32 %v197, %v299
    %v301 = vpop.f32.mrf.mxu0
    %v302 = vadd.f32 %v201, %v301
    %303 = vmatprep.mubr.f32.mxu0 0.0
    %304 = vmatmul.mubr.f32.gmra.mxu0 %v130
    %v305 = vpop.f32.mrf.mxu0
    %v306 = vadd.f32 %v197, %v305
    %v307 = vpop.f32.mrf.mxu0
    %v308 = vadd.f32 %v201, %v307
    %309 = vmatprep.mubr.f32.mxu0 0.0
    %310 = vmatmul.mubr.f32.gmra.mxu0 %v135
    %v311 = vpop.f32.mrf.mxu0
    %v312 = vadd.f32 %v197, %v311
    %v313 = vpop.f32.mrf.mxu0
    %v314 = vadd.f32 %v201, %v313
    %315 = vmatprep.mubr.f32.mxu0 0.0
    %316 = vmatmul.mubr.f32.gmra.mxu0 %v140
    %v317 = vpop.f32.mrf.mxu0
    %v318 = vadd.f32 %v197, %v317
    %v319 = vpop.f32.mrf.mxu0
    %v320 = vadd.f32 %v201, %v319
    %321 = vdwg.mxu0
    %322 = vmatprep.subr.mxu0 0.0
    %323 = vmatpush1.msra.mxu0 %v190
    %324 = vmatprep.subr.mxu0 0.0
    %325 = vmatpush1.msra.mxu0 %v187
    %326 = vmatprep.subr.mxu0 0.0
    %327 = vmatpush1.msra.mxu0 %v184
    %328 = vmatprep.subr.mxu0 0.0
    %329 = vmatpush1.msra.mxu0 %v181
    %330 = vmatprep.subr.mxu0 0.0
    %331 = vmatpush1.msra.mxu0 %v178
    %332 = vmatprep.subr.mxu0 0.0
    %333 = vmatpush1.msra.mxu0 %v175
    %334 = vmatprep.subr.mxu0 0.0
    %335 = vmatpush1.msra.mxu0 %v172
    %336 = vmatprep.subr.mxu0 0.0
    %337 = vmatpush1.msra.mxu0 %v169
    %338 = vmatprep.subr.mxu0 0.0
    %339 = vmatpush1.msra.mxu0 %v166
    %340 = vmatprep.subr.mxu0 0.0
    %341 = vmatpush1.msra.mxu0 %v163
    %342 = vmatprep.subr.mxu0 0.0
    %343 = vmatpush1.msra.mxu0 %v160
    %344 = vmatprep.subr.mxu0 0.0
    %345 = vmatpush1.msra.mxu0 %v157
    %346 = vmatprep.subr.mxu0 0.0
    %347 = vmatpush1.msra.mxu0 %v154
    %348 = vmatprep.subr.mxu0 0.0
    %349 = vmatpush1.msra.mxu0 %v151
    %350 = vmatprep.subr.mxu0 0.0
    %351 = vmatpush1.msra.mxu0 %v148
    %352 = vmatprep.subr.mxu0 0.0
    %353 = vmatpush1.msra.mxu0 %v145
    %354 = vmatprep.subr.mxu0 0.0
    %355 = vmatpush2.msra.mxu0 0.0
    %356 = vmatprep.subr.mxu0 0.0
    %357 = vmatpush2.msra.mxu0 0.0
    %358 = vmatprep.subr.mxu0 0.0
    %359 = vmatpush2.msra.mxu0 0.0
    %360 = vmatprep.subr.mxu0 0.0
    %361 = vmatpush2.msra.mxu0 0.0
    %362 = vmatprep.subr.mxu0 0.0
    %363 = vmatpush2.msra.mxu0 0.0
    %364 = vmatprep.subr.mxu0 0.0
    %365 = vmatpush2.msra.mxu0 0.0
    %366 = vmatprep.subr.mxu0 0.0
    %367 = vmatpush2.msra.mxu0 0.0
    %368 = vmatprep.subr.mxu0 0.0
    %369 = vmatpush2.msra.mxu0 0.0
    %370 = vmatprep.subr.mxu0 0.0
    %371 = vmatpush2.msra.mxu0 0.0
    %372 = vmatprep.subr.mxu0 0.0
    %373 = vmatpush2.msra.mxu0 0.0
    %374 = vmatprep.subr.mxu0 0.0
    %375 = vmatpush2.msra.mxu0 0.0
    %376 = vmatprep.subr.mxu0 0.0
    %377 = vmatpush2.msra.mxu0 0.0
    %378 = vmatprep.subr.mxu0 0.0
    %379 = vmatpush2.msra.mxu0 0.0
    %380 = vmatprep.subr.mxu0 0.0
    %381 = vmatpush2.msra.mxu0 0.0
    %382 = vmatprep.subr.mxu0 0.0
    %383 = vmatpush2.msra.mxu0 0.0
    %384 = vmatprep.subr.mxu0 0.0
    %385 = vmatpush2.msra.mxu0 0.0
    %386 = vmatprep.mubr.f32.mxu0 0.0
    %387 = vmatmul.mubr.f32.gmra.mxu0 %v105
    %v388 = vpop.f32.mrf.mxu0
    %v389 = vadd.f32 %v205, %v388
    %v390 = vpop.f32.mrf.mxu0
    %391 = vmatprep.mubr.f32.mxu0 0.0
    %392 = vmatmul.mubr.f32.gmra.mxu0 %v110
    %v393 = vpop.f32.mrf.mxu0
    %v394 = vadd.f32 %v205, %v393
    %v395 = vpop.f32.mrf.mxu0
    %396 = vmatprep.mubr.f32.mxu0 0.0
    %397 = vmatmul.mubr.f32.gmra.mxu0 %v115
    %v398 = vpop.f32.mrf.mxu0
    %v399 = vadd.f32 %v205, %v398
    %v400 = vpop.f32.mrf.mxu0
    %401 = vmatprep.mubr.f32.mxu0 0.0
    %402 = vmatmul.mubr.f32.gmra.mxu0 %v120
    %v403 = vpop.f32.mrf.mxu0
    %v404 = vadd.f32 %v205, %v403
    %v405 = vpop.f32.mrf.mxu0
    %406 = vmatprep.mubr.f32.mxu0 0.0
    %407 = vmatmul.mubr.f32.gmra.mxu0 %v125
    %v408 = vpop.f32.mrf.mxu0
    %v409 = vadd.f32 %v205, %v408
    %v410 = vpop.f32.mrf.mxu0
    %411 = vmatprep.mubr.f32.mxu0 0.0
    %412 = vmatmul.mubr.f32.gmra.mxu0 %v130
    %v413 = vpop.f32.mrf.mxu0
    %v414 = vadd.f32 %v205, %v413
    %v415 = vpop.f32.mrf.mxu0
    %416 = vmatprep.mubr.f32.mxu0 0.0
    %417 = vmatmul.mubr.f32.gmra.mxu0 %v135
    %v418 = vpop.f32.mrf.mxu0
    %v419 = vadd.f32 %v205, %v418
    %v420 = vpop.f32.mrf.mxu0
    %421 = vmatprep.mubr.f32.mxu0 0.0
    %422 = vmatmul.mubr.f32.gmra.mxu0 %v140
    %v423 = vpop.f32.mrf.mxu0
    %v424 = vadd.f32 %v205, %v423
    %v425 = vpop.f32.mrf.mxu0
    %426 = vdwg.mxu0
    %v427 = vld [vmem:[%s1 + $0x300] sm:$0xff]
    %v428 = vld [vmem:[%s1 + $0x308] sm:$0xff]
    %v429 = vld [vmem:[%s1 + $0x310] sm:$0xff]
    %v430 = vld [vmem:[%s1 + $0x318] sm:$0xff]
    %v431 = vld [vmem:[%s1 + $0x320] sm:$0xff]
    %v432 = vld [vmem:[%s1 + $0x328] sm:$0xff]
    %v433 = vld [vmem:[%s1 + $0x330] sm:$0xff]
    %v434 = vld [vmem:[%s1 + $0x338] sm:$0xff]
    %v435 = vld [vmem:[%s1 + $0x340] sm:$0xff]
    %v436 = vld [vmem:[%s1 + $0x348] sm:$0xff]
    %v437 = vld [vmem:[%s1 + $0x350] sm:$0xff]
    %v438 = vld [vmem:[%s1 + $0x358] sm:$0xff]
    %v439 = vld [vmem:[%s1 + $0x360] sm:$0xff]
    %v440 = vld [vmem:[%s1 + $0x368] sm:$0xff]
    %v441 = vld [vmem:[%s1 + $0x370] sm:$0xff]
    %v442 = vld [vmem:[%s1 + $0x378] sm:$0xff]
    %v443 = vld [vmem:[%s1 + $0x380] sm:$0xff]
    %v444 = vld [vmem:[%s1 + $0x388] sm:$0xff]
    %v445 = vld [vmem:[%s1 + $0x390] sm:$0xff]
    %v446 = vld [vmem:[%s1 + $0x398] sm:$0xff]
    %v447 = vld [vmem:[%s1 + $0x3a0] sm:$0xff]
    %v448 = vld [vmem:[%s1 + $0x3a8] sm:$0xff]
    %v449 = vld [vmem:[%s1 + $0x3b0] sm:$0xff]
    %v450 = vld [vmem:[%s1 + $0x3b8] sm:$0xff]
    %v451 = vld [vmem:[%s1 + $0x3c0] sm:$0xff]
    %v452 = vld [vmem:[%s1 + $0x3c8] sm:$0xff]
    %v453 = vld [vmem:[%s1 + $0x3d0] sm:$0xff]
    %v454 = vld [vmem:[%s1 + $0x3d8] sm:$0xff]
    %v455 = vld [vmem:[%s1 + $0x3e0] sm:$0xff]
    %v456 = vld [vmem:[%s1 + $0x3e8] sm:$0xff]
    %v457 = vld [vmem:[%s1 + $0x3f0] sm:$0xff]
    %v458 = vld [vmem:[%s1 + $0x3f8] sm:$0xff]
    %v459 = vld [vmem:[%s1 + $0x400] sm:$0xff]
    %v460 = vld [vmem:[%s1 + $0x408] sm:$0xff]
    %v461 = vld [vmem:[%s1 + $0x410] sm:$0xff]
    %v462 = vld [vmem:[%s1 + $0x418] sm:$0xff]
    %v463 = vld [vmem:[%s1 + $0x420] sm:$0xff]
    %v464 = vld [vmem:[%s1 + $0x428] sm:$0xff]
    %v465 = vld [vmem:[%s1 + $0x430] sm:$0xff]
    %v466 = vld [vmem:[%s1 + $0x438] sm:$0xff]
    %v467 = vld [vmem:[%s1 + $0x440] sm:$0xff]
    %v468 = vld [vmem:[%s1 + $0x448] sm:$0xff]
    %v469 = vld [vmem:[%s1 + $0x450] sm:$0xff]
    %v470 = vld [vmem:[%s1 + $0x458] sm:$0xff]
    %v471 = vld [vmem:[%s1 + $0x460] sm:$0xff]
    %v472 = vld [vmem:[%s1 + $0x468] sm:$0xff]
    %v473 = vld [vmem:[%s1 + $0x470] sm:$0xff]
    %v474 = vld [vmem:[%s1 + $0x478] sm:$0xff]
    %s475 = scalar_lea.vmem %s1, 3073
    %v476 = vld [vmem:[%s475] ss:$8 sm:$0x7]
    %v477 = vld [vmem:[%s0 + $0x50] sm:$0xff]
    %v479 = vlaneseq
    %v480 = vshrl.u32 %v479, 7
    %v481 = vsub.s32 0, %v480
    %v482 = vrot.slane %v476, %v481
    %v483 = vlaneseq
    %v484 = vshrl.u32 %v483, 7
    %v485 = vsub.s32 1, %v484
    %v486 = vrot.slane %v476, %v485
    %v487 = vlaneseq
    %v488 = vshrl.u32 %v487, 7
    %v489 = vsub.s32 2, %v488
    %v490 = vrot.slane %v476, %v489
    %494 = vmatprep.subr.mxu0 %v473
    %495 = vmatpush1.msra.mxu0 %v472
    %496 = vmatprep.subr.mxu0 %v470
    %497 = vmatpush1.msra.mxu0 %v469
    %498 = vmatprep.subr.mxu0 %v467
    %499 = vmatpush1.msra.mxu0 %v466
    %500 = vmatprep.subr.mxu0 %v464
    %501 = vmatpush1.msra.mxu0 %v463
    %502 = vmatprep.subr.mxu0 %v461
    %503 = vmatpush1.msra.mxu0 %v460
    %504 = vmatprep.subr.mxu0 %v458
    %505 = vmatpush1.msra.mxu0 %v457
    %506 = vmatprep.subr.mxu0 %v455
    %507 = vmatpush1.msra.mxu0 %v454
    %508 = vmatprep.subr.mxu0 %v452
    %509 = vmatpush1.msra.mxu0 %v451
    %510 = vmatprep.subr.mxu0 %v449
    %511 = vmatpush1.msra.mxu0 %v448
    %512 = vmatprep.subr.mxu0 %v446
    %513 = vmatpush1.msra.mxu0 %v445
    %514 = vmatprep.subr.mxu0 %v443
    %515 = vmatpush1.msra.mxu0 %v442
    %516 = vmatprep.subr.mxu0 %v440
    %517 = vmatpush1.msra.mxu0 %v439
    %518 = vmatprep.subr.mxu0 %v437
    %519 = vmatpush1.msra.mxu0 %v436
    %520 = vmatprep.subr.mxu0 %v434
    %521 = vmatpush1.msra.mxu0 %v433
    %522 = vmatprep.subr.mxu0 %v431
    %523 = vmatpush1.msra.mxu0 %v430
    %524 = vmatprep.subr.mxu0 %v428
    %525 = vmatpush1.msra.mxu0 %v427
    %526 = vmatprep.subr.mxu0 0.0
    %527 = vmatpush2.msra.mxu0 0.0
    %528 = vmatprep.subr.mxu0 0.0
    %529 = vmatpush2.msra.mxu0 0.0
    %530 = vmatprep.subr.mxu0 0.0
    %531 = vmatpush2.msra.mxu0 0.0
    %532 = vmatprep.subr.mxu0 0.0
    %533 = vmatpush2.msra.mxu0 0.0
    %534 = vmatprep.subr.mxu0 0.0
    %535 = vmatpush2.msra.mxu0 0.0
    %536 = vmatprep.subr.mxu0 0.0
    %537 = vmatpush2.msra.mxu0 0.0
    %538 = vmatprep.subr.mxu0 0.0
    %539 = vmatpush2.msra.mxu0 0.0
    %540 = vmatprep.subr.mxu0 0.0
    %541 = vmatpush2.msra.mxu0 0.0
    %542 = vmatprep.subr.mxu0 0.0
    %543 = vmatpush2.msra.mxu0 0.0
    %544 = vmatprep.subr.mxu0 0.0
    %545 = vmatpush2.msra.mxu0 0.0
    %546 = vmatprep.subr.mxu0 0.0
    %547 = vmatpush2.msra.mxu0 0.0
    %548 = vmatprep.subr.mxu0 0.0
    %549 = vmatpush2.msra.mxu0 0.0
    %550 = vmatprep.subr.mxu0 0.0
    %551 = vmatpush2.msra.mxu0 0.0
    %552 = vmatprep.subr.mxu0 0.0
    %553 = vmatpush2.msra.mxu0 0.0
    %554 = vmatprep.subr.mxu0 0.0
    %555 = vmatpush2.msra.mxu0 0.0
    %556 = vmatprep.subr.mxu0 0.0
    %557 = vmatpush2.msra.mxu0 0.0
    %558 = vmatprep.mubr.f32.mxu0 0.0
    %559 = vmatmul.mubr.f32.gmra.mxu0 %v477
    %v560 = vpop.f32.mrf.mxu0
    %v561 = vadd.f32 %v482, %v560
    %v562 = vpop.f32.mrf.mxu0
    %v563 = vadd.f32 %v486, %v562
    %564 = vdwg.mxu0
    %565 = vmatprep.subr.mxu0 0.0
    %566 = vmatpush1.msra.mxu0 %v474
    %567 = vmatprep.subr.mxu0 0.0
    %568 = vmatpush1.msra.mxu0 %v471
    %569 = vmatprep.subr.mxu0 0.0
    %570 = vmatpush1.msra.mxu0 %v468
    %571 = vmatprep.subr.mxu0 0.0
    %572 = vmatpush1.msra.mxu0 %v465
    %573 = vmatprep.subr.mxu0 0.0
    %574 = vmatpush1.msra.mxu0 %v462
    %575 = vmatprep.subr.mxu0 0.0
    %576 = vmatpush1.msra.mxu0 %v459
    %577 = vmatprep.subr.mxu0 0.0
    %578 = vmatpush1.msra.mxu0 %v456
    %579 = vmatprep.subr.mxu0 0.0
    %580 = vmatpush1.msra.mxu0 %v453
    %581 = vmatprep.subr.mxu0 0.0
    %582 = vmatpush1.msra.mxu0 %v450
    %583 = vmatprep.subr.mxu0 0.0
    %584 = vmatpush1.msra.mxu0 %v447
    %585 = vmatprep.subr.mxu0 0.0
    %586 = vmatpush1.msra.mxu0 %v444
    %587 = vmatprep.subr.mxu0 0.0
    %588 = vmatpush1.msra.mxu0 %v441
    %589 = vmatprep.subr.mxu0 0.0
    %590 = vmatpush1.msra.mxu0 %v438
    %591 = vmatprep.subr.mxu0 0.0
    %592 = vmatpush1.msra.mxu0 %v435
    %593 = vmatprep.subr.mxu0 0.0
    %594 = vmatpush1.msra.mxu0 %v432
    %595 = vmatprep.subr.mxu0 0.0
    %596 = vmatpush1.msra.mxu0 %v429
    %597 = vmatprep.subr.mxu0 0.0
    %598 = vmatpush2.msra.mxu0 0.0
    %599 = vmatprep.subr.mxu0 0.0
    %600 = vmatpush2.msra.mxu0 0.0
    %601 = vmatprep.subr.mxu0 0.0
    %602 = vmatpush2.msra.mxu0 0.0
    %603 = vmatprep.subr.mxu0 0.0
    %604 = vmatpush2.msra.mxu0 0.0
    %605 = vmatprep.subr.mxu0 0.0
    %606 = vmatpush2.msra.mxu0 0.0
    %607 = vmatprep.subr.mxu0 0.0
    %608 = vmatpush2.msra.mxu0 0.0
    %609 = vmatprep.subr.mxu0 0.0
    %610 = vmatpush2.msra.mxu0 0.0
    %611 = vmatprep.subr.mxu0 0.0
    %612 = vmatpush2.msra.mxu0 0.0
    %613 = vmatprep.subr.mxu0 0.0
    %614 = vmatpush2.msra.mxu0 0.0
    %615 = vmatprep.subr.mxu0 0.0
    %616 = vmatpush2.msra.mxu0 0.0
    %617 = vmatprep.subr.mxu0 0.0
    %618 = vmatpush2.msra.mxu0 0.0
    %619 = vmatprep.subr.mxu0 0.0
    %620 = vmatpush2.msra.mxu0 0.0
    %621 = vmatprep.subr.mxu0 0.0
    %622 = vmatpush2.msra.mxu0 0.0
    %623 = vmatprep.subr.mxu0 0.0
    %624 = vmatpush2.msra.mxu0 0.0
    %625 = vmatprep.subr.mxu0 0.0
    %626 = vmatpush2.msra.mxu0 0.0
    %627 = vmatprep.subr.mxu0 0.0
    %628 = vmatpush2.msra.mxu0 0.0
    %629 = vmatprep.mubr.f32.mxu0 0.0
    %630 = vmatmul.mubr.f32.gmra.mxu0 %v477
    %v631 = vpop.f32.mrf.mxu0
    %v632 = vadd.f32 %v490, %v631
    %v633 = vpop.f32.mrf.mxu0
    %634 = vdwg.mxu0
    %v635 = vadd.f32 %v276, %v561
    %v636 = vxor.u32 %v635, 2147483648
    %v637 = vmul.f32 %v636, 1.442695
    %v638 = vpow.pop %v637
    %v639 = vadd.f32 %v638, 1.0
    %v640 = vrcp.pop %v639
    %v641 = vmul.f32 1.0, %v640
    %v642 = vadd.f32 %v278, %v563
    %v643 = vxor.u32 %v642, 2147483648
    %v644 = vmul.f32 %v643, 1.442695
    %v645 = vpow.pop %v644
    %v646 = vadd.f32 %v645, 1.0
    %v647 = vrcp.pop %v646
    %v648 = vmul.f32 1.0, %v647
    %v649 = vmul.f32 %v641, %v632
    %v650 = vadd.f32 %v389, %v649
    %v651 = vtanh.pop %v650
    %v652 = vsub.f32 1.0, %v648
    %v653 = vmul.f32 %v652, %v651
    %v654 = vmul.f32 %v648, %v477
    %v655 = vadd.f32 %v653, %v654
    %656 = vmatprep.subr.mxu0 %v473
    %657 = vmatpush1.msra.mxu0 %v472
    %658 = vmatprep.subr.mxu0 %v470
    %659 = vmatpush1.msra.mxu0 %v469
    %660 = vmatprep.subr.mxu0 %v467
    %661 = vmatpush1.msra.mxu0 %v466
    %662 = vmatprep.subr.mxu0 %v464
    %663 = vmatpush1.msra.mxu0 %v463
    %664 = vmatprep.subr.mxu0 %v461
    %665 = vmatpush1.msra.mxu0 %v460
    %666 = vmatprep.subr.mxu0 %v458
    %667 = vmatpush1.msra.mxu0 %v457
    %668 = vmatprep.subr.mxu0 %v455
    %669 = vmatpush1.msra.mxu0 %v454
    %670 = vmatprep.subr.mxu0 %v452
    %671 = vmatpush1.msra.mxu0 %v451
    %672 = vmatprep.subr.mxu0 %v449
    %673 = vmatpush1.msra.mxu0 %v448
    %674 = vmatprep.subr.mxu0 %v446
    %675 = vmatpush1.msra.mxu0 %v445
    %676 = vmatprep.subr.mxu0 %v443
    %677 = vmatpush1.msra.mxu0 %v442
    %678 = vmatprep.subr.mxu0 %v440
    %679 = vmatpush1.msra.mxu0 %v439
    %680 = vmatprep.subr.mxu0 %v437
    %681 = vmatpush1.msra.mxu0 %v436
    %682 = vmatprep.subr.mxu0 %v434
    %683 = vmatpush1.msra.mxu0 %v433
    %684 = vmatprep.subr.mxu0 %v431
    %685 = vmatpush1.msra.mxu0 %v430
    %686 = vmatprep.subr.mxu0 %v428
    %687 = vmatpush1.msra.mxu0 %v427
    %688 = vmatprep.subr.mxu0 0.0
    %689 = vmatpush2.msra.mxu0 0.0
    %690 = vmatprep.subr.mxu0 0.0
    %691 = vmatpush2.msra.mxu0 0.0
    %692 = vmatprep.subr.mxu0 0.0
    %693 = vmatpush2.msra.mxu0 0.0
    %694 = vmatprep.subr.mxu0 0.0
    %695 = vmatpush2.msra.mxu0 0.0
    %696 = vmatprep.subr.mxu0 0.0
    %697 = vmatpush2.msra.mxu0 0.0
    %698 = vmatprep.subr.mxu0 0.0
    %699 = vmatpush2.msra.mxu0 0.0
    %700 = vmatprep.subr.mxu0 0.0
    %701 = vmatpush2.msra.mxu0 0.0
    %702 = vmatprep.subr.mxu0 0.0
    %703 = vmatpush2.msra.mxu0 0.0
    %704 = vmatprep.subr.mxu0 0.0
    %705 = vmatpush2.msra.mxu0 0.0
    %706 = vmatprep.subr.mxu0 0.0
    %707 = vmatpush2.msra.mxu0 0.0
    %708 = vmatprep.subr.mxu0 0.0
    %709 = vmatpush2.msra.mxu0 0.0
    %710 = vmatprep.subr.mxu0 0.0
    %711 = vmatpush2.msra.mxu0 0.0
    %712 = vmatprep.subr.mxu0 0.0
    %713 = vmatpush2.msra.mxu0 0.0
    %714 = vmatprep.subr.mxu0 0.0
    %715 = vmatpush2.msra.mxu0 0.0
    %716 = vmatprep.subr.mxu0 0.0
    %717 = vmatpush2.msra.mxu0 0.0
    %718 = vmatprep.subr.mxu0 0.0
    %719 = vmatpush2.msra.mxu0 0.0
    %720 = vmatprep.mubr.f32.mxu0 0.0
    %721 = vmatmul.mubr.f32.gmra.mxu0 %v655
    %v722 = vpop.f32.mrf.mxu0
    %v723 = vadd.f32 %v482, %v722
    %v724 = vpop.f32.mrf.mxu0
    %v725 = vadd.f32 %v486, %v724
    %726 = vdwg.mxu0
    %727 = vmatprep.subr.mxu0 0.0
    %728 = vmatpush1.msra.mxu0 %v474
    %729 = vmatprep.subr.mxu0 0.0
    %730 = vmatpush1.msra.mxu0 %v471
    %731 = vmatprep.subr.mxu0 0.0
    %732 = vmatpush1.msra.mxu0 %v468
    %733 = vmatprep.subr.mxu0 0.0
    %734 = vmatpush1.msra.mxu0 %v465
    %735 = vmatprep.subr.mxu0 0.0
    %736 = vmatpush1.msra.mxu0 %v462
    %737 = vmatprep.subr.mxu0 0.0
    %738 = vmatpush1.msra.mxu0 %v459
    %739 = vmatprep.subr.mxu0 0.0
    %740 = vmatpush1.msra.mxu0 %v456
    %741 = vmatprep.subr.mxu0 0.0
    %742 = vmatpush1.msra.mxu0 %v453
    %743 = vmatprep.subr.mxu0 0.0
    %744 = vmatpush1.msra.mxu0 %v450
    %745 = vmatprep.subr.mxu0 0.0
    %746 = vmatpush1.msra.mxu0 %v447
    %747 = vmatprep.subr.mxu0 0.0
    %748 = vmatpush1.msra.mxu0 %v444
    %749 = vmatprep.subr.mxu0 0.0
    %750 = vmatpush1.msra.mxu0 %v441
    %751 = vmatprep.subr.mxu0 0.0
    %752 = vmatpush1.msra.mxu0 %v438
    %753 = vmatprep.subr.mxu0 0.0
    %754 = vmatpush1.msra.mxu0 %v435
    %755 = vmatprep.subr.mxu0 0.0
    %756 = vmatpush1.msra.mxu0 %v432
    %757 = vmatprep.subr.mxu0 0.0
    %758 = vmatpush1.msra.mxu0 %v429
    %759 = vmatprep.subr.mxu0 0.0
    %760 = vmatpush2.msra.mxu0 0.0
    %761 = vmatprep.subr.mxu0 0.0
    %762 = vmatpush2.msra.mxu0 0.0
    %763 = vmatprep.subr.mxu0 0.0
    %764 = vmatpush2.msra.mxu0 0.0
    %765 = vmatprep.subr.mxu0 0.0
    %766 = vmatpush2.msra.mxu0 0.0
    %767 = vmatprep.subr.mxu0 0.0
    %768 = vmatpush2.msra.mxu0 0.0
    %769 = vmatprep.subr.mxu0 0.0
    %770 = vmatpush2.msra.mxu0 0.0
    %771 = vmatprep.subr.mxu0 0.0
    %772 = vmatpush2.msra.mxu0 0.0
    %773 = vmatprep.subr.mxu0 0.0
    %774 = vmatpush2.msra.mxu0 0.0
    %775 = vmatprep.subr.mxu0 0.0
    %776 = vmatpush2.msra.mxu0 0.0
    %777 = vmatprep.subr.mxu0 0.0
    %778 = vmatpush2.msra.mxu0 0.0
    %779 = vmatprep.subr.mxu0 0.0
    %780 = vmatpush2.msra.mxu0 0.0
    %781 = vmatprep.subr.mxu0 0.0
    %782 = vmatpush2.msra.mxu0 0.0
    %783 = vmatprep.subr.mxu0 0.0
    %784 = vmatpush2.msra.mxu0 0.0
    %785 = vmatprep.subr.mxu0 0.0
    %786 = vmatpush2.msra.mxu0 0.0
    %787 = vmatprep.subr.mxu0 0.0
    %788 = vmatpush2.msra.mxu0 0.0
    %789 = vmatprep.subr.mxu0 0.0
    %790 = vmatpush2.msra.mxu0 0.0
    %791 = vmatprep.mubr.f32.mxu0 0.0
    %792 = vmatmul.mubr.f32.gmra.mxu0 %v655
    %v793 = vpop.f32.mrf.mxu0
    %v794 = vadd.f32 %v490, %v793
    %v795 = vpop.f32.mrf.mxu0
    %796 = vdwg.mxu0
    %v797 = vadd.f32 %v282, %v723
    %v798 = vxor.u32 %v797, 2147483648
    %v799 = vmul.f32 %v798, 1.442695
    %v800 = vpow.pop %v799
    %v801 = vadd.f32 %v800, 1.0
    %v802 = vrcp.pop %v801
    %v803 = vmul.f32 1.0, %v802
    %v804 = vadd.f32 %v284, %v725
    %v805 = vxor.u32 %v804, 2147483648
    %v806 = vmul.f32 %v805, 1.442695
    %v807 = vpow.pop %v806
    %v808 = vadd.f32 %v807, 1.0
    %v809 = vrcp.pop %v808
    %v810 = vmul.f32 1.0, %v809
    %v811 = vmul.f32 %v803, %v794
    %v812 = vadd.f32 %v394, %v811
    %v813 = vtanh.pop %v812
    %v814 = vsub.f32 1.0, %v810
    %v815 = vmul.f32 %v814, %v813
    %v816 = vmul.f32 %v810, %v655
    %v817 = vadd.f32 %v815, %v816
    %818 = vmatprep.subr.mxu0 %v473
    %819 = vmatpush1.msra.mxu0 %v472
    %820 = vmatprep.subr.mxu0 %v470
    %821 = vmatpush1.msra.mxu0 %v469
    %822 = vmatprep.subr.mxu0 %v467
    %823 = vmatpush1.msra.mxu0 %v466
    %824 = vmatprep.subr.mxu0 %v464
    %825 = vmatpush1.msra.mxu0 %v463
    %826 = vmatprep.subr.mxu0 %v461
    %827 = vmatpush1.msra.mxu0 %v460
    %828 = vmatprep.subr.mxu0 %v458
    %829 = vmatpush1.msra.mxu0 %v457
    %830 = vmatprep.subr.mxu0 %v455
    %831 = vmatpush1.msra.mxu0 %v454
    %832 = vmatprep.subr.mxu0 %v452
    %833 = vmatpush1.msra.mxu0 %v451
    %834 = vmatprep.subr.mxu0 %v449
    %835 = vmatpush1.msra.mxu0 %v448
    %836 = vmatprep.subr.mxu0 %v446
    %837 = vmatpush1.msra.mxu0 %v445
    %838 = vmatprep.subr.mxu0 %v443
    %839 = vmatpush1.msra.mxu0 %v442
    %840 = vmatprep.subr.mxu0 %v440
    %841 = vmatpush1.msra.mxu0 %v439
    %842 = vmatprep.subr.mxu0 %v437
    %843 = vmatpush1.msra.mxu0 %v436
    %844 = vmatprep.subr.mxu0 %v434
    %845 = vmatpush1.msra.mxu0 %v433
    %846 = vmatprep.subr.mxu0 %v431
    %847 = vmatpush1.msra.mxu0 %v430
    %848 = vmatprep.subr.mxu0 %v428
    %849 = vmatpush1.msra.mxu0 %v427
    %850 = vmatprep.subr.mxu0 0.0
    %851 = vmatpush2.msra.mxu0 0.0
    %852 = vmatprep.subr.mxu0 0.0
    %853 = vmatpush2.msra.mxu0 0.0
    %854 = vmatprep.subr.mxu0 0.0
    %855 = vmatpush2.msra.mxu0 0.0
    %856 = vmatprep.subr.mxu0 0.0
    %857 = vmatpush2.msra.mxu0 0.0
    %858 = vmatprep.subr.mxu0 0.0
    %859 = vmatpush2.msra.mxu0 0.0
    %860 = vmatprep.subr.mxu0 0.0
    %861 = vmatpush2.msra.mxu0 0.0
    %862 = vmatprep.subr.mxu0 0.0
    %863 = vmatpush2.msra.mxu0 0.0
    %864 = vmatprep.subr.mxu0 0.0
    %865 = vmatpush2.msra.mxu0 0.0
    %866 = vmatprep.subr.mxu0 0.0
    %867 = vmatpush2.msra.mxu0 0.0
    %868 = vmatprep.subr.mxu0 0.0
    %869 = vmatpush2.msra.mxu0 0.0
    %870 = vmatprep.subr.mxu0 0.0
    %871 = vmatpush2.msra.mxu0 0.0
    %872 = vmatprep.subr.mxu0 0.0
    %873 = vmatpush2.msra.mxu0 0.0
    %874 = vmatprep.subr.mxu0 0.0
    %875 = vmatpush2.msra.mxu0 0.0
    %876 = vmatprep.subr.mxu0 0.0
    %877 = vmatpush2.msra.mxu0 0.0
    %878 = vmatprep.subr.mxu0 0.0
    %879 = vmatpush2.msra.mxu0 0.0
    %880 = vmatprep.subr.mxu0 0.0
    %881 = vmatpush2.msra.mxu0 0.0
    %882 = vmatprep.mubr.f32.mxu0 0.0
    %883 = vmatmul.mubr.f32.gmra.mxu0 %v817
    %v884 = vpop.f32.mrf.mxu0
    %v885 = vadd.f32 %v482, %v884
    %v886 = vpop.f32.mrf.mxu0
    %v887 = vadd.f32 %v486, %v886
    %888 = vdwg.mxu0
    %889 = vmatprep.subr.mxu0 0.0
    %890 = vmatpush1.msra.mxu0 %v474
    %891 = vmatprep.subr.mxu0 0.0
    %892 = vmatpush1.msra.mxu0 %v471
    %893 = vmatprep.subr.mxu0 0.0
    %894 = vmatpush1.msra.mxu0 %v468
    %895 = vmatprep.subr.mxu0 0.0
    %896 = vmatpush1.msra.mxu0 %v465
    %897 = vmatprep.subr.mxu0 0.0
    %898 = vmatpush1.msra.mxu0 %v462
    %899 = vmatprep.subr.mxu0 0.0
    %900 = vmatpush1.msra.mxu0 %v459
    %901 = vmatprep.subr.mxu0 0.0
    %902 = vmatpush1.msra.mxu0 %v456
    %903 = vmatprep.subr.mxu0 0.0
    %904 = vmatpush1.msra.mxu0 %v453
    %905 = vmatprep.subr.mxu0 0.0
    %906 = vmatpush1.msra.mxu0 %v450
    %907 = vmatprep.subr.mxu0 0.0
    %908 = vmatpush1.msra.mxu0 %v447
    %909 = vmatprep.subr.mxu0 0.0
    %910 = vmatpush1.msra.mxu0 %v444
    %911 = vmatprep.subr.mxu0 0.0
    %912 = vmatpush1.msra.mxu0 %v441
    %913 = vmatprep.subr.mxu0 0.0
    %914 = vmatpush1.msra.mxu0 %v438
    %915 = vmatprep.subr.mxu0 0.0
    %916 = vmatpush1.msra.mxu0 %v435
    %917 = vmatprep.subr.mxu0 0.0
    %918 = vmatpush1.msra.mxu0 %v432
    %919 = vmatprep.subr.mxu0 0.0
    %920 = vmatpush1.msra.mxu0 %v429
    %921 = vmatprep.subr.mxu0 0.0
    %922 = vmatpush2.msra.mxu0 0.0
    %923 = vmatprep.subr.mxu0 0.0
    %924 = vmatpush2.msra.mxu0 0.0
    %925 = vmatprep.subr.mxu0 0.0
    %926 = vmatpush2.msra.mxu0 0.0
    %927 = vmatprep.subr.mxu0 0.0
    %928 = vmatpush2.msra.mxu0 0.0
    %929 = vmatprep.subr.mxu0 0.0
    %930 = vmatpush2.msra.mxu0 0.0
    %931 = vmatprep.subr.mxu0 0.0
    %932 = vmatpush2.msra.mxu0 0.0
    %933 = vmatprep.subr.mxu0 0.0
    %934 = vmatpush2.msra.mxu0 0.0
    %935 = vmatprep.subr.mxu0 0.0
    %936 = vmatpush2.msra.mxu0 0.0
    %937 = vmatprep.subr.mxu0 0.0
    %938 = vmatpush2.msra.mxu0 0.0
    %939 = vmatprep.subr.mxu0 0.0
    %940 = vmatpush2.msra.mxu0 0.0
    %941 = vmatprep.subr.mxu0 0.0
    %942 = vmatpush2.msra.mxu0 0.0
    %943 = vmatprep.subr.mxu0 0.0
    %944 = vmatpush2.msra.mxu0 0.0
    %945 = vmatprep.subr.mxu0 0.0
    %946 = vmatpush2.msra.mxu0 0.0
    %947 = vmatprep.subr.mxu0 0.0
    %948 = vmatpush2.msra.mxu0 0.0
    %949 = vmatprep.subr.mxu0 0.0
    %950 = vmatpush2.msra.mxu0 0.0
    %951 = vmatprep.subr.mxu0 0.0
    %952 = vmatpush2.msra.mxu0 0.0
    %953 = vmatprep.mubr.f32.mxu0 0.0
    %954 = vmatmul.mubr.f32.gmra.mxu0 %v817
    %v955 = vpop.f32.mrf.mxu0
    %v956 = vadd.f32 %v490, %v955
    %v957 = vpop.f32.mrf.mxu0
    %958 = vdwg.mxu0
    %v959 = vadd.f32 %v288, %v885
    %v960 = vxor.u32 %v959, 2147483648
    %v961 = vmul.f32 %v960, 1.442695
    %v962 = vpow.pop %v961
    %v963 = vadd.f32 %v962, 1.0
    %v964 = vrcp.pop %v963
    %v965 = vmul.f32 1.0, %v964
    %v966 = vadd.f32 %v290, %v887
    %v967 = vxor.u32 %v966, 2147483648
    %v968 = vmul.f32 %v967, 1.442695
    %v969 = vpow.pop %v968
    %v970 = vadd.f32 %v969, 1.0
    %v971 = vrcp.pop %v970
    %v972 = vmul.f32 1.0, %v971
    %v973 = vmul.f32 %v965, %v956
    %v974 = vadd.f32 %v399, %v973
    %v975 = vtanh.pop %v974
    %v976 = vsub.f32 1.0, %v972
    %v977 = vmul.f32 %v976, %v975
    %v978 = vmul.f32 %v972, %v817
    %v979 = vadd.f32 %v977, %v978
    %980 = vmatprep.subr.mxu0 %v473
    %981 = vmatpush1.msra.mxu0 %v472
    %982 = vmatprep.subr.mxu0 %v470
    %983 = vmatpush1.msra.mxu0 %v469
    %984 = vmatprep.subr.mxu0 %v467
    %985 = vmatpush1.msra.mxu0 %v466
    %986 = vmatprep.subr.mxu0 %v464
    %987 = vmatpush1.msra.mxu0 %v463
    %988 = vmatprep.subr.mxu0 %v461
    %989 = vmatpush1.msra.mxu0 %v460
    %990 = vmatprep.subr.mxu0 %v458
    %991 = vmatpush1.msra.mxu0 %v457
    %992 = vmatprep.subr.mxu0 %v455
    %993 = vmatpush1.msra.mxu0 %v454
    %994 = vmatprep.subr.mxu0 %v452
    %995 = vmatpush1.msra.mxu0 %v451
    %996 = vmatprep.subr.mxu0 %v449
    %997 = vmatpush1.msra.mxu0 %v448
    %998 = vmatprep.subr.mxu0 %v446
    %999 = vmatpush1.msra.mxu0 %v445
    %1000 = vmatprep.subr.mxu0 %v443
    %1001 = vmatpush1.msra.mxu0 %v442
    %1002 = vmatprep.subr.mxu0 %v440
    %1003 = vmatpush1.msra.mxu0 %v439
    %1004 = vmatprep.subr.mxu0 %v437
    %1005 = vmatpush1.msra.mxu0 %v436
    %1006 = vmatprep.subr.mxu0 %v434
    %1007 = vmatpush1.msra.mxu0 %v433
    %1008 = vmatprep.subr.mxu0 %v431
    %1009 = vmatpush1.msra.mxu0 %v430
    %1010 = vmatprep.subr.mxu0 %v428
    %1011 = vmatpush1.msra.mxu0 %v427
    %1012 = vmatprep.subr.mxu0 0.0
    %1013 = vmatpush2.msra.mxu0 0.0
    %1014 = vmatprep.subr.mxu0 0.0
    %1015 = vmatpush2.msra.mxu0 0.0
    %1016 = vmatprep.subr.mxu0 0.0
    %1017 = vmatpush2.msra.mxu0 0.0
    %1018 = vmatprep.subr.mxu0 0.0
    %1019 = vmatpush2.msra.mxu0 0.0
    %1020 = vmatprep.subr.mxu0 0.0
    %1021 = vmatpush2.msra.mxu0 0.0
    %1022 = vmatprep.subr.mxu0 0.0
    %1023 = vmatpush2.msra.mxu0 0.0
    %1024 = vmatprep.subr.mxu0 0.0
    %1025 = vmatpush2.msra.mxu0 0.0
    %1026 = vmatprep.subr.mxu0 0.0
    %1027 = vmatpush2.msra.mxu0 0.0
    %1028 = vmatprep.subr.mxu0 0.0
    %1029 = vmatpush2.msra.mxu0 0.0
    %1030 = vmatprep.subr.mxu0 0.0
    %1031 = vmatpush2.msra.mxu0 0.0
    %1032 = vmatprep.subr.mxu0 0.0
    %1033 = vmatpush2.msra.mxu0 0.0
    %1034 = vmatprep.subr.mxu0 0.0
    %1035 = vmatpush2.msra.mxu0 0.0
    %1036 = vmatprep.subr.mxu0 0.0
    %1037 = vmatpush2.msra.mxu0 0.0
    %1038 = vmatprep.subr.mxu0 0.0
    %1039 = vmatpush2.msra.mxu0 0.0
    %1040 = vmatprep.subr.mxu0 0.0
    %1041 = vmatpush2.msra.mxu0 0.0
    %1042 = vmatprep.subr.mxu0 0.0
    %1043 = vmatpush2.msra.mxu0 0.0
    %1044 = vmatprep.mubr.f32.mxu0 0.0
    %1045 = vmatmul.mubr.f32.gmra.mxu0 %v979
    %v1046 = vpop.f32.mrf.mxu0
    %v1047 = vadd.f32 %v482, %v1046
    %v1048 = vpop.f32.mrf.mxu0
    %v1049 = vadd.f32 %v486, %v1048
    %1050 = vdwg.mxu0
    %1051 = vmatprep.subr.mxu0 0.0
    %1052 = vmatpush1.msra.mxu0 %v474
    %1053 = vmatprep.subr.mxu0 0.0
    %1054 = vmatpush1.msra.mxu0 %v471
    %1055 = vmatprep.subr.mxu0 0.0
    %1056 = vmatpush1.msra.mxu0 %v468
    %1057 = vmatprep.subr.mxu0 0.0
    %1058 = vmatpush1.msra.mxu0 %v465
    %1059 = vmatprep.subr.mxu0 0.0
    %1060 = vmatpush1.msra.mxu0 %v462
    %1061 = vmatprep.subr.mxu0 0.0
    %1062 = vmatpush1.msra.mxu0 %v459
    %1063 = vmatprep.subr.mxu0 0.0
    %1064 = vmatpush1.msra.mxu0 %v456
    %1065 = vmatprep.subr.mxu0 0.0
    %1066 = vmatpush1.msra.mxu0 %v453
    %1067 = vmatprep.subr.mxu0 0.0
    %1068 = vmatpush1.msra.mxu0 %v450
    %1069 = vmatprep.subr.mxu0 0.0
    %1070 = vmatpush1.msra.mxu0 %v447
    %1071 = vmatprep.subr.mxu0 0.0
    %1072 = vmatpush1.msra.mxu0 %v444
    %1073 = vmatprep.subr.mxu0 0.0
    %1074 = vmatpush1.msra.mxu0 %v441
    %1075 = vmatprep.subr.mxu0 0.0
    %1076 = vmatpush1.msra.mxu0 %v438
    %1077 = vmatprep.subr.mxu0 0.0
    %1078 = vmatpush1.msra.mxu0 %v435
    %1079 = vmatprep.subr.mxu0 0.0
    %1080 = vmatpush1.msra.mxu0 %v432
    %1081 = vmatprep.subr.mxu0 0.0
    %1082 = vmatpush1.msra.mxu0 %v429
    %1083 = vmatprep.subr.mxu0 0.0
    %1084 = vmatpush2.msra.mxu0 0.0
    %1085 = vmatprep.subr.mxu0 0.0
    %1086 = vmatpush2.msra.mxu0 0.0
    %1087 = vmatprep.subr.mxu0 0.0
    %1088 = vmatpush2.msra.mxu0 0.0
    %1089 = vmatprep.subr.mxu0 0.0
    %1090 = vmatpush2.msra.mxu0 0.0
    %1091 = vmatprep.subr.mxu0 0.0
    %1092 = vmatpush2.msra.mxu0 0.0
    %1093 = vmatprep.subr.mxu0 0.0
    %1094 = vmatpush2.msra.mxu0 0.0
    %1095 = vmatprep.subr.mxu0 0.0
    %1096 = vmatpush2.msra.mxu0 0.0
    %1097 = vmatprep.subr.mxu0 0.0
    %1098 = vmatpush2.msra.mxu0 0.0
    %1099 = vmatprep.subr.mxu0 0.0
    %1100 = vmatpush2.msra.mxu0 0.0
    %1101 = vmatprep.subr.mxu0 0.0
    %1102 = vmatpush2.msra.mxu0 0.0
    %1103 = vmatprep.subr.mxu0 0.0
    %1104 = vmatpush2.msra.mxu0 0.0
    %1105 = vmatprep.subr.mxu0 0.0
    %1106 = vmatpush2.msra.mxu0 0.0
    %1107 = vmatprep.subr.mxu0 0.0
    %1108 = vmatpush2.msra.mxu0 0.0
    %1109 = vmatprep.subr.mxu0 0.0
    %1110 = vmatpush2.msra.mxu0 0.0
    %1111 = vmatprep.subr.mxu0 0.0
    %1112 = vmatpush2.msra.mxu0 0.0
    %1113 = vmatprep.subr.mxu0 0.0
    %1114 = vmatpush2.msra.mxu0 0.0
    %1115 = vmatprep.mubr.f32.mxu0 0.0
    %1116 = vmatmul.mubr.f32.gmra.mxu0 %v979
    %v1117 = vpop.f32.mrf.mxu0
    %v1118 = vadd.f32 %v490, %v1117
    %v1119 = vpop.f32.mrf.mxu0
    %1120 = vdwg.mxu0
    %v1121 = vadd.f32 %v294, %v1047
    %v1122 = vxor.u32 %v1121, 2147483648
    %v1123 = vmul.f32 %v1122, 1.442695
    %v1124 = vpow.pop %v1123
    %v1125 = vadd.f32 %v1124, 1.0
    %v1126 = vrcp.pop %v1125
    %v1127 = vmul.f32 1.0, %v1126
    %v1128 = vadd.f32 %v296, %v1049
    %v1129 = vxor.u32 %v1128, 2147483648
    %v1130 = vmul.f32 %v1129, 1.442695
    %v1131 = vpow.pop %v1130
    %v1132 = vadd.f32 %v1131, 1.0
    %v1133 = vrcp.pop %v1132
    %v1134 = vmul.f32 1.0, %v1133
    %v1135 = vmul.f32 %v1127, %v1118
    %v1136 = vadd.f32 %v404, %v1135
    %v1137 = vtanh.pop %v1136
    %v1138 = vsub.f32 1.0, %v1134
    %v1139 = vmul.f32 %v1138, %v1137
    %v1140 = vmul.f32 %v1134, %v979
    %v1141 = vadd.f32 %v1139, %v1140
    %1142 = vmatprep.subr.mxu0 %v473
    %1143 = vmatpush1.msra.mxu0 %v472
    %1144 = vmatprep.subr.mxu0 %v470
    %1145 = vmatpush1.msra.mxu0 %v469
    %1146 = vmatprep.subr.mxu0 %v467
    %1147 = vmatpush1.msra.mxu0 %v466
    %1148 = vmatprep.subr.mxu0 %v464
    %1149 = vmatpush1.msra.mxu0 %v463
    %1150 = vmatprep.subr.mxu0 %v461
    %1151 = vmatpush1.msra.mxu0 %v460
    %1152 = vmatprep.subr.mxu0 %v458
    %1153 = vmatpush1.msra.mxu0 %v457
    %1154 = vmatprep.subr.mxu0 %v455
    %1155 = vmatpush1.msra.mxu0 %v454
    %1156 = vmatprep.subr.mxu0 %v452
    %1157 = vmatpush1.msra.mxu0 %v451
    %1158 = vmatprep.subr.mxu0 %v449
    %1159 = vmatpush1.msra.mxu0 %v448
    %1160 = vmatprep.subr.mxu0 %v446
    %1161 = vmatpush1.msra.mxu0 %v445
    %1162 = vmatprep.subr.mxu0 %v443
    %1163 = vmatpush1.msra.mxu0 %v442
    %1164 = vmatprep.subr.mxu0 %v440
    %1165 = vmatpush1.msra.mxu0 %v439
    %1166 = vmatprep.subr.mxu0 %v437
    %1167 = vmatpush1.msra.mxu0 %v436
    %1168 = vmatprep.subr.mxu0 %v434
    %1169 = vmatpush1.msra.mxu0 %v433
    %1170 = vmatprep.subr.mxu0 %v431
    %1171 = vmatpush1.msra.mxu0 %v430
    %1172 = vmatprep.subr.mxu0 %v428
    %1173 = vmatpush1.msra.mxu0 %v427
    %1174 = vmatprep.subr.mxu0 0.0
    %1175 = vmatpush2.msra.mxu0 0.0
    %1176 = vmatprep.subr.mxu0 0.0
    %1177 = vmatpush2.msra.mxu0 0.0
    %1178 = vmatprep.subr.mxu0 0.0
    %1179 = vmatpush2.msra.mxu0 0.0
    %1180 = vmatprep.subr.mxu0 0.0
    %1181 = vmatpush2.msra.mxu0 0.0
    %1182 = vmatprep.subr.mxu0 0.0
    %1183 = vmatpush2.msra.mxu0 0.0
    %1184 = vmatprep.subr.mxu0 0.0
    %1185 = vmatpush2.msra.mxu0 0.0
    %1186 = vmatprep.subr.mxu0 0.0
    %1187 = vmatpush2.msra.mxu0 0.0
    %1188 = vmatprep.subr.mxu0 0.0
    %1189 = vmatpush2.msra.mxu0 0.0
    %1190 = vmatprep.subr.mxu0 0.0
    %1191 = vmatpush2.msra.mxu0 0.0
    %1192 = vmatprep.subr.mxu0 0.0
    %1193 = vmatpush2.msra.mxu0 0.0
    %1194 = vmatprep.subr.mxu0 0.0
    %1195 = vmatpush2.msra.mxu0 0.0
    %1196 = vmatprep.subr.mxu0 0.0
    %1197 = vmatpush2.msra.mxu0 0.0
    %1198 = vmatprep.subr.mxu0 0.0
    %1199 = vmatpush2.msra.mxu0 0.0
    %1200 = vmatprep.subr.mxu0 0.0
    %1201 = vmatpush2.msra.mxu0 0.0
    %1202 = vmatprep.subr.mxu0 0.0
    %1203 = vmatpush2.msra.mxu0 0.0
    %1204 = vmatprep.subr.mxu0 0.0
    %1205 = vmatpush2.msra.mxu0 0.0
    %1206 = vmatprep.mubr.f32.mxu0 0.0
    %1207 = vmatmul.mubr.f32.gmra.mxu0 %v1141
    %v1208 = vpop.f32.mrf.mxu0
    %v1209 = vadd.f32 %v482, %v1208
    %v1210 = vpop.f32.mrf.mxu0
    %v1211 = vadd.f32 %v486, %v1210
    %1212 = vdwg.mxu0
    %1213 = vmatprep.subr.mxu0 0.0
    %1214 = vmatpush1.msra.mxu0 %v474
    %1215 = vmatprep.subr.mxu0 0.0
    %1216 = vmatpush1.msra.mxu0 %v471
    %1217 = vmatprep.subr.mxu0 0.0
    %1218 = vmatpush1.msra.mxu0 %v468
    %1219 = vmatprep.subr.mxu0 0.0
    %1220 = vmatpush1.msra.mxu0 %v465
    %1221 = vmatprep.subr.mxu0 0.0
    %1222 = vmatpush1.msra.mxu0 %v462
    %1223 = vmatprep.subr.mxu0 0.0
    %1224 = vmatpush1.msra.mxu0 %v459
    %1225 = vmatprep.subr.mxu0 0.0
    %1226 = vmatpush1.msra.mxu0 %v456
    %1227 = vmatprep.subr.mxu0 0.0
    %1228 = vmatpush1.msra.mxu0 %v453
    %1229 = vmatprep.subr.mxu0 0.0
    %1230 = vmatpush1.msra.mxu0 %v450
    %1231 = vmatprep.subr.mxu0 0.0
    %1232 = vmatpush1.msra.mxu0 %v447
    %1233 = vmatprep.subr.mxu0 0.0
    %1234 = vmatpush1.msra.mxu0 %v444
    %1235 = vmatprep.subr.mxu0 0.0
    %1236 = vmatpush1.msra.mxu0 %v441
    %1237 = vmatprep.subr.mxu0 0.0
    %1238 = vmatpush1.msra.mxu0 %v438
    %1239 = vmatprep.subr.mxu0 0.0
    %1240 = vmatpush1.msra.mxu0 %v435
    %1241 = vmatprep.subr.mxu0 0.0
    %1242 = vmatpush1.msra.mxu0 %v432
    %1243 = vmatprep.subr.mxu0 0.0
    %1244 = vmatpush1.msra.mxu0 %v429
    %1245 = vmatprep.subr.mxu0 0.0
    %1246 = vmatpush2.msra.mxu0 0.0
    %1247 = vmatprep.subr.mxu0 0.0
    %1248 = vmatpush2.msra.mxu0 0.0
    %1249 = vmatprep.subr.mxu0 0.0
    %1250 = vmatpush2.msra.mxu0 0.0
    %1251 = vmatprep.subr.mxu0 0.0
    %1252 = vmatpush2.msra.mxu0 0.0
    %1253 = vmatprep.subr.mxu0 0.0
    %1254 = vmatpush2.msra.mxu0 0.0
    %1255 = vmatprep.subr.mxu0 0.0
    %1256 = vmatpush2.msra.mxu0 0.0
    %1257 = vmatprep.subr.mxu0 0.0
    %1258 = vmatpush2.msra.mxu0 0.0
    %1259 = vmatprep.subr.mxu0 0.0
    %1260 = vmatpush2.msra.mxu0 0.0
    %1261 = vmatprep.subr.mxu0 0.0
    %1262 = vmatpush2.msra.mxu0 0.0
    %1263 = vmatprep.subr.mxu0 0.0
    %1264 = vmatpush2.msra.mxu0 0.0
    %1265 = vmatprep.subr.mxu0 0.0
    %1266 = vmatpush2.msra.mxu0 0.0
    %1267 = vmatprep.subr.mxu0 0.0
    %1268 = vmatpush2.msra.mxu0 0.0
    %1269 = vmatprep.subr.mxu0 0.0
    %1270 = vmatpush2.msra.mxu0 0.0
    %1271 = vmatprep.subr.mxu0 0.0
    %1272 = vmatpush2.msra.mxu0 0.0
    %1273 = vmatprep.subr.mxu0 0.0
    %1274 = vmatpush2.msra.mxu0 0.0
    %1275 = vmatprep.subr.mxu0 0.0
    %1276 = vmatpush2.msra.mxu0 0.0
    %1277 = vmatprep.mubr.f32.mxu0 0.0
    %1278 = vmatmul.mubr.f32.gmra.mxu0 %v1141
    %v1279 = vpop.f32.mrf.mxu0
    %v1280 = vadd.f32 %v490, %v1279
    %v1281 = vpop.f32.mrf.mxu0
    %1282 = vdwg.mxu0
    %v1283 = vadd.f32 %v300, %v1209
    %v1284 = vxor.u32 %v1283, 2147483648
    %v1285 = vmul.f32 %v1284, 1.442695
    %v1286 = vpow.pop %v1285
    %v1287 = vadd.f32 %v1286, 1.0
    %v1288 = vrcp.pop %v1287
    %v1289 = vmul.f32 1.0, %v1288
    %v1290 = vadd.f32 %v302, %v1211
    %v1291 = vxor.u32 %v1290, 2147483648
    %v1292 = vmul.f32 %v1291, 1.442695
    %v1293 = vpow.pop %v1292
    %v1294 = vadd.f32 %v1293, 1.0
    %v1295 = vrcp.pop %v1294
    %v1296 = vmul.f32 1.0, %v1295
    %v1297 = vmul.f32 %v1289, %v1280
    %v1298 = vadd.f32 %v409, %v1297
    %v1299 = vtanh.pop %v1298
    %v1300 = vsub.f32 1.0, %v1296
    %v1301 = vmul.f32 %v1300, %v1299
    %v1302 = vmul.f32 %v1296, %v1141
    %v1303 = vadd.f32 %v1301, %v1302
    %1304 = vmatprep.subr.mxu0 %v473
    %1305 = vmatpush1.msra.mxu0 %v472
    %1306 = vmatprep.subr.mxu0 %v470
    %1307 = vmatpush1.msra.mxu0 %v469
    %1308 = vmatprep.subr.mxu0 %v467
    %1309 = vmatpush1.msra.mxu0 %v466
    %1310 = vmatprep.subr.mxu0 %v464
    %1311 = vmatpush1.msra.mxu0 %v463
    %1312 = vmatprep.subr.mxu0 %v461
    %1313 = vmatpush1.msra.mxu0 %v460
    %1314 = vmatprep.subr.mxu0 %v458
    %1315 = vmatpush1.msra.mxu0 %v457
    %1316 = vmatprep.subr.mxu0 %v455
    %1317 = vmatpush1.msra.mxu0 %v454
    %1318 = vmatprep.subr.mxu0 %v452
    %1319 = vmatpush1.msra.mxu0 %v451
    %1320 = vmatprep.subr.mxu0 %v449
    %1321 = vmatpush1.msra.mxu0 %v448
    %1322 = vmatprep.subr.mxu0 %v446
    %1323 = vmatpush1.msra.mxu0 %v445
    %1324 = vmatprep.subr.mxu0 %v443
    %1325 = vmatpush1.msra.mxu0 %v442
    %1326 = vmatprep.subr.mxu0 %v440
    %1327 = vmatpush1.msra.mxu0 %v439
    %1328 = vmatprep.subr.mxu0 %v437
    %1329 = vmatpush1.msra.mxu0 %v436
    %1330 = vmatprep.subr.mxu0 %v434
    %1331 = vmatpush1.msra.mxu0 %v433
    %1332 = vmatprep.subr.mxu0 %v431
    %1333 = vmatpush1.msra.mxu0 %v430
    %1334 = vmatprep.subr.mxu0 %v428
    %1335 = vmatpush1.msra.mxu0 %v427
    %1336 = vmatprep.subr.mxu0 0.0
    %1337 = vmatpush2.msra.mxu0 0.0
    %1338 = vmatprep.subr.mxu0 0.0
    %1339 = vmatpush2.msra.mxu0 0.0
    %1340 = vmatprep.subr.mxu0 0.0
    %1341 = vmatpush2.msra.mxu0 0.0
    %1342 = vmatprep.subr.mxu0 0.0
    %1343 = vmatpush2.msra.mxu0 0.0
    %1344 = vmatprep.subr.mxu0 0.0
    %1345 = vmatpush2.msra.mxu0 0.0
    %1346 = vmatprep.subr.mxu0 0.0
    %1347 = vmatpush2.msra.mxu0 0.0
    %1348 = vmatprep.subr.mxu0 0.0
    %1349 = vmatpush2.msra.mxu0 0.0
    %1350 = vmatprep.subr.mxu0 0.0
    %1351 = vmatpush2.msra.mxu0 0.0
    %1352 = vmatprep.subr.mxu0 0.0
    %1353 = vmatpush2.msra.mxu0 0.0
    %1354 = vmatprep.subr.mxu0 0.0
    %1355 = vmatpush2.msra.mxu0 0.0
    %1356 = vmatprep.subr.mxu0 0.0
    %1357 = vmatpush2.msra.mxu0 0.0
    %1358 = vmatprep.subr.mxu0 0.0
    %1359 = vmatpush2.msra.mxu0 0.0
    %1360 = vmatprep.subr.mxu0 0.0
    %1361 = vmatpush2.msra.mxu0 0.0
    %1362 = vmatprep.subr.mxu0 0.0
    %1363 = vmatpush2.msra.mxu0 0.0
    %1364 = vmatprep.subr.mxu0 0.0
    %1365 = vmatpush2.msra.mxu0 0.0
    %1366 = vmatprep.subr.mxu0 0.0
    %1367 = vmatpush2.msra.mxu0 0.0
    %1368 = vmatprep.mubr.f32.mxu0 0.0
    %1369 = vmatmul.mubr.f32.gmra.mxu0 %v1303
    %v1370 = vpop.f32.mrf.mxu0
    %v1371 = vadd.f32 %v482, %v1370
    %v1372 = vpop.f32.mrf.mxu0
    %v1373 = vadd.f32 %v486, %v1372
    %1374 = vdwg.mxu0
    %1375 = vmatprep.subr.mxu0 0.0
    %1376 = vmatpush1.msra.mxu0 %v474
    %1377 = vmatprep.subr.mxu0 0.0
    %1378 = vmatpush1.msra.mxu0 %v471
    %1379 = vmatprep.subr.mxu0 0.0
    %1380 = vmatpush1.msra.mxu0 %v468
    %1381 = vmatprep.subr.mxu0 0.0
    %1382 = vmatpush1.msra.mxu0 %v465
    %1383 = vmatprep.subr.mxu0 0.0
    %1384 = vmatpush1.msra.mxu0 %v462
    %1385 = vmatprep.subr.mxu0 0.0
    %1386 = vmatpush1.msra.mxu0 %v459
    %1387 = vmatprep.subr.mxu0 0.0
    %1388 = vmatpush1.msra.mxu0 %v456
    %1389 = vmatprep.subr.mxu0 0.0
    %1390 = vmatpush1.msra.mxu0 %v453
    %1391 = vmatprep.subr.mxu0 0.0
    %1392 = vmatpush1.msra.mxu0 %v450
    %1393 = vmatprep.subr.mxu0 0.0
    %1394 = vmatpush1.msra.mxu0 %v447
    %1395 = vmatprep.subr.mxu0 0.0
    %1396 = vmatpush1.msra.mxu0 %v444
    %1397 = vmatprep.subr.mxu0 0.0
    %1398 = vmatpush1.msra.mxu0 %v441
    %1399 = vmatprep.subr.mxu0 0.0
    %1400 = vmatpush1.msra.mxu0 %v438
    %1401 = vmatprep.subr.mxu0 0.0
    %1402 = vmatpush1.msra.mxu0 %v435
    %1403 = vmatprep.subr.mxu0 0.0
    %1404 = vmatpush1.msra.mxu0 %v432
    %1405 = vmatprep.subr.mxu0 0.0
    %1406 = vmatpush1.msra.mxu0 %v429
    %1407 = vmatprep.subr.mxu0 0.0
    %1408 = vmatpush2.msra.mxu0 0.0
    %1409 = vmatprep.subr.mxu0 0.0
    %1410 = vmatpush2.msra.mxu0 0.0
    %1411 = vmatprep.subr.mxu0 0.0
    %1412 = vmatpush2.msra.mxu0 0.0
    %1413 = vmatprep.subr.mxu0 0.0
    %1414 = vmatpush2.msra.mxu0 0.0
    %1415 = vmatprep.subr.mxu0 0.0
    %1416 = vmatpush2.msra.mxu0 0.0
    %1417 = vmatprep.subr.mxu0 0.0
    %1418 = vmatpush2.msra.mxu0 0.0
    %1419 = vmatprep.subr.mxu0 0.0
    %1420 = vmatpush2.msra.mxu0 0.0
    %1421 = vmatprep.subr.mxu0 0.0
    %1422 = vmatpush2.msra.mxu0 0.0
    %1423 = vmatprep.subr.mxu0 0.0
    %1424 = vmatpush2.msra.mxu0 0.0
    %1425 = vmatprep.subr.mxu0 0.0
    %1426 = vmatpush2.msra.mxu0 0.0
    %1427 = vmatprep.subr.mxu0 0.0
    %1428 = vmatpush2.msra.mxu0 0.0
    %1429 = vmatprep.subr.mxu0 0.0
    %1430 = vmatpush2.msra.mxu0 0.0
    %1431 = vmatprep.subr.mxu0 0.0
    %1432 = vmatpush2.msra.mxu0 0.0
    %1433 = vmatprep.subr.mxu0 0.0
    %1434 = vmatpush2.msra.mxu0 0.0
    %1435 = vmatprep.subr.mxu0 0.0
    %1436 = vmatpush2.msra.mxu0 0.0
    %1437 = vmatprep.subr.mxu0 0.0
    %1438 = vmatpush2.msra.mxu0 0.0
    %1439 = vmatprep.mubr.f32.mxu0 0.0
    %1440 = vmatmul.mubr.f32.gmra.mxu0 %v1303
    %v1441 = vpop.f32.mrf.mxu0
    %v1442 = vadd.f32 %v490, %v1441
    %v1443 = vpop.f32.mrf.mxu0
    %1444 = vdwg.mxu0
    %v1445 = vadd.f32 %v306, %v1371
    %v1446 = vxor.u32 %v1445, 2147483648
    %v1447 = vmul.f32 %v1446, 1.442695
    %v1448 = vpow.pop %v1447
    %v1449 = vadd.f32 %v1448, 1.0
    %v1450 = vrcp.pop %v1449
    %v1451 = vmul.f32 1.0, %v1450
    %v1452 = vadd.f32 %v308, %v1373
    %v1453 = vxor.u32 %v1452, 2147483648
    %v1454 = vmul.f32 %v1453, 1.442695
    %v1455 = vpow.pop %v1454
    %v1456 = vadd.f32 %v1455, 1.0
    %v1457 = vrcp.pop %v1456
    %v1458 = vmul.f32 1.0, %v1457
    %v1459 = vmul.f32 %v1451, %v1442
    %v1460 = vadd.f32 %v414, %v1459
    %v1461 = vtanh.pop %v1460
    %v1462 = vsub.f32 1.0, %v1458
    %v1463 = vmul.f32 %v1462, %v1461
    %v1464 = vmul.f32 %v1458, %v1303
    %v1465 = vadd.f32 %v1463, %v1464
    %1466 = vmatprep.subr.mxu0 %v473
    %1467 = vmatpush1.msra.mxu0 %v472
    %1468 = vmatprep.subr.mxu0 %v470
    %1469 = vmatpush1.msra.mxu0 %v469
    %1470 = vmatprep.subr.mxu0 %v467
    %1471 = vmatpush1.msra.mxu0 %v466
    %1472 = vmatprep.subr.mxu0 %v464
    %1473 = vmatpush1.msra.mxu0 %v463
    %1474 = vmatprep.subr.mxu0 %v461
    %1475 = vmatpush1.msra.mxu0 %v460
    %1476 = vmatprep.subr.mxu0 %v458
    %1477 = vmatpush1.msra.mxu0 %v457
    %1478 = vmatprep.subr.mxu0 %v455
    %1479 = vmatpush1.msra.mxu0 %v454
    %1480 = vmatprep.subr.mxu0 %v452
    %1481 = vmatpush1.msra.mxu0 %v451
    %1482 = vmatprep.subr.mxu0 %v449
    %1483 = vmatpush1.msra.mxu0 %v448
    %1484 = vmatprep.subr.mxu0 %v446
    %1485 = vmatpush1.msra.mxu0 %v445
    %1486 = vmatprep.subr.mxu0 %v443
    %1487 = vmatpush1.msra.mxu0 %v442
    %1488 = vmatprep.subr.mxu0 %v440
    %1489 = vmatpush1.msra.mxu0 %v439
    %1490 = vmatprep.subr.mxu0 %v437
    %1491 = vmatpush1.msra.mxu0 %v436
    %1492 = vmatprep.subr.mxu0 %v434
    %1493 = vmatpush1.msra.mxu0 %v433
    %1494 = vmatprep.subr.mxu0 %v431
    %1495 = vmatpush1.msra.mxu0 %v430
    %1496 = vmatprep.subr.mxu0 %v428
    %1497 = vmatpush1.msra.mxu0 %v427
    %1498 = vmatprep.subr.mxu0 0.0
    %1499 = vmatpush2.msra.mxu0 0.0
    %1500 = vmatprep.subr.mxu0 0.0
    %1501 = vmatpush2.msra.mxu0 0.0
    %1502 = vmatprep.subr.mxu0 0.0
    %1503 = vmatpush2.msra.mxu0 0.0
    %1504 = vmatprep.subr.mxu0 0.0
    %1505 = vmatpush2.msra.mxu0 0.0
    %1506 = vmatprep.subr.mxu0 0.0
    %1507 = vmatpush2.msra.mxu0 0.0
    %1508 = vmatprep.subr.mxu0 0.0
    %1509 = vmatpush2.msra.mxu0 0.0
    %1510 = vmatprep.subr.mxu0 0.0
    %1511 = vmatpush2.msra.mxu0 0.0
    %1512 = vmatprep.subr.mxu0 0.0
    %1513 = vmatpush2.msra.mxu0 0.0
    %1514 = vmatprep.subr.mxu0 0.0
    %1515 = vmatpush2.msra.mxu0 0.0
    %1516 = vmatprep.subr.mxu0 0.0
    %1517 = vmatpush2.msra.mxu0 0.0
    %1518 = vmatprep.subr.mxu0 0.0
    %1519 = vmatpush2.msra.mxu0 0.0
    %1520 = vmatprep.subr.mxu0 0.0
    %1521 = vmatpush2.msra.mxu0 0.0
    %1522 = vmatprep.subr.mxu0 0.0
    %1523 = vmatpush2.msra.mxu0 0.0
    %1524 = vmatprep.subr.mxu0 0.0
    %1525 = vmatpush2.msra.mxu0 0.0
    %1526 = vmatprep.subr.mxu0 0.0
    %1527 = vmatpush2.msra.mxu0 0.0
    %1528 = vmatprep.subr.mxu0 0.0
    %1529 = vmatpush2.msra.mxu0 0.0
    %1530 = vmatprep.mubr.f32.mxu0 0.0
    %1531 = vmatmul.mubr.f32.gmra.mxu0 %v1465
    %v1532 = vpop.f32.mrf.mxu0
    %v1533 = vadd.f32 %v482, %v1532
    %v1534 = vpop.f32.mrf.mxu0
    %v1535 = vadd.f32 %v486, %v1534
    %1536 = vdwg.mxu0
    %1537 = vmatprep.subr.mxu0 0.0
    %1538 = vmatpush1.msra.mxu0 %v474
    %1539 = vmatprep.subr.mxu0 0.0
    %1540 = vmatpush1.msra.mxu0 %v471
    %1541 = vmatprep.subr.mxu0 0.0
    %1542 = vmatpush1.msra.mxu0 %v468
    %1543 = vmatprep.subr.mxu0 0.0
    %1544 = vmatpush1.msra.mxu0 %v465
    %1545 = vmatprep.subr.mxu0 0.0
    %1546 = vmatpush1.msra.mxu0 %v462
    %1547 = vmatprep.subr.mxu0 0.0
    %1548 = vmatpush1.msra.mxu0 %v459
    %1549 = vmatprep.subr.mxu0 0.0
    %1550 = vmatpush1.msra.mxu0 %v456
    %1551 = vmatprep.subr.mxu0 0.0
    %1552 = vmatpush1.msra.mxu0 %v453
    %1553 = vmatprep.subr.mxu0 0.0
    %1554 = vmatpush1.msra.mxu0 %v450
    %1555 = vmatprep.subr.mxu0 0.0
    %1556 = vmatpush1.msra.mxu0 %v447
    %1557 = vmatprep.subr.mxu0 0.0
    %1558 = vmatpush1.msra.mxu0 %v444
    %1559 = vmatprep.subr.mxu0 0.0
    %1560 = vmatpush1.msra.mxu0 %v441
    %1561 = vmatprep.subr.mxu0 0.0
    %1562 = vmatpush1.msra.mxu0 %v438
    %1563 = vmatprep.subr.mxu0 0.0
    %1564 = vmatpush1.msra.mxu0 %v435
    %1565 = vmatprep.subr.mxu0 0.0
    %1566 = vmatpush1.msra.mxu0 %v432
    %1567 = vmatprep.subr.mxu0 0.0
    %1568 = vmatpush1.msra.mxu0 %v429
    %1569 = vmatprep.subr.mxu0 0.0
    %1570 = vmatpush2.msra.mxu0 0.0
    %1571 = vmatprep.subr.mxu0 0.0
    %1572 = vmatpush2.msra.mxu0 0.0
    %1573 = vmatprep.subr.mxu0 0.0
    %1574 = vmatpush2.msra.mxu0 0.0
    %1575 = vmatprep.subr.mxu0 0.0
    %1576 = vmatpush2.msra.mxu0 0.0
    %1577 = vmatprep.subr.mxu0 0.0
    %1578 = vmatpush2.msra.mxu0 0.0
    %1579 = vmatprep.subr.mxu0 0.0
    %1580 = vmatpush2.msra.mxu0 0.0
    %1581 = vmatprep.subr.mxu0 0.0
    %1582 = vmatpush2.msra.mxu0 0.0
    %1583 = vmatprep.subr.mxu0 0.0
    %1584 = vmatpush2.msra.mxu0 0.0
    %1585 = vmatprep.subr.mxu0 0.0
    %1586 = vmatpush2.msra.mxu0 0.0
    %1587 = vmatprep.subr.mxu0 0.0
    %1588 = vmatpush2.msra.mxu0 0.0
    %1589 = vmatprep.subr.mxu0 0.0
    %1590 = vmatpush2.msra.mxu0 0.0
    %1591 = vmatprep.subr.mxu0 0.0
    %1592 = vmatpush2.msra.mxu0 0.0
    %1593 = vmatprep.subr.mxu0 0.0
    %1594 = vmatpush2.msra.mxu0 0.0
    %1595 = vmatprep.subr.mxu0 0.0
    %1596 = vmatpush2.msra.mxu0 0.0
    %1597 = vmatprep.subr.mxu0 0.0
    %1598 = vmatpush2.msra.mxu0 0.0
    %1599 = vmatprep.subr.mxu0 0.0
    %1600 = vmatpush2.msra.mxu0 0.0
    %1601 = vmatprep.mubr.f32.mxu0 0.0
    %1602 = vmatmul.mubr.f32.gmra.mxu0 %v1465
    %v1603 = vpop.f32.mrf.mxu0
    %v1604 = vadd.f32 %v490, %v1603
    %v1605 = vpop.f32.mrf.mxu0
    %1606 = vdwg.mxu0
    %v1607 = vadd.f32 %v312, %v1533
    %v1608 = vxor.u32 %v1607, 2147483648
    %v1609 = vmul.f32 %v1608, 1.442695
    %v1610 = vpow.pop %v1609
    %v1611 = vadd.f32 %v1610, 1.0
    %v1612 = vrcp.pop %v1611
    %v1613 = vmul.f32 1.0, %v1612
    %v1614 = vadd.f32 %v314, %v1535
    %v1615 = vxor.u32 %v1614, 2147483648
    %v1616 = vmul.f32 %v1615, 1.442695
    %v1617 = vpow.pop %v1616
    %v1618 = vadd.f32 %v1617, 1.0
    %v1619 = vrcp.pop %v1618
    %v1620 = vmul.f32 1.0, %v1619
    %v1621 = vmul.f32 %v1613, %v1604
    %v1622 = vadd.f32 %v419, %v1621
    %v1623 = vtanh.pop %v1622
    %v1624 = vsub.f32 1.0, %v1620
    %v1625 = vmul.f32 %v1624, %v1623
    %v1626 = vmul.f32 %v1620, %v1465
    %v1627 = vadd.f32 %v1625, %v1626
    %1628 = vmatprep.subr.mxu0 %v473
    %1629 = vmatpush1.msra.mxu0 %v472
    %1630 = vmatprep.subr.mxu0 %v470
    %1631 = vmatpush1.msra.mxu0 %v469
    %1632 = vmatprep.subr.mxu0 %v467
    %1633 = vmatpush1.msra.mxu0 %v466
    %1634 = vmatprep.subr.mxu0 %v464
    %1635 = vmatpush1.msra.mxu0 %v463
    %1636 = vmatprep.subr.mxu0 %v461
    %1637 = vmatpush1.msra.mxu0 %v460
    %1638 = vmatprep.subr.mxu0 %v458
    %1639 = vmatpush1.msra.mxu0 %v457
    %1640 = vmatprep.subr.mxu0 %v455
    %1641 = vmatpush1.msra.mxu0 %v454
    %1642 = vmatprep.subr.mxu0 %v452
    %1643 = vmatpush1.msra.mxu0 %v451
    %1644 = vmatprep.subr.mxu0 %v449
    %1645 = vmatpush1.msra.mxu0 %v448
    %1646 = vmatprep.subr.mxu0 %v446
    %1647 = vmatpush1.msra.mxu0 %v445
    %1648 = vmatprep.subr.mxu0 %v443
    %1649 = vmatpush1.msra.mxu0 %v442
    %1650 = vmatprep.subr.mxu0 %v440
    %1651 = vmatpush1.msra.mxu0 %v439
    %1652 = vmatprep.subr.mxu0 %v437
    %1653 = vmatpush1.msra.mxu0 %v436
    %1654 = vmatprep.subr.mxu0 %v434
    %1655 = vmatpush1.msra.mxu0 %v433
    %1656 = vmatprep.subr.mxu0 %v431
    %1657 = vmatpush1.msra.mxu0 %v430
    %1658 = vmatprep.subr.mxu0 %v428
    %1659 = vmatpush1.msra.mxu0 %v427
    %1660 = vmatprep.subr.mxu0 0.0
    %1661 = vmatpush2.msra.mxu0 0.0
    %1662 = vmatprep.subr.mxu0 0.0
    %1663 = vmatpush2.msra.mxu0 0.0
    %1664 = vmatprep.subr.mxu0 0.0
    %1665 = vmatpush2.msra.mxu0 0.0
    %1666 = vmatprep.subr.mxu0 0.0
    %1667 = vmatpush2.msra.mxu0 0.0
    %1668 = vmatprep.subr.mxu0 0.0
    %1669 = vmatpush2.msra.mxu0 0.0
    %1670 = vmatprep.subr.mxu0 0.0
    %1671 = vmatpush2.msra.mxu0 0.0
    %1672 = vmatprep.subr.mxu0 0.0
    %1673 = vmatpush2.msra.mxu0 0.0
    %1674 = vmatprep.subr.mxu0 0.0
    %1675 = vmatpush2.msra.mxu0 0.0
    %1676 = vmatprep.subr.mxu0 0.0
    %1677 = vmatpush2.msra.mxu0 0.0
    %1678 = vmatprep.subr.mxu0 0.0
    %1679 = vmatpush2.msra.mxu0 0.0
    %1680 = vmatprep.subr.mxu0 0.0
    %1681 = vmatpush2.msra.mxu0 0.0
    %1682 = vmatprep.subr.mxu0 0.0
    %1683 = vmatpush2.msra.mxu0 0.0
    %1684 = vmatprep.subr.mxu0 0.0
    %1685 = vmatpush2.msra.mxu0 0.0
    %1686 = vmatprep.subr.mxu0 0.0
    %1687 = vmatpush2.msra.mxu0 0.0
    %1688 = vmatprep.subr.mxu0 0.0
    %1689 = vmatpush2.msra.mxu0 0.0
    %1690 = vmatprep.subr.mxu0 0.0
    %1691 = vmatpush2.msra.mxu0 0.0
    %1692 = vmatprep.mubr.f32.mxu0 0.0
    %1693 = vmatmul.mubr.f32.gmra.mxu0 %v1627
    %v1694 = vpop.f32.mrf.mxu0
    %v1695 = vadd.f32 %v482, %v1694
    %v1696 = vpop.f32.mrf.mxu0
    %v1697 = vadd.f32 %v486, %v1696
    %1698 = vdwg.mxu0
    %1699 = vmatprep.subr.mxu0 0.0
    %1700 = vmatpush1.msra.mxu0 %v474
    %1701 = vmatprep.subr.mxu0 0.0
    %1702 = vmatpush1.msra.mxu0 %v471
    %1703 = vmatprep.subr.mxu0 0.0
    %1704 = vmatpush1.msra.mxu0 %v468
    %1705 = vmatprep.subr.mxu0 0.0
    %1706 = vmatpush1.msra.mxu0 %v465
    %1707 = vmatprep.subr.mxu0 0.0
    %1708 = vmatpush1.msra.mxu0 %v462
    %1709 = vmatprep.subr.mxu0 0.0
    %1710 = vmatpush1.msra.mxu0 %v459
    %1711 = vmatprep.subr.mxu0 0.0
    %1712 = vmatpush1.msra.mxu0 %v456
    %1713 = vmatprep.subr.mxu0 0.0
    %1714 = vmatpush1.msra.mxu0 %v453
    %1715 = vmatprep.subr.mxu0 0.0
    %1716 = vmatpush1.msra.mxu0 %v450
    %1717 = vmatprep.subr.mxu0 0.0
    %1718 = vmatpush1.msra.mxu0 %v447
    %1719 = vmatprep.subr.mxu0 0.0
    %1720 = vmatpush1.msra.mxu0 %v444
    %1721 = vmatprep.subr.mxu0 0.0
    %1722 = vmatpush1.msra.mxu0 %v441
    %1723 = vmatprep.subr.mxu0 0.0
    %1724 = vmatpush1.msra.mxu0 %v438
    %1725 = vmatprep.subr.mxu0 0.0
    %1726 = vmatpush1.msra.mxu0 %v435
    %1727 = vmatprep.subr.mxu0 0.0
    %1728 = vmatpush1.msra.mxu0 %v432
    %1729 = vmatprep.subr.mxu0 0.0
    %1730 = vmatpush1.msra.mxu0 %v429
    %1731 = vmatprep.subr.mxu0 0.0
    %1732 = vmatpush2.msra.mxu0 0.0
    %1733 = vmatprep.subr.mxu0 0.0
    %1734 = vmatpush2.msra.mxu0 0.0
    %1735 = vmatprep.subr.mxu0 0.0
    %1736 = vmatpush2.msra.mxu0 0.0
    %1737 = vmatprep.subr.mxu0 0.0
    %1738 = vmatpush2.msra.mxu0 0.0
    %1739 = vmatprep.subr.mxu0 0.0
    %1740 = vmatpush2.msra.mxu0 0.0
    %1741 = vmatprep.subr.mxu0 0.0
    %1742 = vmatpush2.msra.mxu0 0.0
    %1743 = vmatprep.subr.mxu0 0.0
    %1744 = vmatpush2.msra.mxu0 0.0
    %1745 = vmatprep.subr.mxu0 0.0
    %1746 = vmatpush2.msra.mxu0 0.0
    %1747 = vmatprep.subr.mxu0 0.0
    %1748 = vmatpush2.msra.mxu0 0.0
    %1749 = vmatprep.subr.mxu0 0.0
    %1750 = vmatpush2.msra.mxu0 0.0
    %1751 = vmatprep.subr.mxu0 0.0
    %1752 = vmatpush2.msra.mxu0 0.0
    %1753 = vmatprep.subr.mxu0 0.0
    %1754 = vmatpush2.msra.mxu0 0.0
    %1755 = vmatprep.subr.mxu0 0.0
    %1756 = vmatpush2.msra.mxu0 0.0
    %1757 = vmatprep.subr.mxu0 0.0
    %1758 = vmatpush2.msra.mxu0 0.0
    %1759 = vmatprep.subr.mxu0 0.0
    %1760 = vmatpush2.msra.mxu0 0.0
    %1761 = vmatprep.subr.mxu0 0.0
    %1762 = vmatpush2.msra.mxu0 0.0
    %1763 = vmatprep.mubr.f32.mxu0 0.0
    %1764 = vmatmul.mubr.f32.gmra.mxu0 %v1627
    %v1765 = vpop.f32.mrf.mxu0
    %v1766 = vadd.f32 %v490, %v1765
    %v1767 = vpop.f32.mrf.mxu0
    %1768 = vdwg.mxu0
    %v1769 = vadd.f32 %v318, %v1695
    %v1770 = vxor.u32 %v1769, 2147483648
    %v1771 = vmul.f32 %v1770, 1.442695
    %v1772 = vpow.pop %v1771
    %v1773 = vadd.f32 %v1772, 1.0
    %v1774 = vrcp.pop %v1773
    %v1775 = vmul.f32 1.0, %v1774
    %v1776 = vadd.f32 %v320, %v1697
    %v1777 = vxor.u32 %v1776, 2147483648
    %v1778 = vmul.f32 %v1777, 1.442695
    %v1779 = vpow.pop %v1778
    %v1780 = vadd.f32 %v1779, 1.0
    %v1781 = vrcp.pop %v1780
    %v1782 = vmul.f32 1.0, %v1781
    %v1783 = vmul.f32 %v1775, %v1766
    %v1784 = vadd.f32 %v424, %v1783
    %v1785 = vtanh.pop %v1784
    %v1786 = vsub.f32 1.0, %v1782
    %v1787 = vmul.f32 %v1786, %v1785
    %v1788 = vmul.f32 %v1782, %v1627
    %v1789 = vadd.f32 %v1787, %v1788
    %1790 = vst [vmem:[%s3] sm:$0xff] %v1789
    %v1791 = vld [vmem:[%s1 + $0x480] sm:$0xff]
    %v1792 = vld [vmem:[%s1 + $0x498] sm:$0xff]
    %v1793 = vld [vmem:[%s1 + $0x4b0] sm:$0xff]
    %v1794 = vld [vmem:[%s1 + $0x4c8] sm:$0xff]
    %v1795 = vld [vmem:[%s1 + $0x4e0] sm:$0xff]
    %v1796 = vld [vmem:[%s1 + $0x4f8] sm:$0xff]
    %v1797 = vld [vmem:[%s1 + $0x510] sm:$0xff]
    %v1798 = vld [vmem:[%s1 + $0x528] sm:$0xff]
    %v1799 = vld [vmem:[%s1 + $0x540] sm:$0xff]
    %v1800 = vld [vmem:[%s1 + $0x558] sm:$0xff]
    %v1801 = vld [vmem:[%s1 + $0x570] sm:$0xff]
    %v1802 = vld [vmem:[%s1 + $0x588] sm:$0xff]
    %v1803 = vld [vmem:[%s1 + $0x5a0] sm:$0xff]
    %v1804 = vld [vmem:[%s1 + $0x5b8] sm:$0xff]
    %v1805 = vld [vmem:[%s1 + $0x5d0] sm:$0xff]
    %v1806 = vld [vmem:[%s1 + $0x5e8] sm:$0xff]
    %v1807 = vld [vmem:[%s1 + $0x600] sm:$0xff]
    %v1808 = vld [vmem:[%s1 + $0x618] sm:$0xff]
    %v1809 = vld [vmem:[%s1 + $0x630] sm:$0xff]
    %v1810 = vld [vmem:[%s1 + $0x648] sm:$0xff]
    %v1811 = vld [vmem:[%s1 + $0x660] sm:$0xff]
    %v1812 = vld [vmem:[%s1 + $0x678] sm:$0xff]
    %v1813 = vld [vmem:[%s1 + $0x690] sm:$0xff]
    %v1814 = vld [vmem:[%s1 + $0x6a8] sm:$0xff]
    %v1815 = vld [vmem:[%s1 + $0x6c0] sm:$0xff]
    %v1816 = vld [vmem:[%s1 + $0x6d8] sm:$0xff]
    %v1817 = vld [vmem:[%s1 + $0x6f0] sm:$0xff]
    %v1818 = vld [vmem:[%s1 + $0x708] sm:$0xff]
    %v1819 = vld [vmem:[%s1 + $0x720] sm:$0xff]
    %v1820 = vld [vmem:[%s1 + $0x738] sm:$0xff]
    %v1821 = vld [vmem:[%s1 + $0x750] sm:$0xff]
    %v1822 = vld [vmem:[%s1 + $0x768] sm:$0xff]
    %v1823 = vld [vmem:[%s1 + $0x608] sm:$0xff]
    %v1824 = vld [vmem:[%s1 + $0x620] sm:$0xff]
    %v1825 = vld [vmem:[%s1 + $0x638] sm:$0xff]
    %v1826 = vld [vmem:[%s1 + $0x650] sm:$0xff]
    %v1827 = vld [vmem:[%s1 + $0x668] sm:$0xff]
    %v1828 = vld [vmem:[%s1 + $0x680] sm:$0xff]
    %v1829 = vld [vmem:[%s1 + $0x698] sm:$0xff]
    %v1830 = vld [vmem:[%s1 + $0x6b0] sm:$0xff]
    %v1831 = vld [vmem:[%s1 + $0x6c8] sm:$0xff]
    %v1832 = vld [vmem:[%s1 + $0x6e0] sm:$0xff]
    %v1833 = vld [vmem:[%s1 + $0x6f8] sm:$0xff]
    %v1834 = vld [vmem:[%s1 + $0x710] sm:$0xff]
    %v1835 = vld [vmem:[%s1 + $0x728] sm:$0xff]
    %v1836 = vld [vmem:[%s1 + $0x740] sm:$0xff]
    %v1837 = vld [vmem:[%s1 + $0x758] sm:$0xff]
    %v1838 = vld [vmem:[%s1 + $0x770] sm:$0xff]
    %v1839 = vld [vmem:[%s1 + $0x780] sm:$0xff]
    %v1840 = vld [vmem:[%s1 + $0x798] sm:$0xff]
    %v1841 = vld [vmem:[%s1 + $0x7b0] sm:$0xff]
    %v1842 = vld [vmem:[%s1 + $0x7c8] sm:$0xff]
    %v1843 = vld [vmem:[%s1 + $0x7e0] sm:$0xff]
    %v1844 = vld [vmem:[%s1 + $0x7f8] sm:$0xff]
    %v1845 = vld [vmem:[%s1 + $0x810] sm:$0xff]
    %v1846 = vld [vmem:[%s1 + $0x828] sm:$0xff]
    %v1847 = vld [vmem:[%s1 + $0x840] sm:$0xff]
    %v1848 = vld [vmem:[%s1 + $0x858] sm:$0xff]
    %v1849 = vld [vmem:[%s1 + $0x870] sm:$0xff]
    %v1850 = vld [vmem:[%s1 + $0x888] sm:$0xff]
    %v1851 = vld [vmem:[%s1 + $0x8a0] sm:$0xff]
    %v1852 = vld [vmem:[%s1 + $0x8b8] sm:$0xff]
    %v1853 = vld [vmem:[%s1 + $0x8d0] sm:$0xff]
    %v1854 = vld [vmem:[%s1 + $0x8e8] sm:$0xff]
    %v1855 = vld [vmem:[%s1 + $0x900] sm:$0xff]
    %v1856 = vld [vmem:[%s1 + $0x918] sm:$0xff]
    %v1857 = vld [vmem:[%s1 + $0x930] sm:$0xff]
    %v1858 = vld [vmem:[%s1 + $0x948] sm:$0xff]
    %v1859 = vld [vmem:[%s1 + $0x960] sm:$0xff]
    %v1860 = vld [vmem:[%s1 + $0x978] sm:$0xff]
    %v1861 = vld [vmem:[%s1 + $0x990] sm:$0xff]
    %v1862 = vld [vmem:[%s1 + $0x9a8] sm:$0xff]
    %v1863 = vld [vmem:[%s1 + $0x9c0] sm:$0xff]
    %v1864 = vld [vmem:[%s1 + $0x9d8] sm:$0xff]
    %v1865 = vld [vmem:[%s1 + $0x9f0] sm:$0xff]
    %v1866 = vld [vmem:[%s1 + $0xa08] sm:$0xff]
    %v1867 = vld [vmem:[%s1 + $0xa20] sm:$0xff]
    %v1868 = vld [vmem:[%s1 + $0xa38] sm:$0xff]
    %v1869 = vld [vmem:[%s1 + $0xa50] sm:$0xff]
    %v1870 = vld [vmem:[%s1 + $0xa68] sm:$0xff]
    %v1871 = vld [vmem:[%s1 + $0xa80] sm:$0xff]
    %v1872 = vld [vmem:[%s1 + $0xa98] sm:$0xff]
    %v1873 = vld [vmem:[%s1 + $0xab0] sm:$0xff]
    %v1874 = vld [vmem:[%s1 + $0xac8] sm:$0xff]
    %v1875 = vld [vmem:[%s1 + $0xae0] sm:$0xff]
    %v1876 = vld [vmem:[%s1 + $0xaf8] sm:$0xff]
    %v1877 = vld [vmem:[%s1 + $0xb10] sm:$0xff]
    %v1878 = vld [vmem:[%s1 + $0xb28] sm:$0xff]
    %v1879 = vld [vmem:[%s1 + $0xb40] sm:$0xff]
    %v1880 = vld [vmem:[%s1 + $0xb58] sm:$0xff]
    %v1881 = vld [vmem:[%s1 + $0xb70] sm:$0xff]
    %v1882 = vld [vmem:[%s1 + $0xb88] sm:$0xff]
    %v1883 = vld [vmem:[%s1 + $0xba0] sm:$0xff]
    %v1884 = vld [vmem:[%s1 + $0xbb8] sm:$0xff]
    %v1885 = vld [vmem:[%s1 + $0xbd0] sm:$0xff]
    %v1886 = vld [vmem:[%s1 + $0xbe8] sm:$0xff]
    %v1887 = vld [vmem:[%s1 + $0xc02] ss:$0 sm:$0xff]
    %v1888 = vld [vmem:[%s1 + $0xc03] ss:$0 sm:$0xff]
    %v1889 = vld [vmem:[%s1 + $0xc0b] ss:$0 sm:$0xff]
    %v1890 = vld [vmem:[%s1 + $0xc04] ss:$0 sm:$0xff]
    %v1891 = vld [vmem:[%s1 + $0xc05] ss:$0 sm:$0xff]
    %v1893 = vrot.slane %v817, 7
    %v1896 = vrot.slane %v979, 6
    %v1899 = vrot.slane %v1141, 5
    %v1902 = vrot.slane %v1303, 4
    %v1905 = vrot.slane %v1465, 3
    %v1908 = vrot.slane %v1627, 2
    %v1911 = vrot.slane %v1789, 1
    %vm1913 = vcmask 1040384
    %v1914 = vsel %vm1913, %v655, %v1893
    %vm1915 = vcmask 1041408
    %v1916 = vsel %vm1915, %v1914, %v1896
    %vm1917 = vcmask 1042432
    %v1918 = vsel %vm1917, %v1916, %v1899
    %vm1919 = vcmask 1043456
    %v1920 = vsel %vm1919, %v1918, %v1902
    %vm1921 = vcmask 1044480
    %v1922 = vsel %vm1921, %v1920, %v1905
    %vm1923 = vcmask 1045504
    %v1924 = vsel %vm1923, %v1922, %v1908
    %vm1925 = vcmask 1046528
    %v1926 = vsel %vm1925, %v1924, %v1911
    %v1927 = vld [vmem:[%s0 + $0x40] sm:$0xff]
    %1928 = vmatprep.subr.mxu0 0.0
    %1929 = vmatpush1.msra.mxu0 %v1806
    %1930 = vmatprep.subr.mxu0 0.0
    %1931 = vmatpush1.msra.mxu0 %v1805
    %1932 = vmatprep.subr.mxu0 0.0
    %1933 = vmatpush1.msra.mxu0 %v1804
    %1934 = vmatprep.subr.mxu0 0.0
    %1935 = vmatpush1.msra.mxu0 %v1803
    %1936 = vmatprep.subr.mxu0 0.0
    %1937 = vmatpush1.msra.mxu0 %v1802
    %1938 = vmatprep.subr.mxu0 0.0
    %1939 = vmatpush1.msra.mxu0 %v1801
    %1940 = vmatprep.subr.mxu0 0.0
    %1941 = vmatpush1.msra.mxu0 %v1800
    %1942 = vmatprep.subr.mxu0 0.0
    %1943 = vmatpush1.msra.mxu0 %v1799
    %1944 = vmatprep.subr.mxu0 0.0
    %1945 = vmatpush1.msra.mxu0 %v1798
    %1946 = vmatprep.subr.mxu0 0.0
    %1947 = vmatpush1.msra.mxu0 %v1797
    %1948 = vmatprep.subr.mxu0 0.0
    %1949 = vmatpush1.msra.mxu0 %v1796
    %1950 = vmatprep.subr.mxu0 0.0
    %1951 = vmatpush1.msra.mxu0 %v1795
    %1952 = vmatprep.subr.mxu0 0.0
    %1953 = vmatpush1.msra.mxu0 %v1794
    %1954 = vmatprep.subr.mxu0 0.0
    %1955 = vmatpush1.msra.mxu0 %v1793
    %1956 = vmatprep.subr.mxu0 0.0
    %1957 = vmatpush1.msra.mxu0 %v1792
    %1958 = vmatprep.subr.mxu0 0.0
    %1959 = vmatpush1.msra.mxu0 %v1791
    %1960 = vmatprep.subr.mxu0 0.0
    %1961 = vmatpush2.msra.mxu0 0.0
    %1962 = vmatprep.subr.mxu0 0.0
    %1963 = vmatpush2.msra.mxu0 0.0
    %1964 = vmatprep.subr.mxu0 0.0
    %1965 = vmatpush2.msra.mxu0 0.0
    %1966 = vmatprep.subr.mxu0 0.0
    %1967 = vmatpush2.msra.mxu0 0.0
    %1968 = vmatprep.subr.mxu0 0.0
    %1969 = vmatpush2.msra.mxu0 0.0
    %1970 = vmatprep.subr.mxu0 0.0
    %1971 = vmatpush2.msra.mxu0 0.0
    %1972 = vmatprep.subr.mxu0 0.0
    %1973 = vmatpush2.msra.mxu0 0.0
    %1974 = vmatprep.subr.mxu0 0.0
    %1975 = vmatpush2.msra.mxu0 0.0
    %1976 = vmatprep.subr.mxu0 0.0
    %1977 = vmatpush2.msra.mxu0 0.0
    %1978 = vmatprep.subr.mxu0 0.0
    %1979 = vmatpush2.msra.mxu0 0.0
    %1980 = vmatprep.subr.mxu0 0.0
    %1981 = vmatpush2.msra.mxu0 0.0
    %1982 = vmatprep.subr.mxu0 0.0
    %1983 = vmatpush2.msra.mxu0 0.0
    %1984 = vmatprep.subr.mxu0 0.0
    %1985 = vmatpush2.msra.mxu0 0.0
    %1986 = vmatprep.subr.mxu0 0.0
    %1987 = vmatpush2.msra.mxu0 0.0
    %1988 = vmatprep.subr.mxu0 0.0
    %1989 = vmatpush2.msra.mxu0 0.0
    %1990 = vmatprep.subr.mxu0 0.0
    %1991 = vmatpush2.msra.mxu0 0.0
    %1992 = vmatprep.mubr.f32.mxu0 0.0
    %1993 = vmatmul.mubr.f32.gmra.mxu0 %v1926
    %v1994 = vpop.f32.mrf.mxu0
    %v1995 = vadd.f32 %v1887, %v1994
    %v1996 = vpop.f32.mrf.mxu0
    %1997 = vdwg.mxu0
    %1998 = vmatprep.subr.mxu0 0.0
    %1999 = vmatpush1.msra.mxu0 %v1822
    %2000 = vmatprep.subr.mxu0 0.0
    %2001 = vmatpush1.msra.mxu0 %v1821
    %2002 = vmatprep.subr.mxu0 0.0
    %2003 = vmatpush1.msra.mxu0 %v1820
    %2004 = vmatprep.subr.mxu0 0.0
    %2005 = vmatpush1.msra.mxu0 %v1819
    %2006 = vmatprep.subr.mxu0 0.0
    %2007 = vmatpush1.msra.mxu0 %v1818
    %2008 = vmatprep.subr.mxu0 0.0
    %2009 = vmatpush1.msra.mxu0 %v1817
    %2010 = vmatprep.subr.mxu0 0.0
    %2011 = vmatpush1.msra.mxu0 %v1816
    %2012 = vmatprep.subr.mxu0 0.0
    %2013 = vmatpush1.msra.mxu0 %v1815
    %2014 = vmatprep.subr.mxu0 0.0
    %2015 = vmatpush1.msra.mxu0 %v1814
    %2016 = vmatprep.subr.mxu0 0.0
    %2017 = vmatpush1.msra.mxu0 %v1813
    %2018 = vmatprep.subr.mxu0 0.0
    %2019 = vmatpush1.msra.mxu0 %v1812
    %2020 = vmatprep.subr.mxu0 0.0
    %2021 = vmatpush1.msra.mxu0 %v1811
    %2022 = vmatprep.subr.mxu0 0.0
    %2023 = vmatpush1.msra.mxu0 %v1810
    %2024 = vmatprep.subr.mxu0 0.0
    %2025 = vmatpush1.msra.mxu0 %v1809
    %2026 = vmatprep.subr.mxu0 0.0
    %2027 = vmatpush1.msra.mxu0 %v1808
    %2028 = vmatprep.subr.mxu0 0.0
    %2029 = vmatpush1.msra.mxu0 %v1807
    %2030 = vmatprep.subr.mxu0 0.0
    %2031 = vmatpush2.msra.mxu0 0.0
    %2032 = vmatprep.subr.mxu0 0.0
    %2033 = vmatpush2.msra.mxu0 0.0
    %2034 = vmatprep.subr.mxu0 0.0
    %2035 = vmatpush2.msra.mxu0 0.0
    %2036 = vmatprep.subr.mxu0 0.0
    %2037 = vmatpush2.msra.mxu0 0.0
    %2038 = vmatprep.subr.mxu0 0.0
    %2039 = vmatpush2.msra.mxu0 0.0
    %2040 = vmatprep.subr.mxu0 0.0
    %2041 = vmatpush2.msra.mxu0 0.0
    %2042 = vmatprep.subr.mxu0 0.0
    %2043 = vmatpush2.msra.mxu0 0.0
    %2044 = vmatprep.subr.mxu0 0.0
    %2045 = vmatpush2.msra.mxu0 0.0
    %2046 = vmatprep.subr.mxu0 0.0
    %2047 = vmatpush2.msra.mxu0 0.0
    %2048 = vmatprep.subr.mxu0 0.0
    %2049 = vmatpush2.msra.mxu0 0.0
    %2050 = vmatprep.subr.mxu0 0.0
    %2051 = vmatpush2.msra.mxu0 0.0
    %2052 = vmatprep.subr.mxu0 0.0
    %2053 = vmatpush2.msra.mxu0 0.0
    %2054 = vmatprep.subr.mxu0 0.0
    %2055 = vmatpush2.msra.mxu0 0.0
    %2056 = vmatprep.subr.mxu0 0.0
    %2057 = vmatpush2.msra.mxu0 0.0
    %2058 = vmatprep.subr.mxu0 0.0
    %2059 = vmatpush2.msra.mxu0 0.0
    %2060 = vmatprep.subr.mxu0 0.0
    %2061 = vmatpush2.msra.mxu0 0.0
    %2062 = vmatprep.mubr.f32.mxu0 0.0
    %2063 = vmatmul.mubr.f32.gmra.mxu0 %v1927
    %v2064 = vpop.f32.mrf.mxu0
    %v2065 = vadd.f32 %v1888, %v2064
    %v2066 = vpop.f32.mrf.mxu0
    %2067 = vdwg.mxu0
    %2068 = vmatprep.subr.mxu0 0.0
    %2069 = vmatpush1.msra.mxu0 %v1838
    %2070 = vmatprep.subr.mxu0 0.0
    %2071 = vmatpush1.msra.mxu0 %v1837
    %2072 = vmatprep.subr.mxu0 0.0
    %2073 = vmatpush1.msra.mxu0 %v1836
    %2074 = vmatprep.subr.mxu0 0.0
    %2075 = vmatpush1.msra.mxu0 %v1835
    %2076 = vmatprep.subr.mxu0 0.0
    %2077 = vmatpush1.msra.mxu0 %v1834
    %2078 = vmatprep.subr.mxu0 0.0
    %2079 = vmatpush1.msra.mxu0 %v1833
    %2080 = vmatprep.subr.mxu0 0.0
    %2081 = vmatpush1.msra.mxu0 %v1832
    %2082 = vmatprep.subr.mxu0 0.0
    %2083 = vmatpush1.msra.mxu0 %v1831
    %2084 = vmatprep.subr.mxu0 0.0
    %2085 = vmatpush1.msra.mxu0 %v1830
    %2086 = vmatprep.subr.mxu0 0.0
    %2087 = vmatpush1.msra.mxu0 %v1829
    %2088 = vmatprep.subr.mxu0 0.0
    %2089 = vmatpush1.msra.mxu0 %v1828
    %2090 = vmatprep.subr.mxu0 0.0
    %2091 = vmatpush1.msra.mxu0 %v1827
    %2092 = vmatprep.subr.mxu0 0.0
    %2093 = vmatpush1.msra.mxu0 %v1826
    %2094 = vmatprep.subr.mxu0 0.0
    %2095 = vmatpush1.msra.mxu0 %v1825
    %2096 = vmatprep.subr.mxu0 0.0
    %2097 = vmatpush1.msra.mxu0 %v1824
    %2098 = vmatprep.subr.mxu0 0.0
    %2099 = vmatpush1.msra.mxu0 %v1823
    %2100 = vmatprep.subr.mxu0 0.0
    %2101 = vmatpush2.msra.mxu0 0.0
    %2102 = vmatprep.subr.mxu0 0.0
    %2103 = vmatpush2.msra.mxu0 0.0
    %2104 = vmatprep.subr.mxu0 0.0
    %2105 = vmatpush2.msra.mxu0 0.0
    %2106 = vmatprep.subr.mxu0 0.0
    %2107 = vmatpush2.msra.mxu0 0.0
    %2108 = vmatprep.subr.mxu0 0.0
    %2109 = vmatpush2.msra.mxu0 0.0
    %2110 = vmatprep.subr.mxu0 0.0
    %2111 = vmatpush2.msra.mxu0 0.0
    %2112 = vmatprep.subr.mxu0 0.0
    %2113 = vmatpush2.msra.mxu0 0.0
    %2114 = vmatprep.subr.mxu0 0.0
    %2115 = vmatpush2.msra.mxu0 0.0
    %2116 = vmatprep.subr.mxu0 0.0
    %2117 = vmatpush2.msra.mxu0 0.0
    %2118 = vmatprep.subr.mxu0 0.0
    %2119 = vmatpush2.msra.mxu0 0.0
    %2120 = vmatprep.subr.mxu0 0.0
    %2121 = vmatpush2.msra.mxu0 0.0
    %2122 = vmatprep.subr.mxu0 0.0
    %2123 = vmatpush2.msra.mxu0 0.0
    %2124 = vmatprep.subr.mxu0 0.0
    %2125 = vmatpush2.msra.mxu0 0.0
    %2126 = vmatprep.subr.mxu0 0.0
    %2127 = vmatpush2.msra.mxu0 0.0
    %2128 = vmatprep.subr.mxu0 0.0
    %2129 = vmatpush2.msra.mxu0 0.0
    %2130 = vmatprep.subr.mxu0 0.0
    %2131 = vmatpush2.msra.mxu0 0.0
    %2132 = vmatprep.mubr.f32.mxu0 0.0
    %2133 = vmatmul.mubr.f32.gmra.mxu0 %v1927
    %v2134 = vpop.f32.mrf.mxu0
    %v2135 = vadd.f32 %v1889, %v2134
    %v2136 = vpop.f32.mrf.mxu0
    %2137 = vdwg.mxu0
    %2138 = vmatprep.subr.mxu0 0.0
    %2139 = vmatpush1.xpose.msra.mxu0 0.0
    %2140 = vmatprep.subr.mxu0 0.0
    %2141 = vmatpush1.xpose.msra.mxu0 0.0
    %2142 = vmatprep.subr.mxu0 0.0
    %2143 = vmatpush1.xpose.msra.mxu0 0.0
    %2144 = vmatprep.subr.mxu0 0.0
    %2145 = vmatpush1.xpose.msra.mxu0 0.0
    %2146 = vmatprep.subr.mxu0 0.0
    %2147 = vmatpush1.xpose.msra.mxu0 0.0
    %2148 = vmatprep.subr.mxu0 0.0
    %2149 = vmatpush1.xpose.msra.mxu0 0.0
    %2150 = vmatprep.subr.mxu0 0.0
    %2151 = vmatpush1.xpose.msra.mxu0 0.0
    %2152 = vmatprep.subr.mxu0 0.0
    %2153 = vmatpush1.xpose.msra.mxu0 0.0
    %2154 = vmatprep.subr.mxu0 0.0
    %2155 = vmatpush1.xpose.msra.mxu0 0.0
    %2156 = vmatprep.subr.mxu0 0.0
    %2157 = vmatpush1.xpose.msra.mxu0 0.0
    %2158 = vmatprep.subr.mxu0 0.0
    %2159 = vmatpush1.xpose.msra.mxu0 0.0
    %2160 = vmatprep.subr.mxu0 0.0
    %2161 = vmatpush1.xpose.msra.mxu0 0.0
    %2162 = vmatprep.subr.mxu0 0.0
    %2163 = vmatpush1.xpose.msra.mxu0 0.0
    %2164 = vmatprep.subr.mxu0 0.0
    %2165 = vmatpush1.xpose.msra.mxu0 0.0
    %2166 = vmatprep.subr.mxu0 0.0
    %2167 = vmatpush1.xpose.msra.mxu0 0.0
    %2168 = vmatprep.subr.mxu0 0.0
    %2169 = vmatpush1.xpose.msra.mxu0 %v2065
    %2170 = vmatprep.subr.mxu0 0.0
    %2171 = vmatpush2.xpose.msra.mxu0 0.0
    %2172 = vmatprep.subr.mxu0 0.0
    %2173 = vmatpush2.xpose.msra.mxu0 0.0
    %2174 = vmatprep.subr.mxu0 0.0
    %2175 = vmatpush2.xpose.msra.mxu0 0.0
    %2176 = vmatprep.subr.mxu0 0.0
    %2177 = vmatpush2.xpose.msra.mxu0 0.0
    %2178 = vmatprep.subr.mxu0 0.0
    %2179 = vmatpush2.xpose.msra.mxu0 0.0
    %2180 = vmatprep.subr.mxu0 0.0
    %2181 = vmatpush2.xpose.msra.mxu0 0.0
    %2182 = vmatprep.subr.mxu0 0.0
    %2183 = vmatpush2.xpose.msra.mxu0 0.0
    %2184 = vmatprep.subr.mxu0 0.0
    %2185 = vmatpush2.xpose.msra.mxu0 0.0
    %2186 = vmatprep.subr.mxu0 0.0
    %2187 = vmatpush2.xpose.msra.mxu0 0.0
    %2188 = vmatprep.subr.mxu0 0.0
    %2189 = vmatpush2.xpose.msra.mxu0 0.0
    %2190 = vmatprep.subr.mxu0 0.0
    %2191 = vmatpush2.xpose.msra.mxu0 0.0
    %2192 = vmatprep.subr.mxu0 0.0
    %2193 = vmatpush2.xpose.msra.mxu0 0.0
    %2194 = vmatprep.subr.mxu0 0.0
    %2195 = vmatpush2.xpose.msra.mxu0 0.0
    %2196 = vmatprep.subr.mxu0 0.0
    %2197 = vmatpush2.xpose.msra.mxu0 0.0
    %2198 = vmatprep.subr.mxu0 0.0
    %2199 = vmatpush2.xpose.msra.mxu0 0.0
    %2200 = vmatprep.subr.mxu0 0.0
    %2201 = vmatpush2.xpose.msra.mxu0 0.0
    %2202 = vmatprep.mubr.f32.mxu0 0.0
    %2203 = vmatmul.mubr.f32.gmra.mxu0 %v1995
    %v2204 = vpop.f32.mrf.mxu0
    %v2205 = vadd.f32 0.0, %v2204
    %v2206 = vpop.f32.mrf.mxu0
    %2207 = vdwg.mxu0
    %vm2208 = vcmask 64512
    %v2209 = vsel %vm2208, %v2205, -inf
    %2210 = vmax.xlane.f32.xlu0 %v2209
    %v2211 = vpop.xlane.xlu0 %2210
    %v2212 = vsub.f32 %v2205, %v2211
    %v2213 = vmul.f32 %v2212, 1.442695
    %v2214 = vpow.pop %v2213
    %v2215 = vsel %vm2208, %v2214, 0.0
    %2216 = vadd.xlane.f32.xlu0 %v2215
    %v2217 = vpop.xlane.xlu0 %2216
    %v2218 = vrcp.pop %v2217
    %v2219 = vmul.f32 1.0, %v2218
    %v2220 = vmul.f32 %v2214, %v2219
    %v2222 = vsel %vm2208, %v2220, 0
    %2224 = vmatprep.subr.mxu0 0.0
    %2225 = vmatpush1.msra.mxu0 0.0
    %2226 = vmatprep.subr.mxu0 0.0
    %2227 = vmatpush1.msra.mxu0 0.0
    %2228 = vmatprep.subr.mxu0 0.0
    %2229 = vmatpush1.msra.mxu0 0.0
    %2230 = vmatprep.subr.mxu0 0.0
    %2231 = vmatpush1.msra.mxu0 0.0
    %2232 = vmatprep.subr.mxu0 0.0
    %2233 = vmatpush1.msra.mxu0 0.0
    %2234 = vmatprep.subr.mxu0 0.0
    %2235 = vmatpush1.msra.mxu0 0.0
    %2236 = vmatprep.subr.mxu0 0.0
    %2237 = vmatpush1.msra.mxu0 0.0
    %2238 = vmatprep.subr.mxu0 0.0
    %2239 = vmatpush1.msra.mxu0 0.0
    %2240 = vmatprep.subr.mxu0 0.0
    %2241 = vmatpush1.msra.mxu0 0.0
    %2242 = vmatprep.subr.mxu0 0.0
    %2243 = vmatpush1.msra.mxu0 0.0
    %2244 = vmatprep.subr.mxu0 0.0
    %2245 = vmatpush1.msra.mxu0 0.0
    %2246 = vmatprep.subr.mxu0 0.0
    %2247 = vmatpush1.msra.mxu0 0.0
    %2248 = vmatprep.subr.mxu0 0.0
    %2249 = vmatpush1.msra.mxu0 0.0
    %2250 = vmatprep.subr.mxu0 0.0
    %2251 = vmatpush1.msra.mxu0 0.0
    %2252 = vmatprep.subr.mxu0 0.0
    %2253 = vmatpush1.msra.mxu0 0.0
    %2254 = vmatprep.subr.mxu0 0.0
    %2255 = vmatpush1.msra.mxu0 %v2135
    %2256 = vmatprep.subr.mxu0 0.0
    %2257 = vmatpush2.msra.mxu0 0.0
    %2258 = vmatprep.subr.mxu0 0.0
    %2259 = vmatpush2.msra.mxu0 0.0
    %2260 = vmatprep.subr.mxu0 0.0
    %2261 = vmatpush2.msra.mxu0 0.0
    %2262 = vmatprep.subr.mxu0 0.0
    %2263 = vmatpush2.msra.mxu0 0.0
    %2264 = vmatprep.subr.mxu0 0.0
    %2265 = vmatpush2.msra.mxu0 0.0
    %2266 = vmatprep.subr.mxu0 0.0
    %2267 = vmatpush2.msra.mxu0 0.0
    %2268 = vmatprep.subr.mxu0 0.0
    %2269 = vmatpush2.msra.mxu0 0.0
    %2270 = vmatprep.subr.mxu0 0.0
    %2271 = vmatpush2.msra.mxu0 0.0
    %2272 = vmatprep.subr.mxu0 0.0
    %2273 = vmatpush2.msra.mxu0 0.0
    %2274 = vmatprep.subr.mxu0 0.0
    %2275 = vmatpush2.msra.mxu0 0.0
    %2276 = vmatprep.subr.mxu0 0.0
    %2277 = vmatpush2.msra.mxu0 0.0
    %2278 = vmatprep.subr.mxu0 0.0
    %2279 = vmatpush2.msra.mxu0 0.0
    %2280 = vmatprep.subr.mxu0 0.0
    %2281 = vmatpush2.msra.mxu0 0.0
    %2282 = vmatprep.subr.mxu0 0.0
    %2283 = vmatpush2.msra.mxu0 0.0
    %2284 = vmatprep.subr.mxu0 0.0
    %2285 = vmatpush2.msra.mxu0 0.0
    %2286 = vmatprep.subr.mxu0 0.0
    %2287 = vmatpush2.msra.mxu0 0.0
    %2288 = vmatprep.mubr.f32.mxu0 0.0
    %2289 = vmatmul.mubr.f32.gmra.mxu0 %v2222
    %v2290 = vpop.f32.mrf.mxu0
    %v2291 = vadd.f32 0.0, %v2290
    %v2292 = vpop.f32.mrf.mxu0
    %2293 = vdwg.mxu0
    %2294 = vmatprep.subr.mxu0 0.0
    %2295 = vmatpush1.msra.mxu0 %v1870
    %2296 = vmatprep.subr.mxu0 0.0
    %2297 = vmatpush1.msra.mxu0 %v1869
    %2298 = vmatprep.subr.mxu0 0.0
    %2299 = vmatpush1.msra.mxu0 %v1868
    %2300 = vmatprep.subr.mxu0 0.0
    %2301 = vmatpush1.msra.mxu0 %v1867
    %2302 = vmatprep.subr.mxu0 0.0
    %2303 = vmatpush1.msra.mxu0 %v1866
    %2304 = vmatprep.subr.mxu0 0.0
    %2305 = vmatpush1.msra.mxu0 %v1865
    %2306 = vmatprep.subr.mxu0 0.0
    %2307 = vmatpush1.msra.mxu0 %v1864
    %2308 = vmatprep.subr.mxu0 0.0
    %2309 = vmatpush1.msra.mxu0 %v1863
    %2310 = vmatprep.subr.mxu0 0.0
    %2311 = vmatpush1.msra.mxu0 %v1862
    %2312 = vmatprep.subr.mxu0 0.0
    %2313 = vmatpush1.msra.mxu0 %v1861
    %2314 = vmatprep.subr.mxu0 0.0
    %2315 = vmatpush1.msra.mxu0 %v1860
    %2316 = vmatprep.subr.mxu0 0.0
    %2317 = vmatpush1.msra.mxu0 %v1859
    %2318 = vmatprep.subr.mxu0 0.0
    %2319 = vmatpush1.msra.mxu0 %v1858
    %2320 = vmatprep.subr.mxu0 0.0
    %2321 = vmatpush1.msra.mxu0 %v1857
    %2322 = vmatprep.subr.mxu0 0.0
    %2323 = vmatpush1.msra.mxu0 %v1856
    %2324 = vmatprep.subr.mxu0 0.0
    %2325 = vmatpush1.msra.mxu0 %v1855
    %2326 = vmatprep.subr.mxu0 0.0
    %2327 = vmatpush2.msra.mxu0 0.0
    %2328 = vmatprep.subr.mxu0 0.0
    %2329 = vmatpush2.msra.mxu0 0.0
    %2330 = vmatprep.subr.mxu0 0.0
    %2331 = vmatpush2.msra.mxu0 0.0
    %2332 = vmatprep.subr.mxu0 0.0
    %2333 = vmatpush2.msra.mxu0 0.0
    %2334 = vmatprep.subr.mxu0 0.0
    %2335 = vmatpush2.msra.mxu0 0.0
    %2336 = vmatprep.subr.mxu0 0.0
    %2337 = vmatpush2.msra.mxu0 0.0
    %2338 = vmatprep.subr.mxu0 0.0
    %2339 = vmatpush2.msra.mxu0 0.0
    %2340 = vmatprep.subr.mxu0 0.0
    %2341 = vmatpush2.msra.mxu0 0.0
    %2342 = vmatprep.subr.mxu0 0.0
    %2343 = vmatpush2.msra.mxu0 0.0
    %2344 = vmatprep.subr.mxu0 0.0
    %2345 = vmatpush2.msra.mxu0 0.0
    %2346 = vmatprep.subr.mxu0 0.0
    %2347 = vmatpush2.msra.mxu0 0.0
    %2348 = vmatprep.subr.mxu0 0.0
    %2349 = vmatpush2.msra.mxu0 0.0
    %2350 = vmatprep.subr.mxu0 0.0
    %2351 = vmatpush2.msra.mxu0 0.0
    %2352 = vmatprep.subr.mxu0 0.0
    %2353 = vmatpush2.msra.mxu0 0.0
    %2354 = vmatprep.subr.mxu0 0.0
    %2355 = vmatpush2.msra.mxu0 0.0
    %2356 = vmatprep.subr.mxu0 0.0
    %2357 = vmatpush2.msra.mxu0 0.0
    %2358 = vmatprep.mubr.f32.mxu0 0.0
    %2359 = vmatmul.mubr.f32.gmra.mxu0 %v1926
    %v2360 = vpop.f32.mrf.mxu0
    %v2361 = vadd.f32 0.0, %v2360
    %v2362 = vpop.f32.mrf.mxu0
    %2363 = vdwg.mxu0
    %2364 = vmatprep.subr.mxu0 0.0
    %2365 = vmatpush1.msra.mxu0 %v1854
    %2366 = vmatprep.subr.mxu0 0.0
    %2367 = vmatpush1.msra.mxu0 %v1853
    %2368 = vmatprep.subr.mxu0 0.0
    %2369 = vmatpush1.msra.mxu0 %v1852
    %2370 = vmatprep.subr.mxu0 0.0
    %2371 = vmatpush1.msra.mxu0 %v1851
    %2372 = vmatprep.subr.mxu0 0.0
    %2373 = vmatpush1.msra.mxu0 %v1850
    %2374 = vmatprep.subr.mxu0 0.0
    %2375 = vmatpush1.msra.mxu0 %v1849
    %2376 = vmatprep.subr.mxu0 0.0
    %2377 = vmatpush1.msra.mxu0 %v1848
    %2378 = vmatprep.subr.mxu0 0.0
    %2379 = vmatpush1.msra.mxu0 %v1847
    %2380 = vmatprep.subr.mxu0 0.0
    %2381 = vmatpush1.msra.mxu0 %v1846
    %2382 = vmatprep.subr.mxu0 0.0
    %2383 = vmatpush1.msra.mxu0 %v1845
    %2384 = vmatprep.subr.mxu0 0.0
    %2385 = vmatpush1.msra.mxu0 %v1844
    %2386 = vmatprep.subr.mxu0 0.0
    %2387 = vmatpush1.msra.mxu0 %v1843
    %2388 = vmatprep.subr.mxu0 0.0
    %2389 = vmatpush1.msra.mxu0 %v1842
    %2390 = vmatprep.subr.mxu0 0.0
    %2391 = vmatpush1.msra.mxu0 %v1841
    %2392 = vmatprep.subr.mxu0 0.0
    %2393 = vmatpush1.msra.mxu0 %v1840
    %2394 = vmatprep.subr.mxu0 0.0
    %2395 = vmatpush1.msra.mxu0 %v1839
    %2396 = vmatprep.subr.mxu0 0.0
    %2397 = vmatpush2.msra.mxu0 0.0
    %2398 = vmatprep.subr.mxu0 0.0
    %2399 = vmatpush2.msra.mxu0 0.0
    %2400 = vmatprep.subr.mxu0 0.0
    %2401 = vmatpush2.msra.mxu0 0.0
    %2402 = vmatprep.subr.mxu0 0.0
    %2403 = vmatpush2.msra.mxu0 0.0
    %2404 = vmatprep.subr.mxu0 0.0
    %2405 = vmatpush2.msra.mxu0 0.0
    %2406 = vmatprep.subr.mxu0 0.0
    %2407 = vmatpush2.msra.mxu0 0.0
    %2408 = vmatprep.subr.mxu0 0.0
    %2409 = vmatpush2.msra.mxu0 0.0
    %2410 = vmatprep.subr.mxu0 0.0
    %2411 = vmatpush2.msra.mxu0 0.0
    %2412 = vmatprep.subr.mxu0 0.0
    %2413 = vmatpush2.msra.mxu0 0.0
    %2414 = vmatprep.subr.mxu0 0.0
    %2415 = vmatpush2.msra.mxu0 0.0
    %2416 = vmatprep.subr.mxu0 0.0
    %2417 = vmatpush2.msra.mxu0 0.0
    %2418 = vmatprep.subr.mxu0 0.0
    %2419 = vmatpush2.msra.mxu0 0.0
    %2420 = vmatprep.subr.mxu0 0.0
    %2421 = vmatpush2.msra.mxu0 0.0
    %2422 = vmatprep.subr.mxu0 0.0
    %2423 = vmatpush2.msra.mxu0 0.0
    %2424 = vmatprep.subr.mxu0 0.0
    %2425 = vmatpush2.msra.mxu0 0.0
    %2426 = vmatprep.subr.mxu0 0.0
    %2427 = vmatpush2.msra.mxu0 0.0
    %2428 = vmatprep.mubr.f32.mxu0 0.0
    %2429 = vmatmul.mubr.f32.gmra.mxu0 %v2291
    %v2430 = vpop.f32.mrf.mxu0
    %v2431 = vadd.f32 %v2361, %v2430
    %v2432 = vpop.f32.mrf.mxu0
    %2433 = vdwg.mxu0
    %v2434 = vadd.f32 %v2431, %v1890
    %v2435 = vtanh.pop %v2434
    %2436 = vmatprep.subr.mxu0 0.0
    %2437 = vmatpush1.msra.mxu0 %v1886
    %2438 = vmatprep.subr.mxu0 0.0
    %2439 = vmatpush1.msra.mxu0 %v1885
    %2440 = vmatprep.subr.mxu0 0.0
    %2441 = vmatpush1.msra.mxu0 %v1884
    %2442 = vmatprep.subr.mxu0 0.0
    %2443 = vmatpush1.msra.mxu0 %v1883
    %2444 = vmatprep.subr.mxu0 0.0
    %2445 = vmatpush1.msra.mxu0 %v1882
    %2446 = vmatprep.subr.mxu0 0.0
    %2447 = vmatpush1.msra.mxu0 %v1881
    %2448 = vmatprep.subr.mxu0 0.0
    %2449 = vmatpush1.msra.mxu0 %v1880
    %2450 = vmatprep.subr.mxu0 0.0
    %2451 = vmatpush1.msra.mxu0 %v1879
    %2452 = vmatprep.subr.mxu0 0.0
    %2453 = vmatpush1.msra.mxu0 %v1878
    %2454 = vmatprep.subr.mxu0 0.0
    %2455 = vmatpush1.msra.mxu0 %v1877
    %2456 = vmatprep.subr.mxu0 0.0
    %2457 = vmatpush1.msra.mxu0 %v1876
    %2458 = vmatprep.subr.mxu0 0.0
    %2459 = vmatpush1.msra.mxu0 %v1875
    %2460 = vmatprep.subr.mxu0 0.0
    %2461 = vmatpush1.msra.mxu0 %v1874
    %2462 = vmatprep.subr.mxu0 0.0
    %2463 = vmatpush1.msra.mxu0 %v1873
    %2464 = vmatprep.subr.mxu0 0.0
    %2465 = vmatpush1.msra.mxu0 %v1872
    %2466 = vmatprep.subr.mxu0 0.0
    %2467 = vmatpush1.msra.mxu0 %v1871
    %2468 = vmatprep.subr.mxu0 0.0
    %2469 = vmatpush2.msra.mxu0 0.0
    %2470 = vmatprep.subr.mxu0 0.0
    %2471 = vmatpush2.msra.mxu0 0.0
    %2472 = vmatprep.subr.mxu0 0.0
    %2473 = vmatpush2.msra.mxu0 0.0
    %2474 = vmatprep.subr.mxu0 0.0
    %2475 = vmatpush2.msra.mxu0 0.0
    %2476 = vmatprep.subr.mxu0 0.0
    %2477 = vmatpush2.msra.mxu0 0.0
    %2478 = vmatprep.subr.mxu0 0.0
    %2479 = vmatpush2.msra.mxu0 0.0
    %2480 = vmatprep.subr.mxu0 0.0
    %2481 = vmatpush2.msra.mxu0 0.0
    %2482 = vmatprep.subr.mxu0 0.0
    %2483 = vmatpush2.msra.mxu0 0.0
    %2484 = vmatprep.subr.mxu0 0.0
    %2485 = vmatpush2.msra.mxu0 0.0
    %2486 = vmatprep.subr.mxu0 0.0
    %2487 = vmatpush2.msra.mxu0 0.0
    %2488 = vmatprep.subr.mxu0 0.0
    %2489 = vmatpush2.msra.mxu0 0.0
    %2490 = vmatprep.subr.mxu0 0.0
    %2491 = vmatpush2.msra.mxu0 0.0
    %2492 = vmatprep.subr.mxu0 0.0
    %2493 = vmatpush2.msra.mxu0 0.0
    %2494 = vmatprep.subr.mxu0 0.0
    %2495 = vmatpush2.msra.mxu0 0.0
    %2496 = vmatprep.subr.mxu0 0.0
    %2497 = vmatpush2.msra.mxu0 0.0
    %2498 = vmatprep.subr.mxu0 0.0
    %2499 = vmatpush2.msra.mxu0 0.0
    %2500 = vmatprep.mubr.f32.mxu0 0.0
    %2501 = vmatmul.mubr.f32.gmra.mxu0 %v2435
    %v2502 = vpop.f32.mrf.mxu0
    %v2503 = vadd.f32 %v1891, %v2502
    %v2504 = vpop.f32.mrf.mxu0
    %2505 = vdwg.mxu0
    %2506 = vst [vmem:[#allocation2] sm:$0xff] %v2503
    %v2508 = vrot.slane %v655, 1
    %v2510 = vrot.slane %v979, 7
    %v2512 = vrot.slane %v1141, 6
    %v2514 = vrot.slane %v1303, 5
    %v2516 = vrot.slane %v1465, 4
    %v2518 = vrot.slane %v1627, 3
    %v2520 = vrot.slane %v1789, 2
    %v2522 = vsel %vm1913, %v2508, %v817
    %v2523 = vsel %vm1915, %v2522, %v2510
    %v2524 = vsel %vm1917, %v2523, %v2512
    %v2525 = vsel %vm1919, %v2524, %v2514
    %v2526 = vsel %vm1921, %v2525, %v2516
    %v2527 = vsel %vm1923, %v2526, %v2518
    %v2528 = vsel %vm1925, %v2527, %v2520
    %v2529 = vld [vmem:[%s0 + $0x48] sm:$0xff]
    %2530 = vmatprep.subr.mxu0 0.0
    %2531 = vmatpush1.msra.mxu0 %v1806
    %2532 = vmatprep.subr.mxu0 0.0
    %2533 = vmatpush1.msra.mxu0 %v1805
    %2534 = vmatprep.subr.mxu0 0.0
    %2535 = vmatpush1.msra.mxu0 %v1804
    %2536 = vmatprep.subr.mxu0 0.0
    %2537 = vmatpush1.msra.mxu0 %v1803
    %2538 = vmatprep.subr.mxu0 0.0
    %2539 = vmatpush1.msra.mxu0 %v1802
    %2540 = vmatprep.subr.mxu0 0.0
    %2541 = vmatpush1.msra.mxu0 %v1801
    %2542 = vmatprep.subr.mxu0 0.0
    %2543 = vmatpush1.msra.mxu0 %v1800
    %2544 = vmatprep.subr.mxu0 0.0
    %2545 = vmatpush1.msra.mxu0 %v1799
    %2546 = vmatprep.subr.mxu0 0.0
    %2547 = vmatpush1.msra.mxu0 %v1798
    %2548 = vmatprep.subr.mxu0 0.0
    %2549 = vmatpush1.msra.mxu0 %v1797
    %2550 = vmatprep.subr.mxu0 0.0
    %2551 = vmatpush1.msra.mxu0 %v1796
    %2552 = vmatprep.subr.mxu0 0.0
    %2553 = vmatpush1.msra.mxu0 %v1795
    %2554 = vmatprep.subr.mxu0 0.0
    %2555 = vmatpush1.msra.mxu0 %v1794
    %2556 = vmatprep.subr.mxu0 0.0
    %2557 = vmatpush1.msra.mxu0 %v1793
    %2558 = vmatprep.subr.mxu0 0.0
    %2559 = vmatpush1.msra.mxu0 %v1792
    %2560 = vmatprep.subr.mxu0 0.0
    %2561 = vmatpush1.msra.mxu0 %v1791
    %2562 = vmatprep.subr.mxu0 0.0
    %2563 = vmatpush2.msra.mxu0 0.0
    %2564 = vmatprep.subr.mxu0 0.0
    %2565 = vmatpush2.msra.mxu0 0.0
    %2566 = vmatprep.subr.mxu0 0.0
    %2567 = vmatpush2.msra.mxu0 0.0
    %2568 = vmatprep.subr.mxu0 0.0
    %2569 = vmatpush2.msra.mxu0 0.0
    %2570 = vmatprep.subr.mxu0 0.0
    %2571 = vmatpush2.msra.mxu0 0.0
    %2572 = vmatprep.subr.mxu0 0.0
    %2573 = vmatpush2.msra.mxu0 0.0
    %2574 = vmatprep.subr.mxu0 0.0
    %2575 = vmatpush2.msra.mxu0 0.0
    %2576 = vmatprep.subr.mxu0 0.0
    %2577 = vmatpush2.msra.mxu0 0.0
    %2578 = vmatprep.subr.mxu0 0.0
    %2579 = vmatpush2.msra.mxu0 0.0
    %2580 = vmatprep.subr.mxu0 0.0
    %2581 = vmatpush2.msra.mxu0 0.0
    %2582 = vmatprep.subr.mxu0 0.0
    %2583 = vmatpush2.msra.mxu0 0.0
    %2584 = vmatprep.subr.mxu0 0.0
    %2585 = vmatpush2.msra.mxu0 0.0
    %2586 = vmatprep.subr.mxu0 0.0
    %2587 = vmatpush2.msra.mxu0 0.0
    %2588 = vmatprep.subr.mxu0 0.0
    %2589 = vmatpush2.msra.mxu0 0.0
    %2590 = vmatprep.subr.mxu0 0.0
    %2591 = vmatpush2.msra.mxu0 0.0
    %2592 = vmatprep.subr.mxu0 0.0
    %2593 = vmatpush2.msra.mxu0 0.0
    %2594 = vmatprep.mubr.f32.mxu0 0.0
    %2595 = vmatmul.mubr.f32.gmra.mxu0 %v2528
    %v2596 = vpop.f32.mrf.mxu0
    %v2597 = vadd.f32 %v1887, %v2596
    %v2598 = vpop.f32.mrf.mxu0
    %2599 = vdwg.mxu0
    %2600 = vmatprep.subr.mxu0 0.0
    %2601 = vmatpush1.msra.mxu0 %v1822
    %2602 = vmatprep.subr.mxu0 0.0
    %2603 = vmatpush1.msra.mxu0 %v1821
    %2604 = vmatprep.subr.mxu0 0.0
    %2605 = vmatpush1.msra.mxu0 %v1820
    %2606 = vmatprep.subr.mxu0 0.0
    %2607 = vmatpush1.msra.mxu0 %v1819
    %2608 = vmatprep.subr.mxu0 0.0
    %2609 = vmatpush1.msra.mxu0 %v1818
    %2610 = vmatprep.subr.mxu0 0.0
    %2611 = vmatpush1.msra.mxu0 %v1817
    %2612 = vmatprep.subr.mxu0 0.0
    %2613 = vmatpush1.msra.mxu0 %v1816
    %2614 = vmatprep.subr.mxu0 0.0
    %2615 = vmatpush1.msra.mxu0 %v1815
    %2616 = vmatprep.subr.mxu0 0.0
    %2617 = vmatpush1.msra.mxu0 %v1814
    %2618 = vmatprep.subr.mxu0 0.0
    %2619 = vmatpush1.msra.mxu0 %v1813
    %2620 = vmatprep.subr.mxu0 0.0
    %2621 = vmatpush1.msra.mxu0 %v1812
    %2622 = vmatprep.subr.mxu0 0.0
    %2623 = vmatpush1.msra.mxu0 %v1811
    %2624 = vmatprep.subr.mxu0 0.0
    %2625 = vmatpush1.msra.mxu0 %v1810
    %2626 = vmatprep.subr.mxu0 0.0
    %2627 = vmatpush1.msra.mxu0 %v1809
    %2628 = vmatprep.subr.mxu0 0.0
    %2629 = vmatpush1.msra.mxu0 %v1808
    %2630 = vmatprep.subr.mxu0 0.0
    %2631 = vmatpush1.msra.mxu0 %v1807
    %2632 = vmatprep.subr.mxu0 0.0
    %2633 = vmatpush2.msra.mxu0 0.0
    %2634 = vmatprep.subr.mxu0 0.0
    %2635 = vmatpush2.msra.mxu0 0.0
    %2636 = vmatprep.subr.mxu0 0.0
    %2637 = vmatpush2.msra.mxu0 0.0
    %2638 = vmatprep.subr.mxu0 0.0
    %2639 = vmatpush2.msra.mxu0 0.0
    %2640 = vmatprep.subr.mxu0 0.0
    %2641 = vmatpush2.msra.mxu0 0.0
    %2642 = vmatprep.subr.mxu0 0.0
    %2643 = vmatpush2.msra.mxu0 0.0
    %2644 = vmatprep.subr.mxu0 0.0
    %2645 = vmatpush2.msra.mxu0 0.0
    %2646 = vmatprep.subr.mxu0 0.0
    %2647 = vmatpush2.msra.mxu0 0.0
    %2648 = vmatprep.subr.mxu0 0.0
    %2649 = vmatpush2.msra.mxu0 0.0
    %2650 = vmatprep.subr.mxu0 0.0
    %2651 = vmatpush2.msra.mxu0 0.0
    %2652 = vmatprep.subr.mxu0 0.0
    %2653 = vmatpush2.msra.mxu0 0.0
    %2654 = vmatprep.subr.mxu0 0.0
    %2655 = vmatpush2.msra.mxu0 0.0
    %2656 = vmatprep.subr.mxu0 0.0
    %2657 = vmatpush2.msra.mxu0 0.0
    %2658 = vmatprep.subr.mxu0 0.0
    %2659 = vmatpush2.msra.mxu0 0.0
    %2660 = vmatprep.subr.mxu0 0.0
    %2661 = vmatpush2.msra.mxu0 0.0
    %2662 = vmatprep.subr.mxu0 0.0
    %2663 = vmatpush2.msra.mxu0 0.0
    %2664 = vmatprep.mubr.f32.mxu0 0.0
    %2665 = vmatmul.mubr.f32.gmra.mxu0 %v2529
    %v2666 = vpop.f32.mrf.mxu0
    %v2667 = vadd.f32 %v1888, %v2666
    %v2668 = vpop.f32.mrf.mxu0
    %2669 = vdwg.mxu0
    %2670 = vmatprep.subr.mxu0 0.0
    %2671 = vmatpush1.msra.mxu0 %v1838
    %2672 = vmatprep.subr.mxu0 0.0
    %2673 = vmatpush1.msra.mxu0 %v1837
    %2674 = vmatprep.subr.mxu0 0.0
    %2675 = vmatpush1.msra.mxu0 %v1836
    %2676 = vmatprep.subr.mxu0 0.0
    %2677 = vmatpush1.msra.mxu0 %v1835
    %2678 = vmatprep.subr.mxu0 0.0
    %2679 = vmatpush1.msra.mxu0 %v1834
    %2680 = vmatprep.subr.mxu0 0.0
    %2681 = vmatpush1.msra.mxu0 %v1833
    %2682 = vmatprep.subr.mxu0 0.0
    %2683 = vmatpush1.msra.mxu0 %v1832
    %2684 = vmatprep.subr.mxu0 0.0
    %2685 = vmatpush1.msra.mxu0 %v1831
    %2686 = vmatprep.subr.mxu0 0.0
    %2687 = vmatpush1.msra.mxu0 %v1830
    %2688 = vmatprep.subr.mxu0 0.0
    %2689 = vmatpush1.msra.mxu0 %v1829
    %2690 = vmatprep.subr.mxu0 0.0
    %2691 = vmatpush1.msra.mxu0 %v1828
    %2692 = vmatprep.subr.mxu0 0.0
    %2693 = vmatpush1.msra.mxu0 %v1827
    %2694 = vmatprep.subr.mxu0 0.0
    %2695 = vmatpush1.msra.mxu0 %v1826
    %2696 = vmatprep.subr.mxu0 0.0
    %2697 = vmatpush1.msra.mxu0 %v1825
    %2698 = vmatprep.subr.mxu0 0.0
    %2699 = vmatpush1.msra.mxu0 %v1824
    %2700 = vmatprep.subr.mxu0 0.0
    %2701 = vmatpush1.msra.mxu0 %v1823
    %2702 = vmatprep.subr.mxu0 0.0
    %2703 = vmatpush2.msra.mxu0 0.0
    %2704 = vmatprep.subr.mxu0 0.0
    %2705 = vmatpush2.msra.mxu0 0.0
    %2706 = vmatprep.subr.mxu0 0.0
    %2707 = vmatpush2.msra.mxu0 0.0
    %2708 = vmatprep.subr.mxu0 0.0
    %2709 = vmatpush2.msra.mxu0 0.0
    %2710 = vmatprep.subr.mxu0 0.0
    %2711 = vmatpush2.msra.mxu0 0.0
    %2712 = vmatprep.subr.mxu0 0.0
    %2713 = vmatpush2.msra.mxu0 0.0
    %2714 = vmatprep.subr.mxu0 0.0
    %2715 = vmatpush2.msra.mxu0 0.0
    %2716 = vmatprep.subr.mxu0 0.0
    %2717 = vmatpush2.msra.mxu0 0.0
    %2718 = vmatprep.subr.mxu0 0.0
    %2719 = vmatpush2.msra.mxu0 0.0
    %2720 = vmatprep.subr.mxu0 0.0
    %2721 = vmatpush2.msra.mxu0 0.0
    %2722 = vmatprep.subr.mxu0 0.0
    %2723 = vmatpush2.msra.mxu0 0.0
    %2724 = vmatprep.subr.mxu0 0.0
    %2725 = vmatpush2.msra.mxu0 0.0
    %2726 = vmatprep.subr.mxu0 0.0
    %2727 = vmatpush2.msra.mxu0 0.0
    %2728 = vmatprep.subr.mxu0 0.0
    %2729 = vmatpush2.msra.mxu0 0.0
    %2730 = vmatprep.subr.mxu0 0.0
    %2731 = vmatpush2.msra.mxu0 0.0
    %2732 = vmatprep.subr.mxu0 0.0
    %2733 = vmatpush2.msra.mxu0 0.0
    %2734 = vmatprep.mubr.f32.mxu0 0.0
    %2735 = vmatmul.mubr.f32.gmra.mxu0 %v2529
    %v2736 = vpop.f32.mrf.mxu0
    %v2737 = vadd.f32 %v1889, %v2736
    %v2738 = vpop.f32.mrf.mxu0
    %2739 = vdwg.mxu0
    %2740 = vmatprep.subr.mxu0 0.0
    %2741 = vmatpush1.xpose.msra.mxu0 0.0
    %2742 = vmatprep.subr.mxu0 0.0
    %2743 = vmatpush1.xpose.msra.mxu0 0.0
    %2744 = vmatprep.subr.mxu0 0.0
    %2745 = vmatpush1.xpose.msra.mxu0 0.0
    %2746 = vmatprep.subr.mxu0 0.0
    %2747 = vmatpush1.xpose.msra.mxu0 0.0
    %2748 = vmatprep.subr.mxu0 0.0
    %2749 = vmatpush1.xpose.msra.mxu0 0.0
    %2750 = vmatprep.subr.mxu0 0.0
    %2751 = vmatpush1.xpose.msra.mxu0 0.0
    %2752 = vmatprep.subr.mxu0 0.0
    %2753 = vmatpush1.xpose.msra.mxu0 0.0
    %2754 = vmatprep.subr.mxu0 0.0
    %2755 = vmatpush1.xpose.msra.mxu0 0.0
    %2756 = vmatprep.subr.mxu0 0.0
    %2757 = vmatpush1.xpose.msra.mxu0 0.0
    %2758 = vmatprep.subr.mxu0 0.0
    %2759 = vmatpush1.xpose.msra.mxu0 0.0
    %2760 = vmatprep.subr.mxu0 0.0
    %2761 = vmatpush1.xpose.msra.mxu0 0.0
    %2762 = vmatprep.subr.mxu0 0.0
    %2763 = vmatpush1.xpose.msra.mxu0 0.0
    %2764 = vmatprep.subr.mxu0 0.0
    %2765 = vmatpush1.xpose.msra.mxu0 0.0
    %2766 = vmatprep.subr.mxu0 0.0
    %2767 = vmatpush1.xpose.msra.mxu0 0.0
    %2768 = vmatprep.subr.mxu0 0.0
    %2769 = vmatpush1.xpose.msra.mxu0 0.0
    %2770 = vmatprep.subr.mxu0 0.0
    %2771 = vmatpush1.xpose.msra.mxu0 %v2667
    %2772 = vmatprep.subr.mxu0 0.0
    %2773 = vmatpush2.xpose.msra.mxu0 0.0
    %2774 = vmatprep.subr.mxu0 0.0
    %2775 = vmatpush2.xpose.msra.mxu0 0.0
    %2776 = vmatprep.subr.mxu0 0.0
    %2777 = vmatpush2.xpose.msra.mxu0 0.0
    %2778 = vmatprep.subr.mxu0 0.0
    %2779 = vmatpush2.xpose.msra.mxu0 0.0
    %2780 = vmatprep.subr.mxu0 0.0
    %2781 = vmatpush2.xpose.msra.mxu0 0.0
    %2782 = vmatprep.subr.mxu0 0.0
    %2783 = vmatpush2.xpose.msra.mxu0 0.0
    %2784 = vmatprep.subr.mxu0 0.0
    %2785 = vmatpush2.xpose.msra.mxu0 0.0
    %2786 = vmatprep.subr.mxu0 0.0
    %2787 = vmatpush2.xpose.msra.mxu0 0.0
    %2788 = vmatprep.subr.mxu0 0.0
    %2789 = vmatpush2.xpose.msra.mxu0 0.0
    %2790 = vmatprep.subr.mxu0 0.0
    %2791 = vmatpush2.xpose.msra.mxu0 0.0
    %2792 = vmatprep.subr.mxu0 0.0
    %2793 = vmatpush2.xpose.msra.mxu0 0.0
    %2794 = vmatprep.subr.mxu0 0.0
    %2795 = vmatpush2.xpose.msra.mxu0 0.0
    %2796 = vmatprep.subr.mxu0 0.0
    %2797 = vmatpush2.xpose.msra.mxu0 0.0
    %2798 = vmatprep.subr.mxu0 0.0
    %2799 = vmatpush2.xpose.msra.mxu0 0.0
    %2800 = vmatprep.subr.mxu0 0.0
    %2801 = vmatpush2.xpose.msra.mxu0 0.0
    %2802 = vmatprep.subr.mxu0 0.0
    %2803 = vmatpush2.xpose.msra.mxu0 0.0
    %2804 = vmatprep.mubr.f32.mxu0 0.0
    %2805 = vmatmul.mubr.f32.gmra.mxu0 %v2597
    %v2806 = vpop.f32.mrf.mxu0
    %v2807 = vadd.f32 0.0, %v2806
    %v2808 = vpop.f32.mrf.mxu0
    %2809 = vdwg.mxu0
    %v2810 = vsel %vm2208, %v2807, -inf
    %2811 = vmax.xlane.f32.xlu0 %v2810
    %v2812 = vpop.xlane.xlu0 %2811
    %v2813 = vsub.f32 %v2807, %v2812
    %v2814 = vmul.f32 %v2813, 1.442695
    %v2815 = vpow.pop %v2814
    %v2816 = vsel %vm2208, %v2815, 0.0
    %2817 = vadd.xlane.f32.xlu0 %v2816
    %v2818 = vpop.xlane.xlu0 %2817
    %v2819 = vrcp.pop %v2818
    %v2820 = vmul.f32 1.0, %v2819
    %v2821 = vmul.f32 %v2815, %v2820
    %v2823 = vsel %vm2208, %v2821, 0
    %2825 = vmatprep.subr.mxu0 0.0
    %2826 = vmatpush1.msra.mxu0 0.0
    %2827 = vmatprep.subr.mxu0 0.0
    %2828 = vmatpush1.msra.mxu0 0.0
    %2829 = vmatprep.subr.mxu0 0.0
    %2830 = vmatpush1.msra.mxu0 0.0
    %2831 = vmatprep.subr.mxu0 0.0
    %2832 = vmatpush1.msra.mxu0 0.0
    %2833 = vmatprep.subr.mxu0 0.0
    %2834 = vmatpush1.msra.mxu0 0.0
    %2835 = vmatprep.subr.mxu0 0.0
    %2836 = vmatpush1.msra.mxu0 0.0
    %2837 = vmatprep.subr.mxu0 0.0
    %2838 = vmatpush1.msra.mxu0 0.0
    %2839 = vmatprep.subr.mxu0 0.0
    %2840 = vmatpush1.msra.mxu0 0.0
    %2841 = vmatprep.subr.mxu0 0.0
    %2842 = vmatpush1.msra.mxu0 0.0
    %2843 = vmatprep.subr.mxu0 0.0
    %2844 = vmatpush1.msra.mxu0 0.0
    %2845 = vmatprep.subr.mxu0 0.0
    %2846 = vmatpush1.msra.mxu0 0.0
    %2847 = vmatprep.subr.mxu0 0.0
    %2848 = vmatpush1.msra.mxu0 0.0
    %2849 = vmatprep.subr.mxu0 0.0
    %2850 = vmatpush1.msra.mxu0 0.0
    %2851 = vmatprep.subr.mxu0 0.0
    %2852 = vmatpush1.msra.mxu0 0.0
    %2853 = vmatprep.subr.mxu0 0.0
    %2854 = vmatpush1.msra.mxu0 0.0
    %2855 = vmatprep.subr.mxu0 0.0
    %2856 = vmatpush1.msra.mxu0 %v2737
    %2857 = vmatprep.subr.mxu0 0.0
    %2858 = vmatpush2.msra.mxu0 0.0
    %2859 = vmatprep.subr.mxu0 0.0
    %2860 = vmatpush2.msra.mxu0 0.0
    %2861 = vmatprep.subr.mxu0 0.0
    %2862 = vmatpush2.msra.mxu0 0.0
    %2863 = vmatprep.subr.mxu0 0.0
    %2864 = vmatpush2.msra.mxu0 0.0
    %2865 = vmatprep.subr.mxu0 0.0
    %2866 = vmatpush2.msra.mxu0 0.0
    %2867 = vmatprep.subr.mxu0 0.0
    %2868 = vmatpush2.msra.mxu0 0.0
    %2869 = vmatprep.subr.mxu0 0.0
    %2870 = vmatpush2.msra.mxu0 0.0
    %2871 = vmatprep.subr.mxu0 0.0
    %2872 = vmatpush2.msra.mxu0 0.0
    %2873 = vmatprep.subr.mxu0 0.0
    %2874 = vmatpush2.msra.mxu0 0.0
    %2875 = vmatprep.subr.mxu0 0.0
    %2876 = vmatpush2.msra.mxu0 0.0
    %2877 = vmatprep.subr.mxu0 0.0
    %2878 = vmatpush2.msra.mxu0 0.0
    %2879 = vmatprep.subr.mxu0 0.0
    %2880 = vmatpush2.msra.mxu0 0.0
    %2881 = vmatprep.subr.mxu0 0.0
    %2882 = vmatpush2.msra.mxu0 0.0
    %2883 = vmatprep.subr.mxu0 0.0
    %2884 = vmatpush2.msra.mxu0 0.0
    %2885 = vmatprep.subr.mxu0 0.0
    %2886 = vmatpush2.msra.mxu0 0.0
    %2887 = vmatprep.subr.mxu0 0.0
    %2888 = vmatpush2.msra.mxu0 0.0
    %2889 = vmatprep.mubr.f32.mxu0 0.0
    %2890 = vmatmul.mubr.f32.gmra.mxu0 %v2823
    %v2891 = vpop.f32.mrf.mxu0
    %v2892 = vadd.f32 0.0, %v2891
    %v2893 = vpop.f32.mrf.mxu0
    %2894 = vdwg.mxu0
    %2895 = vmatprep.subr.mxu0 0.0
    %2896 = vmatpush1.msra.mxu0 %v1870
    %2897 = vmatprep.subr.mxu0 0.0
    %2898 = vmatpush1.msra.mxu0 %v1869
    %2899 = vmatprep.subr.mxu0 0.0
    %2900 = vmatpush1.msra.mxu0 %v1868
    %2901 = vmatprep.subr.mxu0 0.0
    %2902 = vmatpush1.msra.mxu0 %v1867
    %2903 = vmatprep.subr.mxu0 0.0
    %2904 = vmatpush1.msra.mxu0 %v1866
    %2905 = vmatprep.subr.mxu0 0.0
    %2906 = vmatpush1.msra.mxu0 %v1865
    %2907 = vmatprep.subr.mxu0 0.0
    %2908 = vmatpush1.msra.mxu0 %v1864
    %2909 = vmatprep.subr.mxu0 0.0
    %2910 = vmatpush1.msra.mxu0 %v1863
    %2911 = vmatprep.subr.mxu0 0.0
    %2912 = vmatpush1.msra.mxu0 %v1862
    %2913 = vmatprep.subr.mxu0 0.0
    %2914 = vmatpush1.msra.mxu0 %v1861
    %2915 = vmatprep.subr.mxu0 0.0
    %2916 = vmatpush1.msra.mxu0 %v1860
    %2917 = vmatprep.subr.mxu0 0.0
    %2918 = vmatpush1.msra.mxu0 %v1859
    %2919 = vmatprep.subr.mxu0 0.0
    %2920 = vmatpush1.msra.mxu0 %v1858
    %2921 = vmatprep.subr.mxu0 0.0
    %2922 = vmatpush1.msra.mxu0 %v1857
    %2923 = vmatprep.subr.mxu0 0.0
    %2924 = vmatpush1.msra.mxu0 %v1856
    %2925 = vmatprep.subr.mxu0 0.0
    %2926 = vmatpush1.msra.mxu0 %v1855
    %2927 = vmatprep.subr.mxu0 0.0
    %2928 = vmatpush2.msra.mxu0 0.0
    %2929 = vmatprep.subr.mxu0 0.0
    %2930 = vmatpush2.msra.mxu0 0.0
    %2931 = vmatprep.subr.mxu0 0.0
    %2932 = vmatpush2.msra.mxu0 0.0
    %2933 = vmatprep.subr.mxu0 0.0
    %2934 = vmatpush2.msra.mxu0 0.0
    %2935 = vmatprep.subr.mxu0 0.0
    %2936 = vmatpush2.msra.mxu0 0.0
    %2937 = vmatprep.subr.mxu0 0.0
    %2938 = vmatpush2.msra.mxu0 0.0
    %2939 = vmatprep.subr.mxu0 0.0
    %2940 = vmatpush2.msra.mxu0 0.0
    %2941 = vmatprep.subr.mxu0 0.0
    %2942 = vmatpush2.msra.mxu0 0.0
    %2943 = vmatprep.subr.mxu0 0.0
    %2944 = vmatpush2.msra.mxu0 0.0
    %2945 = vmatprep.subr.mxu0 0.0
    %2946 = vmatpush2.msra.mxu0 0.0
    %2947 = vmatprep.subr.mxu0 0.0
    %2948 = vmatpush2.msra.mxu0 0.0
    %2949 = vmatprep.subr.mxu0 0.0
    %2950 = vmatpush2.msra.mxu0 0.0
    %2951 = vmatprep.subr.mxu0 0.0
    %2952 = vmatpush2.msra.mxu0 0.0
    %2953 = vmatprep.subr.mxu0 0.0
    %2954 = vmatpush2.msra.mxu0 0.0
    %2955 = vmatprep.subr.mxu0 0.0
    %2956 = vmatpush2.msra.mxu0 0.0
    %2957 = vmatprep.subr.mxu0 0.0
    %2958 = vmatpush2.msra.mxu0 0.0
    %2959 = vmatprep.mubr.f32.mxu0 0.0
    %2960 = vmatmul.mubr.f32.gmra.mxu0 %v2528
    %v2961 = vpop.f32.mrf.mxu0
    %v2962 = vadd.f32 0.0, %v2961
    %v2963 = vpop.f32.mrf.mxu0
    %2964 = vdwg.mxu0
    %2965 = vmatprep.subr.mxu0 0.0
    %2966 = vmatpush1.msra.mxu0 %v1854
    %2967 = vmatprep.subr.mxu0 0.0
    %2968 = vmatpush1.msra.mxu0 %v1853
    %2969 = vmatprep.subr.mxu0 0.0
    %2970 = vmatpush1.msra.mxu0 %v1852
    %2971 = vmatprep.subr.mxu0 0.0
    %2972 = vmatpush1.msra.mxu0 %v1851
    %2973 = vmatprep.subr.mxu0 0.0
    %2974 = vmatpush1.msra.mxu0 %v1850
    %2975 = vmatprep.subr.mxu0 0.0
    %2976 = vmatpush1.msra.mxu0 %v1849
    %2977 = vmatprep.subr.mxu0 0.0
    %2978 = vmatpush1.msra.mxu0 %v1848
    %2979 = vmatprep.subr.mxu0 0.0
    %2980 = vmatpush1.msra.mxu0 %v1847
    %2981 = vmatprep.subr.mxu0 0.0
    %2982 = vmatpush1.msra.mxu0 %v1846
    %2983 = vmatprep.subr.mxu0 0.0
    %2984 = vmatpush1.msra.mxu0 %v1845
    %2985 = vmatprep.subr.mxu0 0.0
    %2986 = vmatpush1.msra.mxu0 %v1844
    %2987 = vmatprep.subr.mxu0 0.0
    %2988 = vmatpush1.msra.mxu0 %v1843
    %2989 = vmatprep.subr.mxu0 0.0
    %2990 = vmatpush1.msra.mxu0 %v1842
    %2991 = vmatprep.subr.mxu0 0.0
    %2992 = vmatpush1.msra.mxu0 %v1841
    %2993 = vmatprep.subr.mxu0 0.0
    %2994 = vmatpush1.msra.mxu0 %v1840
    %2995 = vmatprep.subr.mxu0 0.0
    %2996 = vmatpush1.msra.mxu0 %v1839
    %2997 = vmatprep.subr.mxu0 0.0
    %2998 = vmatpush2.msra.mxu0 0.0
    %2999 = vmatprep.subr.mxu0 0.0
    %3000 = vmatpush2.msra.mxu0 0.0
    %3001 = vmatprep.subr.mxu0 0.0
    %3002 = vmatpush2.msra.mxu0 0.0
    %3003 = vmatprep.subr.mxu0 0.0
    %3004 = vmatpush2.msra.mxu0 0.0
    %3005 = vmatprep.subr.mxu0 0.0
    %3006 = vmatpush2.msra.mxu0 0.0
    %3007 = vmatprep.subr.mxu0 0.0
    %3008 = vmatpush2.msra.mxu0 0.0
    %3009 = vmatprep.subr.mxu0 0.0
    %3010 = vmatpush2.msra.mxu0 0.0
    %3011 = vmatprep.subr.mxu0 0.0
    %3012 = vmatpush2.msra.mxu0 0.0
    %3013 = vmatprep.subr.mxu0 0.0
    %3014 = vmatpush2.msra.mxu0 0.0
    %3015 = vmatprep.subr.mxu0 0.0
    %3016 = vmatpush2.msra.mxu0 0.0
    %3017 = vmatprep.subr.mxu0 0.0
    %3018 = vmatpush2.msra.mxu0 0.0
    %3019 = vmatprep.subr.mxu0 0.0
    %3020 = vmatpush2.msra.mxu0 0.0
    %3021 = vmatprep.subr.mxu0 0.0
    %3022 = vmatpush2.msra.mxu0 0.0
    %3023 = vmatprep.subr.mxu0 0.0
    %3024 = vmatpush2.msra.mxu0 0.0
    %3025 = vmatprep.subr.mxu0 0.0
    %3026 = vmatpush2.msra.mxu0 0.0
    %3027 = vmatprep.subr.mxu0 0.0
    %3028 = vmatpush2.msra.mxu0 0.0
    %3029 = vmatprep.mubr.f32.mxu0 0.0
    %3030 = vmatmul.mubr.f32.gmra.mxu0 %v2892
    %v3031 = vpop.f32.mrf.mxu0
    %v3032 = vadd.f32 %v2962, %v3031
    %v3033 = vpop.f32.mrf.mxu0
    %3034 = vdwg.mxu0
    %v3035 = vadd.f32 %v3032, %v1890
    %v3036 = vtanh.pop %v3035
    %3037 = vmatprep.subr.mxu0 0.0
    %3038 = vmatpush1.msra.mxu0 %v1886
    %3039 = vmatprep.subr.mxu0 0.0
    %3040 = vmatpush1.msra.mxu0 %v1885
    %3041 = vmatprep.subr.mxu0 0.0
    %3042 = vmatpush1.msra.mxu0 %v1884
    %3043 = vmatprep.subr.mxu0 0.0
    %3044 = vmatpush1.msra.mxu0 %v1883
    %3045 = vmatprep.subr.mxu0 0.0
    %3046 = vmatpush1.msra.mxu0 %v1882
    %3047 = vmatprep.subr.mxu0 0.0
    %3048 = vmatpush1.msra.mxu0 %v1881
    %3049 = vmatprep.subr.mxu0 0.0
    %3050 = vmatpush1.msra.mxu0 %v1880
    %3051 = vmatprep.subr.mxu0 0.0
    %3052 = vmatpush1.msra.mxu0 %v1879
    %3053 = vmatprep.subr.mxu0 0.0
    %3054 = vmatpush1.msra.mxu0 %v1878
    %3055 = vmatprep.subr.mxu0 0.0
    %3056 = vmatpush1.msra.mxu0 %v1877
    %3057 = vmatprep.subr.mxu0 0.0
    %3058 = vmatpush1.msra.mxu0 %v1876
    %3059 = vmatprep.subr.mxu0 0.0
    %3060 = vmatpush1.msra.mxu0 %v1875
    %3061 = vmatprep.subr.mxu0 0.0
    %3062 = vmatpush1.msra.mxu0 %v1874
    %3063 = vmatprep.subr.mxu0 0.0
    %3064 = vmatpush1.msra.mxu0 %v1873
    %3065 = vmatprep.subr.mxu0 0.0
    %3066 = vmatpush1.msra.mxu0 %v1872
    %3067 = vmatprep.subr.mxu0 0.0
    %3068 = vmatpush1.msra.mxu0 %v1871
    %3069 = vmatprep.subr.mxu0 0.0
    %3070 = vmatpush2.msra.mxu0 0.0
    %3071 = vmatprep.subr.mxu0 0.0
    %3072 = vmatpush2.msra.mxu0 0.0
    %3073 = vmatprep.subr.mxu0 0.0
    %3074 = vmatpush2.msra.mxu0 0.0
    %3075 = vmatprep.subr.mxu0 0.0
    %3076 = vmatpush2.msra.mxu0 0.0
    %3077 = vmatprep.subr.mxu0 0.0
    %3078 = vmatpush2.msra.mxu0 0.0
    %3079 = vmatprep.subr.mxu0 0.0
    %3080 = vmatpush2.msra.mxu0 0.0
    %3081 = vmatprep.subr.mxu0 0.0
    %3082 = vmatpush2.msra.mxu0 0.0
    %3083 = vmatprep.subr.mxu0 0.0
    %3084 = vmatpush2.msra.mxu0 0.0
    %3085 = vmatprep.subr.mxu0 0.0
    %3086 = vmatpush2.msra.mxu0 0.0
    %3087 = vmatprep.subr.mxu0 0.0
    %3088 = vmatpush2.msra.mxu0 0.0
    %3089 = vmatprep.subr.mxu0 0.0
    %3090 = vmatpush2.msra.mxu0 0.0
    %3091 = vmatprep.subr.mxu0 0.0
    %3092 = vmatpush2.msra.mxu0 0.0
    %3093 = vmatprep.subr.mxu0 0.0
    %3094 = vmatpush2.msra.mxu0 0.0
    %3095 = vmatprep.subr.mxu0 0.0
    %3096 = vmatpush2.msra.mxu0 0.0
    %3097 = vmatprep.subr.mxu0 0.0
    %3098 = vmatpush2.msra.mxu0 0.0
    %3099 = vmatprep.subr.mxu0 0.0
    %3100 = vmatpush2.msra.mxu0 0.0
    %3101 = vmatprep.mubr.f32.mxu0 0.0
    %3102 = vmatmul.mubr.f32.gmra.mxu0 %v3036
    %v3103 = vpop.f32.mrf.mxu0
    %v3104 = vadd.f32 %v1891, %v3103
    %v3105 = vpop.f32.mrf.mxu0
    %3106 = vdwg.mxu0
    %3107 = vst [vmem:[#allocation2 + $0x8] sm:$0xff] %v3104
    // Predicated region
    $region10: #{decoder_forward.1} parent=1 // pred_check
      _
    $region11: #{decoder_forward.1} parent=1 // pred_check_branch
      %3109 = sbr.rel (0) target = $region13
    $region12: #{decoder_forward.1} parent=1 // pred_region
      %s3111 = ssub.s32 256, 256
      %3112 = vsyncadd [#allocation3], %s3111
      %s3113 = sshll.u32 [#allocation2], 4
      %s3114 = int_to_ptr.vmem [resolvable:$true] %s3113
      %3119 = dma.vmem_to_hbm [thread:$0]  %s3114, 256, %s2, [#allocation3], 128, 128, 8
    $region13: #{decoder_forward.1} parent=1 // pred_fallthru
      _
    // Predicated region
    $region14: #{decoder_forward.1} parent=1 // pred_check
      _
    $region15: #{decoder_forward.1} parent=1 // pred_check_branch
      %3121 = sbr.rel (0) target = $region17
    $region16: #{decoder_forward.1} parent=1 // pred_region
      _
    $region17: #{decoder_forward.1} parent=1 // pred_fallthru
      _
    // Predicated region
    $region18: #{decoder_forward.1} parent=1 // pred_check
      _
    $region19: #{decoder_forward.1} parent=1 // pred_check_branch
      %3123 = sbr.rel (0) target = $region21
    $region20: #{decoder_forward.1} parent=1 // pred_region
      %3124 = dma.done [#allocation3], 256
    $region21: #{decoder_forward.1} parent=1 // pred_fallthru
      _
    // Predicated region
    $region22: #{decoder_forward.1} parent=1 // pred_check
      _
    $region23: #{decoder_forward.1} parent=1 // pred_check_branch
      %3126 = sbr.rel (0) target = $region25
    $region24: #{decoder_forward.1} parent=1 // pred_region
      _
    $region25: #{decoder_forward.1} parent=1 // pred_fallthru
      _
    %3127 = vsyncpa [#allocation3], 1

</llo_original>
